<compile_context>
chip_gen: v5e
topology: v5e:2x2
jax: 0.10.0
libtpu: 0.0.40
codegen_flags: <defaults>
</compile_context>

<pallas_src>
import functools

import jax
import jax.numpy as jnp
from jax.experimental import pallas as pl
from jax.experimental.pallas import tpu as pltpu

FEAT_DIM = 2048   # resnet50 fc.in_features
BN_EPS = 1e-5     # PyTorch BatchNorm1d default eps


def _round_up(x, m):
    return (x + m - 1) // m * m


# ---------------------------------------------------------------------------
# Kernel 1: fused conv (im2col matmul) + bias + ReLU + global average pool.
# Grid = (batch, spatial tiles); spatial axis is an "arbitrary" reduction and
# the pooled output block is the accumulator (resident across that axis).
# ---------------------------------------------------------------------------
def conv_pool_kernel(p_ref, w_ref, b_ref, o_ref, *, hw_true, hw_pad):
    k = pl.program_id(1)

    @pl.when(k == 0)
    def _():
        o_ref[...] = jnp.zeros_like(o_ref)

    # bf16 x bf16 -> f32 MXU matmul; contraction depth K = 9*Cin (e.g. 27) is
    # handled directly by Mosaic -- no HBM-side zero padding of the K dim.
    y = jnp.dot(p_ref[...], w_ref[...], preferred_element_type=jnp.float32)
    y = jnp.maximum(y + b_ref[...], 0.0)
    o_ref[...] += jnp.sum(y, axis=0, keepdims=True)

    @pl.when(k == pl.num_programs(1) - 1)
    def _():
        acc = o_ref[...]
        # Padded spatial rows are all-zero patches, so each contributed exactly
        # relu(bias) to the running sum; correct once here instead of masking
        # a (tile_hw, 2048) f32 tile every step in the hot loop.
        if hw_pad > hw_true:
            acc = acc - float(hw_pad - hw_true) * jnp.maximum(b_ref[...], 0.0)
        o_ref[...] = acc * (1.0 / hw_true)      # running sum -> mean


def conv_relu_pool(patches, w, b, *, hw_true, tile_hw):
    """patches: (B, HW_pad, K) bf16; w: (K, N) bf16; b: (1, N) f32 -> (B, N) f32."""
    B, HW_pad, K = patches.shape
    N = w.shape[1]
    n_k = HW_pad // tile_hw
    kernel = functools.partial(conv_pool_kernel, hw_true=hw_true, hw_pad=HW_pad)
    out = pl.pallas_call(
        kernel,
        out_shape=jax.ShapeDtypeStruct((B, 1, N), jnp.float32),
        grid=(B, n_k),
        in_specs=[
            # one image's spatial slab, batch dim squeezed; full K extent (27)
            # in the lane dim is a legal block and a contiguous HBM DMA
            pl.BlockSpec((None, tile_hw, K), lambda bi, ki: (bi, ki, 0)),
            # full-N conv weight, constant index_map -> DMA'd once, resident
            pl.BlockSpec((K, N), lambda bi, ki: (0, 0)),
            # full-N bias, resident
            pl.BlockSpec((1, N), lambda bi, ki: (0, 0)),
        ],
        # pooled accumulator: same block across the reduction axis ki
        out_specs=pl.BlockSpec((None, 1, N), lambda bi, ki: (bi, 0, 0)),
        compiler_params=pltpu.CompilerParams(
            # batch is the megacore-parallel axis (v7x: keep B >= 2)
            dimension_semantics=("parallel", "arbitrary"),
            vmem_limit_bytes=32 * 1024 * 1024,
        ),
    )(patches, w, b)
    return out.reshape(B, N)


# ---------------------------------------------------------------------------
# Kernel 2: features.view(B, -1) -> Linear -> BatchNorm1d (training-mode stats).
# Input is only the small pooled (B, 2048) tensor; embed dim padded to 128 for
# lane-dense stores (wrapper slices back to embed_size).
# ---------------------------------------------------------------------------
def head_kernel(p_ref, w_ref, b_ref, gamma_ref, beta_ref, o_ref):
    # Linear in bf16 on the MXU (f32 accumulate); BatchNorm math stays f32.
    y = jnp.dot(p_ref[...].astype(jnp.bfloat16), w_ref[...],
                preferred_element_type=jnp.float32) + b_ref[...]
    mu = jnp.mean(y, axis=0, keepdims=True)
    var = jnp.mean((y - mu) ** 2, axis=0, keepdims=True)         # biased batch var
    o_ref[...] = gamma_ref[...] * (y - mu) * jax.lax.rsqrt(var + BN_EPS) + beta_ref[...]


def head(pooled, w, b, gamma, beta):
    B, C = pooled.shape
    Ep = w.shape[1]
    return pl.pallas_call(
        head_kernel,
        out_shape=jax.ShapeDtypeStruct((B, Ep), jnp.float32),
        grid=(1,),
        in_specs=[
            pl.BlockSpec((B, C), lambda i: (0, 0)),
            pl.BlockSpec((C, Ep), lambda i: (0, 0)),
            pl.BlockSpec((1, Ep), lambda i: (0, 0)),
            pl.BlockSpec((1, Ep), lambda i: (0, 0)),
            pl.BlockSpec((1, Ep), lambda i: (0, 0)),
        ],
        out_specs=pl.BlockSpec((B, Ep), lambda i: (0, 0)),
    )(pooled, w, b, gamma, beta)


# ---------------------------------------------------------------------------
# Glue: im2col, parameters, one-time prepare, forward
# ---------------------------------------------------------------------------
def im2col_3x3(x_nhwc):
    """3x3, stride 1, pad 1 patches -> (B, H*W, 9*C), ordered (kh, kw, cin)."""
    B, H, W, C = x_nhwc.shape
    xp = jnp.pad(x_nhwc, ((0, 0), (1, 1), (1, 1), (0, 0)))
    cols = [xp[:, dy:dy + H, dx:dx + W, :] for dy in range(3) for dx in range(3)]
    patches = jnp.concatenate(cols, axis=-1)                  # (B, H, W, 9*C)
    return patches.reshape(B, H * W, 9 * C)


def init_params(key, in_ch, embed_size):
    k0, k1, k2 = jax.random.split(key, 3)
    conv_w = 0.05 * jax.random.normal(k0, (3, 3, in_ch, FEAT_DIM), jnp.float32)
    conv_b = jnp.zeros((1, FEAT_DIM), jnp.float32)
    # nn.Linear(resnet.fc.in_features, embed_size): torch weight is (E, 2048);
    # stored transposed here so the kernel does pooled @ W.
    lin_w = (1.0 / jnp.sqrt(FEAT_DIM)) * jax.random.normal(
        k1, (FEAT_DIM, embed_size), jnp.float32)
    lin_b = 0.01 * jax.random.normal(k2, (1, embed_size), jnp.float32)
    # nn.BatchNorm1d(embed_size) affine init: weight=1, bias=0.
    bn_gamma = jnp.ones((1, embed_size), jnp.float32)
    bn_beta = jnp.zeros((1, embed_size), jnp.float32)
    return dict(conv_w=conv_w, conv_b=conv_b, lin_w=lin_w, lin_b=lin_b,
                bn_gamma=bn_gamma, bn_beta=bn_beta)


def prepare_params(params):
    """One-time layout plumbing (reshape / pad / dtype cast) hoisted out of forward."""
    in_ch = params["conv_w"].shape[2]
    K = 9 * in_ch
    E = params["lin_w"].shape[1]
    Ep = _round_up(max(E, 128), 128)
    conv_w = params["conv_w"].reshape(K, FEAT_DIM).astype(jnp.bfloat16)  # (kh,kw,cin)
    conv_b = params["conv_b"].astype(jnp.float32)
    lin_w = jnp.pad(params["lin_w"], ((0, 0), (0, Ep - E))).astype(jnp.bfloat16)
    lin_b = jnp.pad(params["lin_b"], ((0, 0), (0, Ep - E)))
    bn_gamma = jnp.pad(params["bn_gamma"], ((0, 0), (0, Ep - E)))
    bn_beta = jnp.pad(params["bn_beta"], ((0, 0), (0, Ep - E)))
    return dict(conv_w=conv_w, conv_b=conv_b, lin_w=lin_w, lin_b=lin_b,
                bn_gamma=bn_gamma, bn_beta=bn_beta)


def encoder_cnn_forward(images_nchw, prepared, embed_size):
    """images_nchw: (B, Cin, H, W) float32 -> (B, embed_size) float32."""
    B, C, H, W = images_nchw.shape
    HW = H * W
    tile_hw = min(1024, _round_up(HW, 8))            # sublane-aligned spatial tile
    HW_pad = _round_up(HW, tile_hw)

    # --- backbone stand-in: conv3x3 + ReLU + global avg pool, fully fused ---
    x = jnp.transpose(images_nchw, (0, 2, 3, 1))              # NCHW -> NHWC
    patches = im2col_3x3(x)                                   # (B, HW, 9C)
    if HW_pad > HW:
        patches = jnp.pad(patches, ((0, 0), (0, HW_pad - HW), (0, 0)))
    patches = patches.astype(jnp.bfloat16)                    # no K padding in HBM

    pooled = conv_relu_pool(patches, prepared["conv_w"], prepared["conv_b"],
                            hw_true=HW, tile_hw=tile_hw)      # (B, 2048) f32

    # --- head: Linear + BatchNorm1d (params pre-padded to 128 lanes) ---
    out = head(pooled, prepared["lin_w"], prepared["lin_b"],
               prepared["bn_gamma"], prepared["bn_beta"])     # (B, Ep)
    return out[:, :embed_size]                                # (B, embed_size)


if __name__ == "__main__":
    key = jax.random.PRNGKey(0)
    k_img, k_par = jax.random.split(key)

    batch, in_ch, spatial, embed_size = 2, 3, 16, 32
    images = jax.random.normal(k_img, (batch, in_ch, spatial, spatial), jnp.float32)
    params = init_params(k_par, in_ch, embed_size)
    prepared = prepare_params(params)       # one-time, outside the jitted forward

    forward = jax.jit(encoder_cnn_forward, static_argnums=(2,))
    out = forward(images, prepared, embed_size)
    out = jax.block_until_ready(out)
    assert out.shape == (batch, embed_size) and out.dtype == jnp.float32
    assert bool(jnp.all(jnp.isfinite(out)))
    print("KERNEL_OK")
</pallas_src>

<mosaic_0001>
module attributes {stable_mosaic.version = 11 : i64} {
  func.func @head_kernel(%arg0: i32, %arg1: memref<2x2048xf32, #tpu.memory_space<vmem>>, %arg2: memref<2048x128xbf16, #tpu.memory_space<vmem>>, %arg3: memref<1x128xf32, #tpu.memory_space<vmem>>, %arg4: memref<1x128xf32, #tpu.memory_space<vmem>>, %arg5: memref<1x128xf32, #tpu.memory_space<vmem>>, %arg6: memref<2x128xf32, #tpu.memory_space<vmem>>) attributes {dimension_semantics = [#tpu.dimension_semantics<arbitrary>], iteration_bounds = array<i64: 1>, scalar_prefetch = 0 : i64, scratch_operands = 0 : i64, tpu.core_type = #tpu.core_type<tc>, window_params = [{pipeline_mode = #tpu.pipeline_mode<synchronous>, transform_indices = @transform_0, window_bounds = array<i64: 2, 2048>}, {pipeline_mode = #tpu.pipeline_mode<synchronous>, transform_indices = @transform_1, window_bounds = array<i64: 2048, 128>}, {pipeline_mode = #tpu.pipeline_mode<synchronous>, transform_indices = @transform_2, window_bounds = array<i64: 1, 128>}, {pipeline_mode = #tpu.pipeline_mode<synchronous>, transform_indices = @transform_3, window_bounds = array<i64: 1, 128>}, {pipeline_mode = #tpu.pipeline_mode<synchronous>, transform_indices = @transform_4, window_bounds = array<i64: 1, 128>}, {pipeline_mode = #tpu.pipeline_mode<synchronous>, transform_indices = @transform_5, window_bounds = array<i64: 2, 128>}]} {
    %c0 = arith.constant 0 : index
    %c0_0 = arith.constant 0 : index
    %0 = vector.load %arg1[%c0, %c0_0] : memref<2x2048xf32, #tpu.memory_space<vmem>>, vector<2x2048xf32>
    %1 = arith.truncf %0 : vector<2x2048xf32> to vector<2x2048xbf16>
    %c0_1 = arith.constant 0 : index
    %c0_2 = arith.constant 0 : index
    %2 = vector.load %arg2[%c0_1, %c0_2] : memref<2048x128xbf16, #tpu.memory_space<vmem>>, vector<2048x128xbf16>
    %cst = arith.constant dense<0.000000e+00> : vector<2x128xf32>
    %3 = tpu.matmul %1, %2, %cst {dimension_numbers = #tpu.dot_dimension_numbers<[1], [0], [0], [1], [0, 0, 1, 1], [], []>} : vector<2x2048xbf16>, vector<2048x128xbf16>, vector<2x128xf32> -> vector<2x128xf32>
    %c0_3 = arith.constant 0 : index
    %c0_4 = arith.constant 0 : index
    %4 = vector.load %arg3[%c0_3, %c0_4] : memref<1x128xf32, #tpu.memory_space<vmem>>, vector<1x128xf32>
    %5 = vector.broadcast %4 : vector<1x128xf32> to vector<2x128xf32>
    %6 = arith.addf %3, %5 : vector<2x128xf32>
    %cst_5 = arith.constant dense<0.000000e+00> : vector<128xf32>
    %7 = vector.multi_reduction <add>, %6, %cst_5 [0] : vector<2x128xf32> to vector<128xf32>
    %8 = vector.shape_cast %7 : vector<128xf32> to vector<1x128xf32>
    %cst_6 = arith.constant 2.000000e+00 : f32
    %9 = vector.broadcast %cst_6 : f32 to vector<1x128xf32>
    %10 = arith.divf %8, %9 : vector<1x128xf32>
    %11 = vector.broadcast %10 : vector<1x128xf32> to vector<2x128xf32>
    %12 = arith.subf %6, %11 : vector<2x128xf32>
    %13 = arith.mulf %12, %12 : vector<2x128xf32>
    %cst_7 = arith.constant dense<0.000000e+00> : vector<128xf32>
    %14 = vector.multi_reduction <add>, %13, %cst_7 [0] : vector<2x128xf32> to vector<128xf32>
    %15 = vector.shape_cast %14 : vector<128xf32> to vector<1x128xf32>
    %cst_8 = arith.constant 2.000000e+00 : f32
    %16 = vector.broadcast %cst_8 : f32 to vector<1x128xf32>
    %17 = arith.divf %15, %16 : vector<1x128xf32>
    %c0_9 = arith.constant 0 : index
    %c0_10 = arith.constant 0 : index
    %18 = vector.load %arg4[%c0_9, %c0_10] : memref<1x128xf32, #tpu.memory_space<vmem>>, vector<1x128xf32>
    %19 = vector.broadcast %10 : vector<1x128xf32> to vector<2x128xf32>
    %20 = arith.subf %6, %19 : vector<2x128xf32>
    %21 = vector.broadcast %18 : vector<1x128xf32> to vector<2x128xf32>
    %22 = arith.mulf %21, %20 : vector<2x128xf32>
    %cst_11 = arith.constant 9.99999974E-6 : f32
    %23 = vector.broadcast %cst_11 : f32 to vector<1x128xf32>
    %24 = arith.addf %17, %23 : vector<1x128xf32>
    %25 = math.rsqrt %24 : vector<1x128xf32>
    %26 = vector.broadcast %25 : vector<1x128xf32> to vector<2x128xf32>
    %27 = arith.mulf %22, %26 : vector<2x128xf32>
    %c0_12 = arith.constant 0 : index
    %c0_13 = arith.constant 0 : index
    %28 = vector.load %arg5[%c0_12, %c0_13] : memref<1x128xf32, #tpu.memory_space<vmem>>, vector<1x128xf32>
    %29 = vector.broadcast %28 : vector<1x128xf32> to vector<2x128xf32>
    %30 = arith.addf %27, %29 : vector<2x128xf32>
    %c0_14 = arith.constant 0 : index
    %c0_15 = arith.constant 0 : index
    %31 = vector.load %arg6[%c0_14, %c0_15] : memref<2x128xf32, #tpu.memory_space<vmem>>, vector<2x128xf32>
    tpu.vector_store %arg6[%c0_14, %c0_15], %30 {strides = array<i32>} : memref<2x128xf32, #tpu.memory_space<vmem>>, vector<2x128xf32>,
    return
  }
  func.func @transform_0(%arg0: i32) -> (i32, i32) {
    %c0_i32 = arith.constant 0 : i32
    %c0_i32_0 = arith.constant 0 : i32
    %c0_i32_1 = arith.constant 0 : i32
    return %c0_i32, %c0_i32_0 : i32, i32
  }
  func.func @transform_1(%arg0: i32) -> (i32, i32) {
    %c0_i32 = arith.constant 0 : i32
    %c0_i32_0 = arith.constant 0 : i32
    %c0_i32_1 = arith.constant 0 : i32
    return %c0_i32, %c0_i32_0 : i32, i32
  }
  func.func @transform_2(%arg0: i32) -> (i32, i32) {
    %c0_i32 = arith.constant 0 : i32
    %c0_i32_0 = arith.constant 0 : i32
    %c0_i32_1 = arith.constant 0 : i32
    return %c0_i32, %c0_i32_0 : i32, i32
  }
  func.func @transform_3(%arg0: i32) -> (i32, i32) {
    %c0_i32 = arith.constant 0 : i32
    %c0_i32_0 = arith.constant 0 : i32
    %c0_i32_1 = arith.constant 0 : i32
    return %c0_i32, %c0_i32_0 : i32, i32
  }
  func.func @transform_4(%arg0: i32) -> (i32, i32) {
    %c0_i32 = arith.constant 0 : i32
    %c0_i32_0 = arith.constant 0 : i32
    %c0_i32_1 = arith.constant 0 : i32
    return %c0_i32, %c0_i32_0 : i32, i32
  }
  func.func @transform_5(%arg0: i32) -> (i32, i32) {
    %c0_i32 = arith.constant 0 : i32
    %c0_i32_0 = arith.constant 0 : i32
    %c0_i32_1 = arith.constant 0 : i32
    return %c0_i32, %c0_i32_0 : i32, i32
  }
}

module attributes {stable_mosaic.version = 11 : i64} {
  func.func @conv_pool_kernel(%arg0: i32, %arg1: i32, %arg2: memref<1x256x27xbf16, #tpu.memory_space<vmem>>, %arg3: memref<27x2048xbf16, #tpu.memory_space<vmem>>, %arg4: memref<1x2048xf32, #tpu.memory_space<vmem>>, %arg5: memref<1x1x2048xf32, #tpu.memory_space<vmem>>) attributes {dimension_semantics = [#tpu.dimension_semantics<parallel>, #tpu.dimension_semantics<arbitrary>], iteration_bounds = array<i64: 2, 1>, scalar_prefetch = 0 : i64, scratch_operands = 0 : i64, tpu.core_type = #tpu.core_type<tc>, window_params = [{transform_indices = @transform_0, window_bounds = array<i64: 1, 256, 27>}, {pipeline_mode = #tpu.pipeline_mode<synchronous>, transform_indices = @transform_1, window_bounds = array<i64: 27, 2048>}, {pipeline_mode = #tpu.pipeline_mode<synchronous>, transform_indices = @transform_2, window_bounds = array<i64: 1, 2048>}, {transform_indices = @transform_3, window_bounds = array<i64: 1, 1, 2048>}]} {
    %c0_i32 = arith.constant 0 : i32
    %0 = arith.cmpi eq, %arg1, %c0_i32 : i32
    %1 = arith.extui %0 : i1 to i32
    %c0_i32_0 = arith.constant 0 : i32
    %2 = arith.cmpi ne, %1, %c0_i32_0 : i32
    scf.if %2 {
      %cst_17 = arith.constant 0.000000e+00 : f32
      %23 = vector.broadcast %cst_17 : f32 to vector<1x2048xf32>
      %c0_18 = arith.constant 0 : index
      %c0_19 = arith.constant 0 : index
      %c0_20 = arith.constant 0 : index
      %24 = vector.load %arg5[%c0_18, %c0_19, %c0_20] : memref<1x1x2048xf32, #tpu.memory_space<vmem>>, vector<1x1x2048xf32>
      %25 = vector.shape_cast %24 : vector<1x1x2048xf32> to vector<1x2048xf32>
      %26 = vector.shape_cast %23 : vector<1x2048xf32> to vector<1x1x2048xf32>
      tpu.vector_store %arg5[%c0_18, %c0_19, %c0_20], %26 {strides = array<i32>} : memref<1x1x2048xf32, #tpu.memory_space<vmem>>, vector<1x1x2048xf32>,
    } else {
    }
    %c0 = arith.constant 0 : index
    %c0_1 = arith.constant 0 : index
    %c0_2 = arith.constant 0 : index
    %3 = vector.load %arg2[%c0, %c0_1, %c0_2] : memref<1x256x27xbf16, #tpu.memory_space<vmem>>, vector<1x256x27xbf16>
    %4 = vector.shape_cast %3 : vector<1x256x27xbf16> to vector<256x27xbf16>
    %c0_3 = arith.constant 0 : index
    %c0_4 = arith.constant 0 : index
    %5 = vector.load %arg3[%c0_3, %c0_4] : memref<27x2048xbf16, #tpu.memory_space<vmem>>, vector<27x2048xbf16>
    %cst = arith.constant dense<0.000000e+00> : vector<256x2048xf32>
    %6 = tpu.matmul %4, %5, %cst {dimension_numbers = #tpu.dot_dimension_numbers<[1], [0], [0], [1], [0, 0, 1, 1], [], []>} : vector<256x27xbf16>, vector<27x2048xbf16>, vector<256x2048xf32> -> vector<256x2048xf32>
    %c0_5 = arith.constant 0 : index
    %c0_6 = arith.constant 0 : index
    %7 = vector.load %arg4[%c0_5, %c0_6] : memref<1x2048xf32, #tpu.memory_space<vmem>>, vector<1x2048xf32>
    %8 = vector.broadcast %7 : vector<1x2048xf32> to vector<256x2048xf32>
    %9 = arith.addf %6, %8 : vector<256x2048xf32>
    %cst_7 = arith.constant 0.000000e+00 : f32
    %10 = vector.broadcast %cst_7 : f32 to vector<256x2048xf32>
    %11 = arith.maximumf %9, %10 : vector<256x2048xf32>
    %c0_8 = arith.constant 0 : index
    %c0_9 = arith.constant 0 : index
    %c0_10 = arith.constant 0 : index
    %12 = vector.load %arg5[%c0_8, %c0_9, %c0_10] : memref<1x1x2048xf32, #tpu.memory_space<vmem>>, vector<1x1x2048xf32>
    %13 = vector.shape_cast %12 : vector<1x1x2048xf32> to vector<1x2048xf32>
    %cst_11 = arith.constant dense<0.000000e+00> : vector<2048xf32>
    %14 = vector.multi_reduction <add>, %11, %cst_11 [0] : vector<256x2048xf32> to vector<2048xf32>
    %15 = vector.shape_cast %14 : vector<2048xf32> to vector<1x2048xf32>
    %16 = arith.addf %13, %15 : vector<1x2048xf32>
    %c0_12 = arith.constant 0 : index
    %c0_13 = arith.constant 0 : index
    %c0_14 = arith.constant 0 : index
    %17 = vector.load %arg5[%c0_12, %c0_13, %c0_14] : memref<1x1x2048xf32, #tpu.memory_space<vmem>>, vector<1x1x2048xf32>
    %18 = vector.shape_cast %17 : vector<1x1x2048xf32> to vector<1x2048xf32>
    %19 = vector.shape_cast %16 : vector<1x2048xf32> to vector<1x1x2048xf32>
    tpu.vector_store %arg5[%c0_12, %c0_13, %c0_14], %19 {strides = array<i32>} : memref<1x1x2048xf32, #tpu.memory_space<vmem>>, vector<1x1x2048xf32>,
    %c0_i32_15 = arith.constant 0 : i32
    %20 = arith.cmpi eq, %arg1, %c0_i32_15 : i32
    %21 = arith.extui %20 : i1 to i32
    %c0_i32_16 = arith.constant 0 : i32
    %22 = arith.cmpi ne, %21, %c0_i32_16 : i32
    scf.if %22 {
      %c0_17 = arith.constant 0 : index
      %c0_18 = arith.constant 0 : index
      %c0_19 = arith.constant 0 : index
      %23 = vector.load %arg5[%c0_17, %c0_18, %c0_19] : memref<1x1x2048xf32, #tpu.memory_space<vmem>>, vector<1x1x2048xf32>
      %24 = vector.shape_cast %23 : vector<1x1x2048xf32> to vector<1x2048xf32>
      %cst_20 = arith.constant 3.906250e-03 : f32
      %25 = vector.broadcast %cst_20 : f32 to vector<1x2048xf32>
      %26 = arith.mulf %24, %25 : vector<1x2048xf32>
      %c0_21 = arith.constant 0 : index
      %c0_22 = arith.constant 0 : index
      %c0_23 = arith.constant 0 : index
      %27 = vector.load %arg5[%c0_21, %c0_22, %c0_23] : memref<1x1x2048xf32, #tpu.memory_space<vmem>>, vector<1x1x2048xf32>
      %28 = vector.shape_cast %27 : vector<1x1x2048xf32> to vector<1x2048xf32>
      %29 = vector.shape_cast %26 : vector<1x2048xf32> to vector<1x1x2048xf32>
      tpu.vector_store %arg5[%c0_21, %c0_22, %c0_23], %29 {strides = array<i32>} : memref<1x1x2048xf32, #tpu.memory_space<vmem>>, vector<1x1x2048xf32>,
    } else {
    }
    return
  }
  func.func @transform_0(%arg0: i32, %arg1: i32) -> (i32, i32, i32) {
    %c0_i32 = arith.constant 0 : i32
    %c0_i32_0 = arith.constant 0 : i32
    return %arg0, %arg1, %c0_i32 : i32, i32, i32
  }
  func.func @transform_1(%arg0: i32, %arg1: i32) -> (i32, i32) {
    %c0_i32 = arith.constant 0 : i32
    %c0_i32_0 = arith.constant 0 : i32
    %c0_i32_1 = arith.constant 0 : i32
    return %c0_i32, %c0_i32_0 : i32, i32
  }
  func.func @transform_2(%arg0: i32, %arg1: i32) -> (i32, i32) {
    %c0_i32 = arith.constant 0 : i32
    %c0_i32_0 = arith.constant 0 : i32
    %c0_i32_1 = arith.constant 0 : i32
    return %c0_i32, %c0_i32_0 : i32, i32
  }
  func.func @transform_3(%arg0: i32, %arg1: i32) -> (i32, i32, i32) {
    %c0_i32 = arith.constant 0 : i32
    %c0_i32_0 = arith.constant 0 : i32
    %c0_i32_1 = arith.constant 0 : i32
    return %arg0, %c0_i32, %c0_i32_0 : i32, i32, i32
  }
}

</mosaic_0001>

<llo_original>
// kernel: encoder_cnn_forward.3
$region0: #{encoder_cnn_forward.3}
  #allocation0 [shape = 'u32[]', space=smem, size = 0x4, offset = 0x4, fixed_abs, tag = 'smem constant byte address 0x4 - core index']
  #allocation1 [shape = 'u32[72,128]{1,0:T(1,128)}', space=vmem, size = 0x9000, scoped, tag = 'internal scratch']
  %s0 = inlined_call_operand.vmem [shape: f32[2,2048], index: 0, kind: input, shape index: {}]
  %s1 = inlined_call_operand.vmem [shape: bf16[2048,128], index: 1, kind: input, shape index: {}]
  %s2 = inlined_call_operand.vmem [shape: f32[1,128], index: 2, kind: input, shape index: {}]
  %s3 = inlined_call_operand.vmem [shape: f32[1,128], index: 3, kind: input, shape index: {}]
  %s4 = inlined_call_operand.vmem [shape: f32[1,128], index: 4, kind: input, shape index: {}]
  %s5 = inlined_call_operand.hbm [shape: f32[2,128], index: 5, kind: output, shape index: {}]
  %s6 = sld [smem:[#allocation0]]
  $region30: #{encoder_cnn_forward.3} parent=0
    _
  %s8 = ssub.s32 1, %s6
  %s9 = scalar_select 0, %s8, %s6
  $region1: #{encoder_cnn_forward.3} parent=0
    #allocation2 [shape = 'u8[1024]{0}', space=vmem, size = 0x400, scoped, tag = 'output window, operand 0, single buffered']
    #allocation3 [shape = 's32[1]{0}', space=sflag, size = 0x4, scoped, tag = 'scoped memory for encoder_cnn_forward.3']
    %10 = vsyncpa [#allocation3], 0
    // Predicated region
    $region2: #{encoder_cnn_forward.3} parent=1 // pred_check
      _
    $region3: #{encoder_cnn_forward.3} parent=1 // pred_check_branch
      %12 = sbr.rel (0) target = $region5
    $region4: #{encoder_cnn_forward.3} parent=1 // pred_region
      _
    $region5: #{encoder_cnn_forward.3} parent=1 // pred_fallthru
      _
    // Predicated region
    $region6: #{encoder_cnn_forward.3} parent=1 // pred_check
      _
    $region7: #{encoder_cnn_forward.3} parent=1 // pred_check_branch
      %14 = sbr.rel (0) target = $region9
    $region8: #{encoder_cnn_forward.3} parent=1 // pred_region
      _
    $region9: #{encoder_cnn_forward.3} parent=1 // pred_fallthru
      _
    // Predicated region
    $region10: #{encoder_cnn_forward.3} parent=1 // pred_check
      _
    $region11: #{encoder_cnn_forward.3} parent=1 // pred_check_branch
      %16 = sbr.rel (0) target = $region13
    $region12: #{encoder_cnn_forward.3} parent=1 // pred_region
      _
    $region13: #{encoder_cnn_forward.3} parent=1 // pred_fallthru
      _
    // Predicated region
    $region14: #{encoder_cnn_forward.3} parent=1 // pred_check
      _
    $region15: #{encoder_cnn_forward.3} parent=1 // pred_check_branch
      %18 = sbr.rel (0) target = $region17
    $region16: #{encoder_cnn_forward.3} parent=1 // pred_region
      _
    $region17: #{encoder_cnn_forward.3} parent=1 // pred_fallthru
      _
    // Predicated region
    $region18: #{encoder_cnn_forward.3} parent=1 // pred_check
      _
    $region19: #{encoder_cnn_forward.3} parent=1 // pred_check_branch
      %20 = sbr.rel (0) target = $region21
    $region20: #{encoder_cnn_forward.3} parent=1 // pred_region
      _
    $region21: #{encoder_cnn_forward.3} parent=1 // pred_fallthru
      _
    %v21 = vld [vmem:[%s0] sm:$0xff]
    %v22 = vld [vmem:[%s0 + $0x8] sm:$0xff]
    %v23 = vld [vmem:[%s0 + $0x10] sm:$0xff]
    %v24 = vld [vmem:[%s0 + $0x18] sm:$0xff]
    %29 = vst [vmem:[#allocation1] ss:$4 sm:$0xff] %v21
    %s30 = scalar_lea.vmem [#allocation1], 32
    %31 = vst [vmem:[%s30] ss:$4 sm:$0xff] %v22
    %v32 = vld.sshfl [vmem:[#allocation1] sm:$0xff pattern:$0x73625140]
    %v33 = vld.sshfl [vmem:[#allocation1 + $0x8] sm:$0xff pattern:$0x73625140]
    %v34 = vld.sshfl [vmem:[#allocation1 + $0x10] sm:$0xff pattern:$0x73625140]
    %v35 = vld.sshfl [vmem:[#allocation1 + $0x18] sm:$0xff pattern:$0x73625140]
    %v36 = vld.sshfl [vmem:[#allocation1 + $0x20] sm:$0xff pattern:$0x73625140]
    %v37 = vld.sshfl [vmem:[#allocation1 + $0x28] sm:$0xff pattern:$0x73625140]
    %v38 = vld.sshfl [vmem:[#allocation1 + $0x30] sm:$0xff pattern:$0x73625140]
    %v39 = vld.sshfl [vmem:[#allocation1 + $0x38] sm:$0xff pattern:$0x73625140]
    %40 = vst [vmem:[#allocation1] ss:$4 sm:$0xff] %v23
    %41 = vst [vmem:[%s30] ss:$4 sm:$0xff] %v24
    %v42 = vld.sshfl [vmem:[#allocation1] sm:$0xff pattern:$0x73625140]
    %v43 = vld.sshfl [vmem:[#allocation1 + $0x8] sm:$0xff pattern:$0x73625140]
    %v44 = vld.sshfl [vmem:[#allocation1 + $0x10] sm:$0xff pattern:$0x73625140]
    %v45 = vld.sshfl [vmem:[#allocation1 + $0x18] sm:$0xff pattern:$0x73625140]
    %v46 = vld.sshfl [vmem:[#allocation1 + $0x20] sm:$0xff pattern:$0x73625140]
    %v47 = vld.sshfl [vmem:[#allocation1 + $0x28] sm:$0xff pattern:$0x73625140]
    %v48 = vld.sshfl [vmem:[#allocation1 + $0x30] sm:$0xff pattern:$0x73625140]
    %v49 = vld.sshfl [vmem:[#allocation1 + $0x38] sm:$0xff pattern:$0x73625140]
    %v66 = vpack.c.bf16 %v32, %v32
    %v67 = vpack.c.bf16 %v33, %v33
    %v68 = vpack.c.bf16 %v34, %v34
    %v69 = vpack.c.bf16 %v35, %v35
    %v70 = vpack.c.bf16 %v36, %v36
    %v71 = vpack.c.bf16 %v37, %v37
    %v72 = vpack.c.bf16 %v38, %v38
    %v73 = vpack.c.bf16 %v39, %v39
    %v74 = vpack.c.bf16 %v42, %v42
    %v75 = vpack.c.bf16 %v43, %v43
    %v76 = vpack.c.bf16 %v44, %v44
    %v77 = vpack.c.bf16 %v45, %v45
    %v78 = vpack.c.bf16 %v46, %v46
    %v79 = vpack.c.bf16 %v47, %v47
    %v80 = vpack.c.bf16 %v48, %v48
    %v81 = vpack.c.bf16 %v49, %v49
    %v82 = vld [vmem:[%s1] sm:$0xf]
    %v83 = vld [vmem:[%s1 + $0x4] sm:$0xf]
    %v84 = vld [vmem:[%s1 + $0x8] sm:$0xf]
    %v85 = vld [vmem:[%s1 + $0xc] sm:$0xf]
    %v86 = vld [vmem:[%s1 + $0x10] sm:$0xf]
    %v87 = vld [vmem:[%s1 + $0x14] sm:$0xf]
    %v88 = vld [vmem:[%s1 + $0x18] sm:$0xf]
    %v89 = vld [vmem:[%s1 + $0x1c] sm:$0xf]
    %v90 = vld [vmem:[%s1 + $0x20] sm:$0xf]
    %v91 = vld [vmem:[%s1 + $0x24] sm:$0xf]
    %v92 = vld [vmem:[%s1 + $0x28] sm:$0xf]
    %v93 = vld [vmem:[%s1 + $0x2c] sm:$0xf]
    %v94 = vld [vmem:[%s1 + $0x30] sm:$0xf]
    %v95 = vld [vmem:[%s1 + $0x34] sm:$0xf]
    %v96 = vld [vmem:[%s1 + $0x38] sm:$0xf]
    %v97 = vld [vmem:[%s1 + $0x3c] sm:$0xf]
    %v98 = vld [vmem:[%s1 + $0x40] sm:$0xf]
    %v99 = vld [vmem:[%s1 + $0x44] sm:$0xf]
    %v100 = vld [vmem:[%s1 + $0x48] sm:$0xf]
    %v101 = vld [vmem:[%s1 + $0x4c] sm:$0xf]
    %v102 = vld [vmem:[%s1 + $0x50] sm:$0xf]
    %v103 = vld [vmem:[%s1 + $0x54] sm:$0xf]
    %v104 = vld [vmem:[%s1 + $0x58] sm:$0xf]
    %v105 = vld [vmem:[%s1 + $0x5c] sm:$0xf]
    %v106 = vld [vmem:[%s1 + $0x60] sm:$0xf]
    %v107 = vld [vmem:[%s1 + $0x64] sm:$0xf]
    %v108 = vld [vmem:[%s1 + $0x68] sm:$0xf]
    %v109 = vld [vmem:[%s1 + $0x6c] sm:$0xf]
    %v110 = vld [vmem:[%s1 + $0x70] sm:$0xf]
    %v111 = vld [vmem:[%s1 + $0x74] sm:$0xf]
    %v112 = vld [vmem:[%s1 + $0x78] sm:$0xf]
    %v113 = vld [vmem:[%s1 + $0x7c] sm:$0xf]
    %v114 = vld [vmem:[%s1 + $0x80] sm:$0xf]
    %v115 = vld [vmem:[%s1 + $0x84] sm:$0xf]
    %v116 = vld [vmem:[%s1 + $0x88] sm:$0xf]
    %v117 = vld [vmem:[%s1 + $0x8c] sm:$0xf]
    %v118 = vld [vmem:[%s1 + $0x90] sm:$0xf]
    %v119 = vld [vmem:[%s1 + $0x94] sm:$0xf]
    %v120 = vld [vmem:[%s1 + $0x98] sm:$0xf]
    %v121 = vld [vmem:[%s1 + $0x9c] sm:$0xf]
    %v122 = vld [vmem:[%s1 + $0xa0] sm:$0xf]
    %v123 = vld [vmem:[%s1 + $0xa4] sm:$0xf]
    %v124 = vld [vmem:[%s1 + $0xa8] sm:$0xf]
    %v125 = vld [vmem:[%s1 + $0xac] sm:$0xf]
    %v126 = vld [vmem:[%s1 + $0xb0] sm:$0xf]
    %v127 = vld [vmem:[%s1 + $0xb4] sm:$0xf]
    %v128 = vld [vmem:[%s1 + $0xb8] sm:$0xf]
    %v129 = vld [vmem:[%s1 + $0xbc] sm:$0xf]
    %v130 = vld [vmem:[%s1 + $0xc0] sm:$0xf]
    %v131 = vld [vmem:[%s1 + $0xc4] sm:$0xf]
    %v132 = vld [vmem:[%s1 + $0xc8] sm:$0xf]
    %v133 = vld [vmem:[%s1 + $0xcc] sm:$0xf]
    %v134 = vld [vmem:[%s1 + $0xd0] sm:$0xf]
    %v135 = vld [vmem:[%s1 + $0xd4] sm:$0xf]
    %v136 = vld [vmem:[%s1 + $0xd8] sm:$0xf]
    %v137 = vld [vmem:[%s1 + $0xdc] sm:$0xf]
    %v138 = vld [vmem:[%s1 + $0xe0] sm:$0xf]
    %v139 = vld [vmem:[%s1 + $0xe4] sm:$0xf]
    %v140 = vld [vmem:[%s1 + $0xe8] sm:$0xf]
    %v141 = vld [vmem:[%s1 + $0xec] sm:$0xf]
    %v142 = vld [vmem:[%s1 + $0xf0] sm:$0xf]
    %v143 = vld [vmem:[%s1 + $0xf4] sm:$0xf]
    %v144 = vld [vmem:[%s1 + $0xf8] sm:$0xf]
    %v145 = vld [vmem:[%s1 + $0xfc] sm:$0xf]
    %v146 = vld [vmem:[%s1 + $0x100] sm:$0xf]
    %v147 = vld [vmem:[%s1 + $0x104] sm:$0xf]
    %v148 = vld [vmem:[%s1 + $0x108] sm:$0xf]
    %v149 = vld [vmem:[%s1 + $0x10c] sm:$0xf]
    %v150 = vld [vmem:[%s1 + $0x110] sm:$0xf]
    %v151 = vld [vmem:[%s1 + $0x114] sm:$0xf]
    %v152 = vld [vmem:[%s1 + $0x118] sm:$0xf]
    %v153 = vld [vmem:[%s1 + $0x11c] sm:$0xf]
    %v154 = vld [vmem:[%s1 + $0x120] sm:$0xf]
    %v155 = vld [vmem:[%s1 + $0x124] sm:$0xf]
    %v156 = vld [vmem:[%s1 + $0x128] sm:$0xf]
    %v157 = vld [vmem:[%s1 + $0x12c] sm:$0xf]
    %v158 = vld [vmem:[%s1 + $0x130] sm:$0xf]
    %v159 = vld [vmem:[%s1 + $0x134] sm:$0xf]
    %v160 = vld [vmem:[%s1 + $0x138] sm:$0xf]
    %v161 = vld [vmem:[%s1 + $0x13c] sm:$0xf]
    %v162 = vld [vmem:[%s1 + $0x140] sm:$0xf]
    %v163 = vld [vmem:[%s1 + $0x144] sm:$0xf]
    %v164 = vld [vmem:[%s1 + $0x148] sm:$0xf]
    %v165 = vld [vmem:[%s1 + $0x14c] sm:$0xf]
    %v166 = vld [vmem:[%s1 + $0x150] sm:$0xf]
    %v167 = vld [vmem:[%s1 + $0x154] sm:$0xf]
    %v168 = vld [vmem:[%s1 + $0x158] sm:$0xf]
    %v169 = vld [vmem:[%s1 + $0x15c] sm:$0xf]
    %v170 = vld [vmem:[%s1 + $0x160] sm:$0xf]
    %v171 = vld [vmem:[%s1 + $0x164] sm:$0xf]
    %v172 = vld [vmem:[%s1 + $0x168] sm:$0xf]
    %v173 = vld [vmem:[%s1 + $0x16c] sm:$0xf]
    %v174 = vld [vmem:[%s1 + $0x170] sm:$0xf]
    %v175 = vld [vmem:[%s1 + $0x174] sm:$0xf]
    %v176 = vld [vmem:[%s1 + $0x178] sm:$0xf]
    %v177 = vld [vmem:[%s1 + $0x17c] sm:$0xf]
    %v178 = vld [vmem:[%s1 + $0x180] sm:$0xf]
    %v179 = vld [vmem:[%s1 + $0x184] sm:$0xf]
    %v180 = vld [vmem:[%s1 + $0x188] sm:$0xf]
    %v181 = vld [vmem:[%s1 + $0x18c] sm:$0xf]
    %v182 = vld [vmem:[%s1 + $0x190] sm:$0xf]
    %v183 = vld [vmem:[%s1 + $0x194] sm:$0xf]
    %v184 = vld [vmem:[%s1 + $0x198] sm:$0xf]
    %v185 = vld [vmem:[%s1 + $0x19c] sm:$0xf]
    %v186 = vld [vmem:[%s1 + $0x1a0] sm:$0xf]
    %v187 = vld [vmem:[%s1 + $0x1a4] sm:$0xf]
    %v188 = vld [vmem:[%s1 + $0x1a8] sm:$0xf]
    %v189 = vld [vmem:[%s1 + $0x1ac] sm:$0xf]
    %v190 = vld [vmem:[%s1 + $0x1b0] sm:$0xf]
    %v191 = vld [vmem:[%s1 + $0x1b4] sm:$0xf]
    %v192 = vld [vmem:[%s1 + $0x1b8] sm:$0xf]
    %v193 = vld [vmem:[%s1 + $0x1bc] sm:$0xf]
    %v194 = vld [vmem:[%s1 + $0x1c0] sm:$0xf]
    %v195 = vld [vmem:[%s1 + $0x1c4] sm:$0xf]
    %v196 = vld [vmem:[%s1 + $0x1c8] sm:$0xf]
    %v197 = vld [vmem:[%s1 + $0x1cc] sm:$0xf]
    %v198 = vld [vmem:[%s1 + $0x1d0] sm:$0xf]
    %v199 = vld [vmem:[%s1 + $0x1d4] sm:$0xf]
    %v200 = vld [vmem:[%s1 + $0x1d8] sm:$0xf]
    %v201 = vld [vmem:[%s1 + $0x1dc] sm:$0xf]
    %v202 = vld [vmem:[%s1 + $0x1e0] sm:$0xf]
    %v203 = vld [vmem:[%s1 + $0x1e4] sm:$0xf]
    %v204 = vld [vmem:[%s1 + $0x1e8] sm:$0xf]
    %v205 = vld [vmem:[%s1 + $0x1ec] sm:$0xf]
    %v206 = vld [vmem:[%s1 + $0x1f0] sm:$0xf]
    %v207 = vld [vmem:[%s1 + $0x1f4] sm:$0xf]
    %v208 = vld [vmem:[%s1 + $0x1f8] sm:$0xf]
    %v209 = vld [vmem:[%s1 + $0x1fc] sm:$0xf]
    %v210 = vld [vmem:[%s1 + $0x200] sm:$0xf]
    %v211 = vld [vmem:[%s1 + $0x204] sm:$0xf]
    %v212 = vld [vmem:[%s1 + $0x208] sm:$0xf]
    %v213 = vld [vmem:[%s1 + $0x20c] sm:$0xf]
    %v214 = vld [vmem:[%s1 + $0x210] sm:$0xf]
    %v215 = vld [vmem:[%s1 + $0x214] sm:$0xf]
    %v216 = vld [vmem:[%s1 + $0x218] sm:$0xf]
    %v217 = vld [vmem:[%s1 + $0x21c] sm:$0xf]
    %v218 = vld [vmem:[%s1 + $0x220] sm:$0xf]
    %v219 = vld [vmem:[%s1 + $0x224] sm:$0xf]
    %v220 = vld [vmem:[%s1 + $0x228] sm:$0xf]
    %v221 = vld [vmem:[%s1 + $0x22c] sm:$0xf]
    %v222 = vld [vmem:[%s1 + $0x230] sm:$0xf]
    %v223 = vld [vmem:[%s1 + $0x234] sm:$0xf]
    %v224 = vld [vmem:[%s1 + $0x238] sm:$0xf]
    %v225 = vld [vmem:[%s1 + $0x23c] sm:$0xf]
    %v226 = vld [vmem:[%s1 + $0x240] sm:$0xf]
    %v227 = vld [vmem:[%s1 + $0x244] sm:$0xf]
    %v228 = vld [vmem:[%s1 + $0x248] sm:$0xf]
    %v229 = vld [vmem:[%s1 + $0x24c] sm:$0xf]
    %v230 = vld [vmem:[%s1 + $0x250] sm:$0xf]
    %v231 = vld [vmem:[%s1 + $0x254] sm:$0xf]
    %v232 = vld [vmem:[%s1 + $0x258] sm:$0xf]
    %v233 = vld [vmem:[%s1 + $0x25c] sm:$0xf]
    %v234 = vld [vmem:[%s1 + $0x260] sm:$0xf]
    %v235 = vld [vmem:[%s1 + $0x264] sm:$0xf]
    %v236 = vld [vmem:[%s1 + $0x268] sm:$0xf]
    %v237 = vld [vmem:[%s1 + $0x26c] sm:$0xf]
    %v238 = vld [vmem:[%s1 + $0x270] sm:$0xf]
    %v239 = vld [vmem:[%s1 + $0x274] sm:$0xf]
    %v240 = vld [vmem:[%s1 + $0x278] sm:$0xf]
    %v241 = vld [vmem:[%s1 + $0x27c] sm:$0xf]
    %v242 = vld [vmem:[%s1 + $0x280] sm:$0xf]
    %v243 = vld [vmem:[%s1 + $0x284] sm:$0xf]
    %v244 = vld [vmem:[%s1 + $0x288] sm:$0xf]
    %v245 = vld [vmem:[%s1 + $0x28c] sm:$0xf]
    %v246 = vld [vmem:[%s1 + $0x290] sm:$0xf]
    %v247 = vld [vmem:[%s1 + $0x294] sm:$0xf]
    %v248 = vld [vmem:[%s1 + $0x298] sm:$0xf]
    %v249 = vld [vmem:[%s1 + $0x29c] sm:$0xf]
    %v250 = vld [vmem:[%s1 + $0x2a0] sm:$0xf]
    %v251 = vld [vmem:[%s1 + $0x2a4] sm:$0xf]
    %v252 = vld [vmem:[%s1 + $0x2a8] sm:$0xf]
    %v253 = vld [vmem:[%s1 + $0x2ac] sm:$0xf]
    %v254 = vld [vmem:[%s1 + $0x2b0] sm:$0xf]
    %v255 = vld [vmem:[%s1 + $0x2b4] sm:$0xf]
    %v256 = vld [vmem:[%s1 + $0x2b8] sm:$0xf]
    %v257 = vld [vmem:[%s1 + $0x2bc] sm:$0xf]
    %v258 = vld [vmem:[%s1 + $0x2c0] sm:$0xf]
    %v259 = vld [vmem:[%s1 + $0x2c4] sm:$0xf]
    %v260 = vld [vmem:[%s1 + $0x2c8] sm:$0xf]
    %v261 = vld [vmem:[%s1 + $0x2cc] sm:$0xf]
    %v262 = vld [vmem:[%s1 + $0x2d0] sm:$0xf]
    %v263 = vld [vmem:[%s1 + $0x2d4] sm:$0xf]
    %v264 = vld [vmem:[%s1 + $0x2d8] sm:$0xf]
    %v265 = vld [vmem:[%s1 + $0x2dc] sm:$0xf]
    %v266 = vld [vmem:[%s1 + $0x2e0] sm:$0xf]
    %v267 = vld [vmem:[%s1 + $0x2e4] sm:$0xf]
    %v268 = vld [vmem:[%s1 + $0x2e8] sm:$0xf]
    %v269 = vld [vmem:[%s1 + $0x2ec] sm:$0xf]
    %v270 = vld [vmem:[%s1 + $0x2f0] sm:$0xf]
    %v271 = vld [vmem:[%s1 + $0x2f4] sm:$0xf]
    %v272 = vld [vmem:[%s1 + $0x2f8] sm:$0xf]
    %v273 = vld [vmem:[%s1 + $0x2fc] sm:$0xf]
    %v274 = vld [vmem:[%s1 + $0x300] sm:$0xf]
    %v275 = vld [vmem:[%s1 + $0x304] sm:$0xf]
    %v276 = vld [vmem:[%s1 + $0x308] sm:$0xf]
    %v277 = vld [vmem:[%s1 + $0x30c] sm:$0xf]
    %v278 = vld [vmem:[%s1 + $0x310] sm:$0xf]
    %v279 = vld [vmem:[%s1 + $0x314] sm:$0xf]
    %v280 = vld [vmem:[%s1 + $0x318] sm:$0xf]
    %v281 = vld [vmem:[%s1 + $0x31c] sm:$0xf]
    %v282 = vld [vmem:[%s1 + $0x320] sm:$0xf]
    %v283 = vld [vmem:[%s1 + $0x324] sm:$0xf]
    %v284 = vld [vmem:[%s1 + $0x328] sm:$0xf]
    %v285 = vld [vmem:[%s1 + $0x32c] sm:$0xf]
    %v286 = vld [vmem:[%s1 + $0x330] sm:$0xf]
    %v287 = vld [vmem:[%s1 + $0x334] sm:$0xf]
    %v288 = vld [vmem:[%s1 + $0x338] sm:$0xf]
    %v289 = vld [vmem:[%s1 + $0x33c] sm:$0xf]
    %v290 = vld [vmem:[%s1 + $0x340] sm:$0xf]
    %v291 = vld [vmem:[%s1 + $0x344] sm:$0xf]
    %v292 = vld [vmem:[%s1 + $0x348] sm:$0xf]
    %v293 = vld [vmem:[%s1 + $0x34c] sm:$0xf]
    %v294 = vld [vmem:[%s1 + $0x350] sm:$0xf]
    %v295 = vld [vmem:[%s1 + $0x354] sm:$0xf]
    %v296 = vld [vmem:[%s1 + $0x358] sm:$0xf]
    %v297 = vld [vmem:[%s1 + $0x35c] sm:$0xf]
    %v298 = vld [vmem:[%s1 + $0x360] sm:$0xf]
    %v299 = vld [vmem:[%s1 + $0x364] sm:$0xf]
    %v300 = vld [vmem:[%s1 + $0x368] sm:$0xf]
    %v301 = vld [vmem:[%s1 + $0x36c] sm:$0xf]
    %v302 = vld [vmem:[%s1 + $0x370] sm:$0xf]
    %v303 = vld [vmem:[%s1 + $0x374] sm:$0xf]
    %v304 = vld [vmem:[%s1 + $0x378] sm:$0xf]
    %v305 = vld [vmem:[%s1 + $0x37c] sm:$0xf]
    %v306 = vld [vmem:[%s1 + $0x380] sm:$0xf]
    %v307 = vld [vmem:[%s1 + $0x384] sm:$0xf]
    %v308 = vld [vmem:[%s1 + $0x388] sm:$0xf]
    %v309 = vld [vmem:[%s1 + $0x38c] sm:$0xf]
    %v310 = vld [vmem:[%s1 + $0x390] sm:$0xf]
    %v311 = vld [vmem:[%s1 + $0x394] sm:$0xf]
    %v312 = vld [vmem:[%s1 + $0x398] sm:$0xf]
    %v313 = vld [vmem:[%s1 + $0x39c] sm:$0xf]
    %v314 = vld [vmem:[%s1 + $0x3a0] sm:$0xf]
    %v315 = vld [vmem:[%s1 + $0x3a4] sm:$0xf]
    %v316 = vld [vmem:[%s1 + $0x3a8] sm:$0xf]
    %v317 = vld [vmem:[%s1 + $0x3ac] sm:$0xf]
    %v318 = vld [vmem:[%s1 + $0x3b0] sm:$0xf]
    %v319 = vld [vmem:[%s1 + $0x3b4] sm:$0xf]
    %v320 = vld [vmem:[%s1 + $0x3b8] sm:$0xf]
    %v321 = vld [vmem:[%s1 + $0x3bc] sm:$0xf]
    %v322 = vld [vmem:[%s1 + $0x3c0] sm:$0xf]
    %v323 = vld [vmem:[%s1 + $0x3c4] sm:$0xf]
    %v324 = vld [vmem:[%s1 + $0x3c8] sm:$0xf]
    %v325 = vld [vmem:[%s1 + $0x3cc] sm:$0xf]
    %v326 = vld [vmem:[%s1 + $0x3d0] sm:$0xf]
    %v327 = vld [vmem:[%s1 + $0x3d4] sm:$0xf]
    %v328 = vld [vmem:[%s1 + $0x3d8] sm:$0xf]
    %v329 = vld [vmem:[%s1 + $0x3dc] sm:$0xf]
    %v330 = vld [vmem:[%s1 + $0x3e0] sm:$0xf]
    %v331 = vld [vmem:[%s1 + $0x3e4] sm:$0xf]
    %v332 = vld [vmem:[%s1 + $0x3e8] sm:$0xf]
    %v333 = vld [vmem:[%s1 + $0x3ec] sm:$0xf]
    %v334 = vld [vmem:[%s1 + $0x3f0] sm:$0xf]
    %v335 = vld [vmem:[%s1 + $0x3f4] sm:$0xf]
    %v336 = vld [vmem:[%s1 + $0x3f8] sm:$0xf]
    %v337 = vld [vmem:[%s1 + $0x3fc] sm:$0xf]
    %v338 = vld [vmem:[%s2] sm:$0x1]
    %v340 = vperm.slane %v338, 0
    %v598 = vunpack.c.l.b16 %v82
    %v599 = vunpack.c.l.b16 %v83
    %v600 = vunpack.c.l.b16 %v84
    %v601 = vunpack.c.l.b16 %v85
    %v602 = vunpack.c.l.b16 %v86
    %v603 = vunpack.c.l.b16 %v87
    %v604 = vunpack.c.l.b16 %v88
    %v605 = vunpack.c.l.b16 %v89
    %v606 = vunpack.c.l.b16 %v90
    %v607 = vunpack.c.l.b16 %v91
    %v608 = vunpack.c.l.b16 %v92
    %v609 = vunpack.c.l.b16 %v93
    %v610 = vunpack.c.l.b16 %v94
    %v611 = vunpack.c.l.b16 %v95
    %v612 = vunpack.c.l.b16 %v96
    %v613 = vunpack.c.l.b16 %v97
    %v614 = vunpack.c.l.b16 %v98
    %v615 = vunpack.c.l.b16 %v99
    %v616 = vunpack.c.l.b16 %v100
    %v617 = vunpack.c.l.b16 %v101
    %v618 = vunpack.c.l.b16 %v102
    %v619 = vunpack.c.l.b16 %v103
    %v620 = vunpack.c.l.b16 %v104
    %v621 = vunpack.c.l.b16 %v105
    %v622 = vunpack.c.l.b16 %v106
    %v623 = vunpack.c.l.b16 %v107
    %v624 = vunpack.c.l.b16 %v108
    %v625 = vunpack.c.l.b16 %v109
    %v626 = vunpack.c.l.b16 %v110
    %v627 = vunpack.c.l.b16 %v111
    %v628 = vunpack.c.l.b16 %v112
    %v629 = vunpack.c.l.b16 %v113
    %v630 = vunpack.c.l.b16 %v114
    %v631 = vunpack.c.l.b16 %v115
    %v632 = vunpack.c.l.b16 %v116
    %v633 = vunpack.c.l.b16 %v117
    %v634 = vunpack.c.l.b16 %v118
    %v635 = vunpack.c.l.b16 %v119
    %v636 = vunpack.c.l.b16 %v120
    %v637 = vunpack.c.l.b16 %v121
    %v638 = vunpack.c.l.b16 %v122
    %v639 = vunpack.c.l.b16 %v123
    %v640 = vunpack.c.l.b16 %v124
    %v641 = vunpack.c.l.b16 %v125
    %v642 = vunpack.c.l.b16 %v126
    %v643 = vunpack.c.l.b16 %v127
    %v644 = vunpack.c.l.b16 %v128
    %v645 = vunpack.c.l.b16 %v129
    %v646 = vunpack.c.l.b16 %v130
    %v647 = vunpack.c.l.b16 %v131
    %v648 = vunpack.c.l.b16 %v132
    %v649 = vunpack.c.l.b16 %v133
    %v650 = vunpack.c.l.b16 %v134
    %v651 = vunpack.c.l.b16 %v135
    %v652 = vunpack.c.l.b16 %v136
    %v653 = vunpack.c.l.b16 %v137
    %v654 = vunpack.c.l.b16 %v138
    %v655 = vunpack.c.l.b16 %v139
    %v656 = vunpack.c.l.b16 %v140
    %v657 = vunpack.c.l.b16 %v141
    %v658 = vunpack.c.l.b16 %v142
    %v659 = vunpack.c.l.b16 %v143
    %v660 = vunpack.c.l.b16 %v144
    %v661 = vunpack.c.l.b16 %v145
    %v662 = vunpack.c.l.b16 %v146
    %v663 = vunpack.c.l.b16 %v147
    %v664 = vunpack.c.l.b16 %v148
    %v665 = vunpack.c.l.b16 %v149
    %v666 = vunpack.c.l.b16 %v150
    %v667 = vunpack.c.l.b16 %v151
    %v668 = vunpack.c.l.b16 %v152
    %v669 = vunpack.c.l.b16 %v153
    %v670 = vunpack.c.l.b16 %v154
    %v671 = vunpack.c.l.b16 %v155
    %v672 = vunpack.c.l.b16 %v156
    %v673 = vunpack.c.l.b16 %v157
    %v674 = vunpack.c.l.b16 %v158
    %v675 = vunpack.c.l.b16 %v159
    %v676 = vunpack.c.l.b16 %v160
    %v677 = vunpack.c.l.b16 %v161
    %v678 = vunpack.c.l.b16 %v162
    %v679 = vunpack.c.l.b16 %v163
    %v680 = vunpack.c.l.b16 %v164
    %v681 = vunpack.c.l.b16 %v165
    %v682 = vunpack.c.l.b16 %v166
    %v683 = vunpack.c.l.b16 %v167
    %v684 = vunpack.c.l.b16 %v168
    %v685 = vunpack.c.l.b16 %v169
    %v686 = vunpack.c.l.b16 %v170
    %v687 = vunpack.c.l.b16 %v171
    %v688 = vunpack.c.l.b16 %v172
    %v689 = vunpack.c.l.b16 %v173
    %v690 = vunpack.c.l.b16 %v174
    %v691 = vunpack.c.l.b16 %v175
    %v692 = vunpack.c.l.b16 %v176
    %v693 = vunpack.c.l.b16 %v177
    %v694 = vunpack.c.l.b16 %v178
    %v695 = vunpack.c.l.b16 %v179
    %v696 = vunpack.c.l.b16 %v180
    %v697 = vunpack.c.l.b16 %v181
    %v698 = vunpack.c.l.b16 %v182
    %v699 = vunpack.c.l.b16 %v183
    %v700 = vunpack.c.l.b16 %v184
    %v701 = vunpack.c.l.b16 %v185
    %v702 = vunpack.c.l.b16 %v186
    %v703 = vunpack.c.l.b16 %v187
    %v704 = vunpack.c.l.b16 %v188
    %v705 = vunpack.c.l.b16 %v189
    %v706 = vunpack.c.l.b16 %v190
    %v707 = vunpack.c.l.b16 %v191
    %v708 = vunpack.c.l.b16 %v192
    %v709 = vunpack.c.l.b16 %v193
    %v710 = vunpack.c.l.b16 %v194
    %v711 = vunpack.c.l.b16 %v195
    %v712 = vunpack.c.l.b16 %v196
    %v713 = vunpack.c.l.b16 %v197
    %v714 = vunpack.c.l.b16 %v198
    %v715 = vunpack.c.l.b16 %v199
    %v716 = vunpack.c.l.b16 %v200
    %v717 = vunpack.c.l.b16 %v201
    %v718 = vunpack.c.l.b16 %v202
    %v719 = vunpack.c.l.b16 %v203
    %v720 = vunpack.c.l.b16 %v204
    %v721 = vunpack.c.l.b16 %v205
    %v722 = vunpack.c.l.b16 %v206
    %v723 = vunpack.c.l.b16 %v207
    %v724 = vunpack.c.l.b16 %v208
    %v725 = vunpack.c.l.b16 %v209
    %v726 = vunpack.c.l.b16 %v210
    %v727 = vunpack.c.l.b16 %v211
    %v728 = vunpack.c.l.b16 %v212
    %v729 = vunpack.c.l.b16 %v213
    %v730 = vunpack.c.l.b16 %v214
    %v731 = vunpack.c.l.b16 %v215
    %v732 = vunpack.c.l.b16 %v216
    %v733 = vunpack.c.l.b16 %v217
    %v734 = vunpack.c.l.b16 %v218
    %v735 = vunpack.c.l.b16 %v219
    %v736 = vunpack.c.l.b16 %v220
    %v737 = vunpack.c.l.b16 %v221
    %v738 = vunpack.c.l.b16 %v222
    %v739 = vunpack.c.l.b16 %v223
    %v740 = vunpack.c.l.b16 %v224
    %v741 = vunpack.c.l.b16 %v225
    %v742 = vunpack.c.l.b16 %v226
    %v743 = vunpack.c.l.b16 %v227
    %v744 = vunpack.c.l.b16 %v228
    %v745 = vunpack.c.l.b16 %v229
    %v746 = vunpack.c.l.b16 %v230
    %v747 = vunpack.c.l.b16 %v231
    %v748 = vunpack.c.l.b16 %v232
    %v749 = vunpack.c.l.b16 %v233
    %v750 = vunpack.c.l.b16 %v234
    %v751 = vunpack.c.l.b16 %v235
    %v752 = vunpack.c.l.b16 %v236
    %v753 = vunpack.c.l.b16 %v237
    %v754 = vunpack.c.l.b16 %v238
    %v755 = vunpack.c.l.b16 %v239
    %v756 = vunpack.c.l.b16 %v240
    %v757 = vunpack.c.l.b16 %v241
    %v758 = vunpack.c.l.b16 %v242
    %v759 = vunpack.c.l.b16 %v243
    %v760 = vunpack.c.l.b16 %v244
    %v761 = vunpack.c.l.b16 %v245
    %v762 = vunpack.c.l.b16 %v246
    %v763 = vunpack.c.l.b16 %v247
    %v764 = vunpack.c.l.b16 %v248
    %v765 = vunpack.c.l.b16 %v249
    %v766 = vunpack.c.l.b16 %v250
    %v767 = vunpack.c.l.b16 %v251
    %v768 = vunpack.c.l.b16 %v252
    %v769 = vunpack.c.l.b16 %v253
    %v770 = vunpack.c.l.b16 %v254
    %v771 = vunpack.c.l.b16 %v255
    %v772 = vunpack.c.l.b16 %v256
    %v773 = vunpack.c.l.b16 %v257
    %v774 = vunpack.c.l.b16 %v258
    %v775 = vunpack.c.l.b16 %v259
    %v776 = vunpack.c.l.b16 %v260
    %v777 = vunpack.c.l.b16 %v261
    %v778 = vunpack.c.l.b16 %v262
    %v779 = vunpack.c.l.b16 %v263
    %v780 = vunpack.c.l.b16 %v264
    %v781 = vunpack.c.l.b16 %v265
    %v782 = vunpack.c.l.b16 %v266
    %v783 = vunpack.c.l.b16 %v267
    %v784 = vunpack.c.l.b16 %v268
    %v785 = vunpack.c.l.b16 %v269
    %v786 = vunpack.c.l.b16 %v270
    %v787 = vunpack.c.l.b16 %v271
    %v788 = vunpack.c.l.b16 %v272
    %v789 = vunpack.c.l.b16 %v273
    %v790 = vunpack.c.l.b16 %v274
    %v791 = vunpack.c.l.b16 %v275
    %v792 = vunpack.c.l.b16 %v276
    %v793 = vunpack.c.l.b16 %v277
    %v794 = vunpack.c.l.b16 %v278
    %v795 = vunpack.c.l.b16 %v279
    %v796 = vunpack.c.l.b16 %v280
    %v797 = vunpack.c.l.b16 %v281
    %v798 = vunpack.c.l.b16 %v282
    %v799 = vunpack.c.l.b16 %v283
    %v800 = vunpack.c.l.b16 %v284
    %v801 = vunpack.c.l.b16 %v285
    %v802 = vunpack.c.l.b16 %v286
    %v803 = vunpack.c.l.b16 %v287
    %v804 = vunpack.c.l.b16 %v288
    %v805 = vunpack.c.l.b16 %v289
    %v806 = vunpack.c.l.b16 %v290
    %v807 = vunpack.c.l.b16 %v291
    %v808 = vunpack.c.l.b16 %v292
    %v809 = vunpack.c.l.b16 %v293
    %v810 = vunpack.c.l.b16 %v294
    %v811 = vunpack.c.l.b16 %v295
    %v812 = vunpack.c.l.b16 %v296
    %v813 = vunpack.c.l.b16 %v297
    %v814 = vunpack.c.l.b16 %v298
    %v815 = vunpack.c.l.b16 %v299
    %v816 = vunpack.c.l.b16 %v300
    %v817 = vunpack.c.l.b16 %v301
    %v818 = vunpack.c.l.b16 %v302
    %v819 = vunpack.c.l.b16 %v303
    %v820 = vunpack.c.l.b16 %v304
    %v821 = vunpack.c.l.b16 %v305
    %v822 = vunpack.c.l.b16 %v306
    %v823 = vunpack.c.l.b16 %v307
    %v824 = vunpack.c.l.b16 %v308
    %v825 = vunpack.c.l.b16 %v309
    %v826 = vunpack.c.l.b16 %v310
    %v827 = vunpack.c.l.b16 %v311
    %v828 = vunpack.c.l.b16 %v312
    %v829 = vunpack.c.l.b16 %v313
    %v830 = vunpack.c.l.b16 %v314
    %v831 = vunpack.c.l.b16 %v315
    %v832 = vunpack.c.l.b16 %v316
    %v833 = vunpack.c.l.b16 %v317
    %v834 = vunpack.c.l.b16 %v318
    %v835 = vunpack.c.l.b16 %v319
    %v836 = vunpack.c.l.b16 %v320
    %v837 = vunpack.c.l.b16 %v321
    %v838 = vunpack.c.l.b16 %v322
    %v839 = vunpack.c.l.b16 %v323
    %v840 = vunpack.c.l.b16 %v324
    %v841 = vunpack.c.l.b16 %v325
    %v842 = vunpack.c.l.b16 %v326
    %v843 = vunpack.c.l.b16 %v327
    %v844 = vunpack.c.l.b16 %v328
    %v845 = vunpack.c.l.b16 %v329
    %v846 = vunpack.c.l.b16 %v330
    %v847 = vunpack.c.l.b16 %v331
    %v848 = vunpack.c.l.b16 %v332
    %v849 = vunpack.c.l.b16 %v333
    %v850 = vunpack.c.l.b16 %v334
    %v851 = vunpack.c.l.b16 %v335
    %v852 = vunpack.c.l.b16 %v336
    %v853 = vunpack.c.l.b16 %v337
    %v854 = vpack.c.b16 %v599, %v598
    %v855 = vpack.c.b16 %v601, %v600
    %v856 = vpack.c.b16 %v603, %v602
    %v857 = vpack.c.b16 %v605, %v604
    %v858 = vpack.c.b16 %v607, %v606
    %v859 = vpack.c.b16 %v609, %v608
    %v860 = vpack.c.b16 %v611, %v610
    %v861 = vpack.c.b16 %v613, %v612
    %v862 = vpack.c.b16 %v615, %v614
    %v863 = vpack.c.b16 %v617, %v616
    %v864 = vpack.c.b16 %v619, %v618
    %v865 = vpack.c.b16 %v621, %v620
    %v866 = vpack.c.b16 %v623, %v622
    %v867 = vpack.c.b16 %v625, %v624
    %v868 = vpack.c.b16 %v627, %v626
    %v869 = vpack.c.b16 %v629, %v628
    %v870 = vpack.c.b16 %v631, %v630
    %v871 = vpack.c.b16 %v633, %v632
    %v872 = vpack.c.b16 %v635, %v634
    %v873 = vpack.c.b16 %v637, %v636
    %v874 = vpack.c.b16 %v639, %v638
    %v875 = vpack.c.b16 %v641, %v640
    %v876 = vpack.c.b16 %v643, %v642
    %v877 = vpack.c.b16 %v645, %v644
    %v878 = vpack.c.b16 %v647, %v646
    %v879 = vpack.c.b16 %v649, %v648
    %v880 = vpack.c.b16 %v651, %v650
    %v881 = vpack.c.b16 %v653, %v652
    %v882 = vpack.c.b16 %v655, %v654
    %v883 = vpack.c.b16 %v657, %v656
    %v884 = vpack.c.b16 %v659, %v658
    %v885 = vpack.c.b16 %v661, %v660
    %v886 = vpack.c.b16 %v663, %v662
    %v887 = vpack.c.b16 %v665, %v664
    %v888 = vpack.c.b16 %v667, %v666
    %v889 = vpack.c.b16 %v669, %v668
    %v890 = vpack.c.b16 %v671, %v670
    %v891 = vpack.c.b16 %v673, %v672
    %v892 = vpack.c.b16 %v675, %v674
    %v893 = vpack.c.b16 %v677, %v676
    %v894 = vpack.c.b16 %v679, %v678
    %v895 = vpack.c.b16 %v681, %v680
    %v896 = vpack.c.b16 %v683, %v682
    %v897 = vpack.c.b16 %v685, %v684
    %v898 = vpack.c.b16 %v687, %v686
    %v899 = vpack.c.b16 %v689, %v688
    %v900 = vpack.c.b16 %v691, %v690
    %v901 = vpack.c.b16 %v693, %v692
    %v902 = vpack.c.b16 %v695, %v694
    %v903 = vpack.c.b16 %v697, %v696
    %v904 = vpack.c.b16 %v699, %v698
    %v905 = vpack.c.b16 %v701, %v700
    %v906 = vpack.c.b16 %v703, %v702
    %v907 = vpack.c.b16 %v705, %v704
    %v908 = vpack.c.b16 %v707, %v706
    %v909 = vpack.c.b16 %v709, %v708
    %v910 = vpack.c.b16 %v711, %v710
    %v911 = vpack.c.b16 %v713, %v712
    %v912 = vpack.c.b16 %v715, %v714
    %v913 = vpack.c.b16 %v717, %v716
    %v914 = vpack.c.b16 %v719, %v718
    %v915 = vpack.c.b16 %v721, %v720
    %v916 = vpack.c.b16 %v723, %v722
    %v917 = vpack.c.b16 %v725, %v724
    %v918 = vpack.c.b16 %v727, %v726
    %v919 = vpack.c.b16 %v729, %v728
    %v920 = vpack.c.b16 %v731, %v730
    %v921 = vpack.c.b16 %v733, %v732
    %v922 = vpack.c.b16 %v735, %v734
    %v923 = vpack.c.b16 %v737, %v736
    %v924 = vpack.c.b16 %v739, %v738
    %v925 = vpack.c.b16 %v741, %v740
    %v926 = vpack.c.b16 %v743, %v742
    %v927 = vpack.c.b16 %v745, %v744
    %v928 = vpack.c.b16 %v747, %v746
    %v929 = vpack.c.b16 %v749, %v748
    %v930 = vpack.c.b16 %v751, %v750
    %v931 = vpack.c.b16 %v753, %v752
    %v932 = vpack.c.b16 %v755, %v754
    %v933 = vpack.c.b16 %v757, %v756
    %v934 = vpack.c.b16 %v759, %v758
    %v935 = vpack.c.b16 %v761, %v760
    %v936 = vpack.c.b16 %v763, %v762
    %v937 = vpack.c.b16 %v765, %v764
    %v938 = vpack.c.b16 %v767, %v766
    %v939 = vpack.c.b16 %v769, %v768
    %v940 = vpack.c.b16 %v771, %v770
    %v941 = vpack.c.b16 %v773, %v772
    %v942 = vpack.c.b16 %v775, %v774
    %v943 = vpack.c.b16 %v777, %v776
    %v944 = vpack.c.b16 %v779, %v778
    %v945 = vpack.c.b16 %v781, %v780
    %v946 = vpack.c.b16 %v783, %v782
    %v947 = vpack.c.b16 %v785, %v784
    %v948 = vpack.c.b16 %v787, %v786
    %v949 = vpack.c.b16 %v789, %v788
    %v950 = vpack.c.b16 %v791, %v790
    %v951 = vpack.c.b16 %v793, %v792
    %v952 = vpack.c.b16 %v795, %v794
    %v953 = vpack.c.b16 %v797, %v796
    %v954 = vpack.c.b16 %v799, %v798
    %v955 = vpack.c.b16 %v801, %v800
    %v956 = vpack.c.b16 %v803, %v802
    %v957 = vpack.c.b16 %v805, %v804
    %v958 = vpack.c.b16 %v807, %v806
    %v959 = vpack.c.b16 %v809, %v808
    %v960 = vpack.c.b16 %v811, %v810
    %v961 = vpack.c.b16 %v813, %v812
    %v962 = vpack.c.b16 %v815, %v814
    %v963 = vpack.c.b16 %v817, %v816
    %v964 = vpack.c.b16 %v819, %v818
    %v965 = vpack.c.b16 %v821, %v820
    %v966 = vpack.c.b16 %v823, %v822
    %v967 = vpack.c.b16 %v825, %v824
    %v968 = vpack.c.b16 %v827, %v826
    %v969 = vpack.c.b16 %v829, %v828
    %v970 = vpack.c.b16 %v831, %v830
    %v971 = vpack.c.b16 %v833, %v832
    %v972 = vpack.c.b16 %v835, %v834
    %v973 = vpack.c.b16 %v837, %v836
    %v974 = vpack.c.b16 %v839, %v838
    %v975 = vpack.c.b16 %v841, %v840
    %v976 = vpack.c.b16 %v843, %v842
    %v977 = vpack.c.b16 %v845, %v844
    %v978 = vpack.c.b16 %v847, %v846
    %v979 = vpack.c.b16 %v849, %v848
    %v980 = vpack.c.b16 %v851, %v850
    %v981 = vpack.c.b16 %v853, %v852
    %1110 = vmatpush.bf16.msra.mxu0 %v861
    %1111 = vmatpush.bf16.msra.mxu0 %v860
    %1112 = vmatpush.bf16.msra.mxu0 %v859
    %1113 = vmatpush.bf16.msra.mxu0 %v858
    %1114 = vmatpush.bf16.msra.mxu0 %v857
    %1115 = vmatpush.bf16.msra.mxu0 %v856
    %1116 = vmatpush.bf16.msra.mxu0 %v855
    %1117 = vmatpush.bf16.msra.mxu0 %v854
    %1118 = vmatmul.bf16.gmra.mxu0 %v66
    %v1119 = vpop.f32.mrf.mxu0
    %v1120 = vadd.f32 %v340, %v1119
    %v1121 = vpop.f32.mrf.mxu0
    %1122 = vdwg.mxu0
    %1123 = vmatpush.bf16.msra.mxu0 %v869
    %1124 = vmatpush.bf16.msra.mxu0 %v868
    %1125 = vmatpush.bf16.msra.mxu0 %v867
    %1126 = vmatpush.bf16.msra.mxu0 %v866
    %1127 = vmatpush.bf16.msra.mxu0 %v865
    %1128 = vmatpush.bf16.msra.mxu0 %v864
    %1129 = vmatpush.bf16.msra.mxu0 %v863
    %1130 = vmatpush.bf16.msra.mxu0 %v862
    %1131 = vmatmul.bf16.gmra.mxu0 %v67
    %v1132 = vpop.f32.mrf.mxu0
    %v1133 = vadd.f32 %v1120, %v1132
    %v1134 = vpop.f32.mrf.mxu0
    %1135 = vdwg.mxu0
    %1136 = vmatpush.bf16.msra.mxu0 %v877
    %1137 = vmatpush.bf16.msra.mxu0 %v876
    %1138 = vmatpush.bf16.msra.mxu0 %v875
    %1139 = vmatpush.bf16.msra.mxu0 %v874
    %1140 = vmatpush.bf16.msra.mxu0 %v873
    %1141 = vmatpush.bf16.msra.mxu0 %v872
    %1142 = vmatpush.bf16.msra.mxu0 %v871
    %1143 = vmatpush.bf16.msra.mxu0 %v870
    %1144 = vmatmul.bf16.gmra.mxu0 %v68
    %v1145 = vpop.f32.mrf.mxu0
    %v1146 = vadd.f32 %v1133, %v1145
    %v1147 = vpop.f32.mrf.mxu0
    %1148 = vdwg.mxu0
    %1149 = vmatpush.bf16.msra.mxu0 %v885
    %1150 = vmatpush.bf16.msra.mxu0 %v884
    %1151 = vmatpush.bf16.msra.mxu0 %v883
    %1152 = vmatpush.bf16.msra.mxu0 %v882
    %1153 = vmatpush.bf16.msra.mxu0 %v881
    %1154 = vmatpush.bf16.msra.mxu0 %v880
    %1155 = vmatpush.bf16.msra.mxu0 %v879
    %1156 = vmatpush.bf16.msra.mxu0 %v878
    %1157 = vmatmul.bf16.gmra.mxu0 %v69
    %v1158 = vpop.f32.mrf.mxu0
    %v1159 = vadd.f32 %v1146, %v1158
    %v1160 = vpop.f32.mrf.mxu0
    %1161 = vdwg.mxu0
    %1162 = vmatpush.bf16.msra.mxu0 %v893
    %1163 = vmatpush.bf16.msra.mxu0 %v892
    %1164 = vmatpush.bf16.msra.mxu0 %v891
    %1165 = vmatpush.bf16.msra.mxu0 %v890
    %1166 = vmatpush.bf16.msra.mxu0 %v889
    %1167 = vmatpush.bf16.msra.mxu0 %v888
    %1168 = vmatpush.bf16.msra.mxu0 %v887
    %1169 = vmatpush.bf16.msra.mxu0 %v886
    %1170 = vmatmul.bf16.gmra.mxu0 %v70
    %v1171 = vpop.f32.mrf.mxu0
    %v1172 = vadd.f32 %v1159, %v1171
    %v1173 = vpop.f32.mrf.mxu0
    %1174 = vdwg.mxu0
    %1175 = vmatpush.bf16.msra.mxu0 %v901
    %1176 = vmatpush.bf16.msra.mxu0 %v900
    %1177 = vmatpush.bf16.msra.mxu0 %v899
    %1178 = vmatpush.bf16.msra.mxu0 %v898
    %1179 = vmatpush.bf16.msra.mxu0 %v897
    %1180 = vmatpush.bf16.msra.mxu0 %v896
    %1181 = vmatpush.bf16.msra.mxu0 %v895
    %1182 = vmatpush.bf16.msra.mxu0 %v894
    %1183 = vmatmul.bf16.gmra.mxu0 %v71
    %v1184 = vpop.f32.mrf.mxu0
    %v1185 = vadd.f32 %v1172, %v1184
    %v1186 = vpop.f32.mrf.mxu0
    %1187 = vdwg.mxu0
    %1188 = vmatpush.bf16.msra.mxu0 %v909
    %1189 = vmatpush.bf16.msra.mxu0 %v908
    %1190 = vmatpush.bf16.msra.mxu0 %v907
    %1191 = vmatpush.bf16.msra.mxu0 %v906
    %1192 = vmatpush.bf16.msra.mxu0 %v905
    %1193 = vmatpush.bf16.msra.mxu0 %v904
    %1194 = vmatpush.bf16.msra.mxu0 %v903
    %1195 = vmatpush.bf16.msra.mxu0 %v902
    %1196 = vmatmul.bf16.gmra.mxu0 %v72
    %v1197 = vpop.f32.mrf.mxu0
    %v1198 = vadd.f32 %v1185, %v1197
    %v1199 = vpop.f32.mrf.mxu0
    %1200 = vdwg.mxu0
    %1201 = vmatpush.bf16.msra.mxu0 %v917
    %1202 = vmatpush.bf16.msra.mxu0 %v916
    %1203 = vmatpush.bf16.msra.mxu0 %v915
    %1204 = vmatpush.bf16.msra.mxu0 %v914
    %1205 = vmatpush.bf16.msra.mxu0 %v913
    %1206 = vmatpush.bf16.msra.mxu0 %v912
    %1207 = vmatpush.bf16.msra.mxu0 %v911
    %1208 = vmatpush.bf16.msra.mxu0 %v910
    %1209 = vmatmul.bf16.gmra.mxu0 %v73
    %v1210 = vpop.f32.mrf.mxu0
    %v1211 = vadd.f32 %v1198, %v1210
    %v1212 = vpop.f32.mrf.mxu0
    %1213 = vdwg.mxu0
    %1214 = vmatpush.bf16.msra.mxu0 %v925
    %1215 = vmatpush.bf16.msra.mxu0 %v924
    %1216 = vmatpush.bf16.msra.mxu0 %v923
    %1217 = vmatpush.bf16.msra.mxu0 %v922
    %1218 = vmatpush.bf16.msra.mxu0 %v921
    %1219 = vmatpush.bf16.msra.mxu0 %v920
    %1220 = vmatpush.bf16.msra.mxu0 %v919
    %1221 = vmatpush.bf16.msra.mxu0 %v918
    %1222 = vmatmul.bf16.gmra.mxu0 %v74
    %v1223 = vpop.f32.mrf.mxu0
    %v1224 = vadd.f32 %v1211, %v1223
    %v1225 = vpop.f32.mrf.mxu0
    %1226 = vdwg.mxu0
    %1227 = vmatpush.bf16.msra.mxu0 %v933
    %1228 = vmatpush.bf16.msra.mxu0 %v932
    %1229 = vmatpush.bf16.msra.mxu0 %v931
    %1230 = vmatpush.bf16.msra.mxu0 %v930
    %1231 = vmatpush.bf16.msra.mxu0 %v929
    %1232 = vmatpush.bf16.msra.mxu0 %v928
    %1233 = vmatpush.bf16.msra.mxu0 %v927
    %1234 = vmatpush.bf16.msra.mxu0 %v926
    %1235 = vmatmul.bf16.gmra.mxu0 %v75
    %v1236 = vpop.f32.mrf.mxu0
    %v1237 = vadd.f32 %v1224, %v1236
    %v1238 = vpop.f32.mrf.mxu0
    %1239 = vdwg.mxu0
    %1240 = vmatpush.bf16.msra.mxu0 %v941
    %1241 = vmatpush.bf16.msra.mxu0 %v940
    %1242 = vmatpush.bf16.msra.mxu0 %v939
    %1243 = vmatpush.bf16.msra.mxu0 %v938
    %1244 = vmatpush.bf16.msra.mxu0 %v937
    %1245 = vmatpush.bf16.msra.mxu0 %v936
    %1246 = vmatpush.bf16.msra.mxu0 %v935
    %1247 = vmatpush.bf16.msra.mxu0 %v934
    %1248 = vmatmul.bf16.gmra.mxu0 %v76
    %v1249 = vpop.f32.mrf.mxu0
    %v1250 = vadd.f32 %v1237, %v1249
    %v1251 = vpop.f32.mrf.mxu0
    %1252 = vdwg.mxu0
    %1253 = vmatpush.bf16.msra.mxu0 %v949
    %1254 = vmatpush.bf16.msra.mxu0 %v948
    %1255 = vmatpush.bf16.msra.mxu0 %v947
    %1256 = vmatpush.bf16.msra.mxu0 %v946
    %1257 = vmatpush.bf16.msra.mxu0 %v945
    %1258 = vmatpush.bf16.msra.mxu0 %v944
    %1259 = vmatpush.bf16.msra.mxu0 %v943
    %1260 = vmatpush.bf16.msra.mxu0 %v942
    %1261 = vmatmul.bf16.gmra.mxu0 %v77
    %v1262 = vpop.f32.mrf.mxu0
    %v1263 = vadd.f32 %v1250, %v1262
    %v1264 = vpop.f32.mrf.mxu0
    %1265 = vdwg.mxu0
    %1266 = vmatpush.bf16.msra.mxu0 %v957
    %1267 = vmatpush.bf16.msra.mxu0 %v956
    %1268 = vmatpush.bf16.msra.mxu0 %v955
    %1269 = vmatpush.bf16.msra.mxu0 %v954
    %1270 = vmatpush.bf16.msra.mxu0 %v953
    %1271 = vmatpush.bf16.msra.mxu0 %v952
    %1272 = vmatpush.bf16.msra.mxu0 %v951
    %1273 = vmatpush.bf16.msra.mxu0 %v950
    %1274 = vmatmul.bf16.gmra.mxu0 %v78
    %v1275 = vpop.f32.mrf.mxu0
    %v1276 = vadd.f32 %v1263, %v1275
    %v1277 = vpop.f32.mrf.mxu0
    %1278 = vdwg.mxu0
    %1279 = vmatpush.bf16.msra.mxu0 %v965
    %1280 = vmatpush.bf16.msra.mxu0 %v964
    %1281 = vmatpush.bf16.msra.mxu0 %v963
    %1282 = vmatpush.bf16.msra.mxu0 %v962
    %1283 = vmatpush.bf16.msra.mxu0 %v961
    %1284 = vmatpush.bf16.msra.mxu0 %v960
    %1285 = vmatpush.bf16.msra.mxu0 %v959
    %1286 = vmatpush.bf16.msra.mxu0 %v958
    %1287 = vmatmul.bf16.gmra.mxu0 %v79
    %v1288 = vpop.f32.mrf.mxu0
    %v1289 = vadd.f32 %v1276, %v1288
    %v1290 = vpop.f32.mrf.mxu0
    %1291 = vdwg.mxu0
    %1292 = vmatpush.bf16.msra.mxu0 %v973
    %1293 = vmatpush.bf16.msra.mxu0 %v972
    %1294 = vmatpush.bf16.msra.mxu0 %v971
    %1295 = vmatpush.bf16.msra.mxu0 %v970
    %1296 = vmatpush.bf16.msra.mxu0 %v969
    %1297 = vmatpush.bf16.msra.mxu0 %v968
    %1298 = vmatpush.bf16.msra.mxu0 %v967
    %1299 = vmatpush.bf16.msra.mxu0 %v966
    %1300 = vmatmul.bf16.gmra.mxu0 %v80
    %v1301 = vpop.f32.mrf.mxu0
    %v1302 = vadd.f32 %v1289, %v1301
    %v1303 = vpop.f32.mrf.mxu0
    %1304 = vdwg.mxu0
    %1305 = vmatpush.bf16.msra.mxu0 %v981
    %1306 = vmatpush.bf16.msra.mxu0 %v980
    %1307 = vmatpush.bf16.msra.mxu0 %v979
    %1308 = vmatpush.bf16.msra.mxu0 %v978
    %1309 = vmatpush.bf16.msra.mxu0 %v977
    %1310 = vmatpush.bf16.msra.mxu0 %v976
    %1311 = vmatpush.bf16.msra.mxu0 %v975
    %1312 = vmatpush.bf16.msra.mxu0 %v974
    %1313 = vmatmul.bf16.gmra.mxu0 %v81
    %v1314 = vpop.f32.mrf.mxu0
    %v1315 = vadd.f32 %v1302, %v1314
    %v1316 = vpop.f32.mrf.mxu0
    %1317 = vdwg.mxu0
    %vm1318 = vcmask 1041408
    %v1319 = vsel %vm1318, %v1315, 0.0
    %v1320 = vrot.slane %v1319, 4
    %v1321 = vadd.f32 %v1319, %v1320
    %v1322 = vrot.slane %v1321, 2
    %v1323 = vadd.f32 %v1321, %v1322
    %v1324 = vrot.slane %v1323, 1
    %v1325 = vadd.f32 %v1323, %v1324
    %v1326 = vrcp.pop 2.0
    %v1327 = vmul.f32 2.0, %v1326
    %v1328 = vsub.f32 1.0, %v1327
    %v1329 = vmul.f32 %v1326, %v1328
    %v1330 = vadd.f32 %v1326, %v1329
    %vm1331 = vweird.f32 %v1326
    %v1332 = vsel %vm1331, %v1326, %v1330
    %v1333 = vmul.f32 %v1325, %v1332
    %v1334 = vsub.f32 %v1315, %v1333
    %v1335 = vmul.f32 %v1334, %v1334
    %v1336 = vsel %vm1318, %v1335, 0.0
    %v1337 = vrot.slane %v1336, 4
    %v1338 = vadd.f32 %v1336, %v1337
    %v1339 = vrot.slane %v1338, 2
    %v1340 = vadd.f32 %v1338, %v1339
    %v1341 = vrot.slane %v1340, 1
    %v1342 = vadd.f32 %v1340, %v1341
    %v1343 = vmul.f32 %v1342, %v1332
    %v1344 = vld [vmem:[%s3] sm:$0x1]
    %v1346 = vperm.slane %v1344, 0
    %v1348 = vmul.f32 %v1346, %v1334
    %v1349 = vadd.f32 %v1343, 1e-05
    %v1350 = vrsqrt.pop %v1349
    %v1351 = vmul.f32 %v1350, %v1349
    %v1352 = vmul.f32 %v1351, %v1350
    %v1353 = vmul.f32 0.5, %v1352
    %v1354 = vsub.f32 1.5, %v1353
    %v1355 = vmul.f32 %v1350, %v1354
    %vm1356 = vweird.f32 %v1349
    %vm1357 = vweird.f32 %v1350
    %vm1358 = vmor %vm1356, %vm1357
    %v1359 = vsel %vm1358, %v1350, %v1355
    %v1360 = vmul.f32 %v1348, %v1359
    %v1361 = vld [vmem:[%s4] sm:$0x1]
    %v1363 = vperm.slane %v1361, 0
    %v1365 = vadd.f32 %v1360, %v1363
    %1366 = vst [vmem:[#allocation2] sm:$0x3] %v1365
    // Predicated region
    $region22: #{encoder_cnn_forward.3} parent=1 // pred_check
      _
    $region23: #{encoder_cnn_forward.3} parent=1 // pred_check_branch
      %1368 = sbr.rel (0) target = $region25
    $region24: #{encoder_cnn_forward.3} parent=1 // pred_region
      %1370 = vsyncadd [#allocation3], 0
      %s1372 = sshll.u32 [#allocation2], 4
      %s1373 = int_to_ptr.vmem [resolvable:$true] %s1372
      %s1374 = sshll.u32 %s5, 4
      %s1375 = int_to_ptr.hbm [resolvable:$true] %s1374
      %1377 = dma.vmem_to_hbm [thread:$0]  %s1373, 32, %s1375, [#allocation3]
    $region25: #{encoder_cnn_forward.3} parent=1 // pred_fallthru
      _
    // Predicated region
    $region26: #{encoder_cnn_forward.3} parent=1 // pred_check
      _
    $region27: #{encoder_cnn_forward.3} parent=1 // pred_check_branch
      %1379 = sbr.rel (0) target = $region29
    $region28: #{encoder_cnn_forward.3} parent=1 // pred_region
      %1381 = dma.done [#allocation3], 32
    $region29: #{encoder_cnn_forward.3} parent=1 // pred_fallthru
      _
    %1382 = vsyncpa [#allocation3], 1

// kernel: encoder_cnn_forward.2
$region0: #{encoder_cnn_forward.2}
  #allocation0 [shape = 'u32[]', space=smem, size = 0x4, offset = 0x4, fixed_abs, tag = 'smem constant byte address 0x4 - core index']
  #allocation1 [shape = 'u32[72,128]{1,0:T(1,128)}', space=vmem, size = 0x9000, scoped, tag = 'internal scratch']
  %s0 = inlined_call_operand.vmem [shape: bf16[2,256,27], index: 0, kind: input, shape index: {}]
  %s1 = inlined_call_operand.vmem [shape: bf16[27,2048], index: 1, kind: input, shape index: {}]
  %s2 = inlined_call_operand.vmem [shape: f32[1,2048], index: 2, kind: input, shape index: {}]
  %s3 = inlined_call_operand.vmem [shape: f32[2,1,2048], index: 3, kind: output, shape index: {}]
  %s4 = sld [smem:[#allocation0]]
  $region53: #{encoder_cnn_forward.2} parent=0
    _
  %s6 = ssub.s32 1, %s4
  %s7 = scalar_select 0, %s6, %s4
  loop: start=0, step=1, limit=4
  $region2: #{encoder_cnn_forward.2} parent=0 // loop_pre_header
    _
  $region3: #{encoder_cnn_forward.2} parent=0 // loop_header
    %s9 = sphi 0, %s13
    %p10 = scmp.ge.s32.totalorder %s9, 4
    %s16 = sphi 0, %s28
    %s17 = sphi 0, %s24
    %s18 = sphi 0, %s16
    %s19 = sphi 0, %s17
    %s20 = sphi 0, %s18
    %s21 = sphi 0, %s19
    %s33 = sphi 0, %s35
    %s36 = sphi 0, %s33
    %s37 = sphi 0, %s36
    %s53 = sphi 0, %s37
    %s57 = sphi 0, %s57
    %s59 = sphi 0, %s57
    %s60 = sphi 0, %s59
    %s74 = sphi 0, %s60
    %s78 = sphi 0, %s78
    %s80 = sphi 0, %s78
    %s81 = sphi 0, %s80
    %s95 = sphi 0, %s81
    %s101 = sphi 0, %s103
    %s104 = sphi 0, %s101
    %s105 = sphi 0, %s104
    %s121 = sphi 0, %s105
  $region4: #{encoder_cnn_forward.2} parent=0 // loop_header_branch
    %12 = sbr.rel (%p10) target = $region8
  $region5: #{encoder_cnn_forward.2} parent=0 // loop_body
    %s14 = ssub.s32 %s9, 1
    %s15 = ssub.s32 %s9, 2
    %s22 = sadd.s32 1, %s17
    %p23 = scmp.ge.s32.totalorder %s22, 1
    %s24 = scalar_select %p23, 0, %s22
    %s25 = sadd.s32 1, %s16
    %s26 = scalar_select %p23, %s25, %s16
    %p27 = scmp.ge.s32.totalorder %s26, 2
    %s28 = scalar_select %p27, 0, %s26
    %s29 = ssub.s32 %s16, %s28
    %s30 = ssub.s32 %s17, %s24
    %s31 = sor.u32 %s29, %s30
    %p32 = scmp.eq.s32.totalorder %s31, 0
    %s34 = sadd.s32 %s33, 1
    %s35 = scalar_select %p32, %s33, %s34
    %p38 = pneg %p32
    %p39 = scmp.eq.s32.totalorder %s9, 1
    %p40 = por %p38, %p39
    %p41 = scmp.ne.s32.totalorder %s33, %s36
    %p42 = scmp.eq.s32.totalorder %s9, 0
    %p43 = por %p41, %p42
    %p44 = scmp.ne.s32.totalorder %s33, %s36
    %p45 = scmp.eq.s32.totalorder %s14, 1
    %p46 = por %p44, %p45
    %p47 = scmp.ne.s32.totalorder %s36, %s37
    %p48 = scmp.eq.s32.totalorder %s14, 0
    %p49 = por %p47, %p48
    %p50 = scmp.ne.s32.totalorder %s36, %s37
    %p51 = scmp.eq.s32.totalorder %s15, 1
    %p52 = por %p50, %p51
    %p54 = scmp.ne.s32.totalorder %s37, %s53
    %p55 = scmp.eq.s32.totalorder %s15, 0
    %p56 = por %p54, %p55
    %s58 = sadd.s32 %s57, 1
    %p61 = scmp.eq.s32.totalorder %s9, 1
    %p62 = scmp.ne.s32.totalorder %s57, %s59
    %p63 = scmp.eq.s32.totalorder %s9, 0
    %p64 = por %p62, %p63
    %p65 = scmp.ne.s32.totalorder %s57, %s59
    %p66 = scmp.eq.s32.totalorder %s14, 1
    %p67 = por %p65, %p66
    %p68 = scmp.ne.s32.totalorder %s59, %s60
    %p69 = scmp.eq.s32.totalorder %s14, 0
    %p70 = por %p68, %p69
    %p71 = scmp.ne.s32.totalorder %s59, %s60
    %p72 = scmp.eq.s32.totalorder %s15, 1
    %p73 = por %p71, %p72
    %p75 = scmp.ne.s32.totalorder %s60, %s74
    %p76 = scmp.eq.s32.totalorder %s15, 0
    %p77 = por %p75, %p76
    %s79 = sadd.s32 %s78, 1
    %p82 = scmp.eq.s32.totalorder %s9, 1
    %p83 = scmp.ne.s32.totalorder %s78, %s80
    %p84 = scmp.eq.s32.totalorder %s9, 0
    %p85 = por %p83, %p84
    %p86 = scmp.ne.s32.totalorder %s78, %s80
    %p87 = scmp.eq.s32.totalorder %s14, 1
    %p88 = por %p86, %p87
    %p89 = scmp.ne.s32.totalorder %s80, %s81
    %p90 = scmp.eq.s32.totalorder %s14, 0
    %p91 = por %p89, %p90
    %p92 = scmp.ne.s32.totalorder %s80, %s81
    %p93 = scmp.eq.s32.totalorder %s15, 1
    %p94 = por %p92, %p93
    %p96 = scmp.ne.s32.totalorder %s81, %s95
    %p97 = scmp.eq.s32.totalorder %s15, 0
    %p98 = por %p96, %p97
    %s99 = ssub.s32 %s16, %s28
    %p100 = scmp.eq.s32.totalorder %s99, 0
    %s102 = sadd.s32 %s101, 1
    %s103 = scalar_select %p100, %s101, %s102
    %p106 = pneg %p100
    %p107 = scmp.eq.s32.totalorder %s9, 1
    %p108 = por %p106, %p107
    %p109 = scmp.ne.s32.totalorder %s101, %s104
    %p110 = scmp.eq.s32.totalorder %s9, 0
    %p111 = por %p109, %p110
    %p112 = scmp.ne.s32.totalorder %s101, %s104
    %p113 = scmp.eq.s32.totalorder %s14, 1
    %p114 = por %p112, %p113
    %p115 = scmp.ne.s32.totalorder %s104, %s105
    %p116 = scmp.eq.s32.totalorder %s14, 0
    %p117 = por %p115, %p116
    %p118 = scmp.ne.s32.totalorder %s104, %s105
    %p119 = scmp.eq.s32.totalorder %s15, 1
    %p120 = por %p118, %p119
    %p122 = scmp.ne.s32.totalorder %s105, %s121
    %p123 = scmp.eq.s32.totalorder %s15, 0
    %p124 = por %p122, %p123
    %p125 = scmp.le.s32.totalorder 1, %s9
    %p126 = scmp.lt.s32.totalorder %s9, 3
    %p127 = pnand %p125, %p126
    %p128 = pneg %p127
    // Predicated region
    $region9: #{encoder_cnn_forward.2} parent=5 // pred_check
      _
    $region10: #{encoder_cnn_forward.2} parent=5 // pred_check_branch
      %130 = sbr.rel (%p127) target = $region12
    $region11: #{encoder_cnn_forward.2} parent=5 // pred_region
      %s131 = ssub.s32 %s9, 1
      // Predicated region
      $region13: #{encoder_cnn_forward.2} parent=11 // pred_check
        %p132 = pneg %p70
      $region14: #{encoder_cnn_forward.2} parent=11 // pred_check_branch
        %134 = sbr.rel (%p132) target = $region16
      $region15: #{encoder_cnn_forward.2} parent=11 // pred_region
        _
      $region16: #{encoder_cnn_forward.2} parent=11 // pred_fallthru
        _
      // Predicated region
      $region17: #{encoder_cnn_forward.2} parent=11 // pred_check
        %p135 = pneg %p91
      $region18: #{encoder_cnn_forward.2} parent=11 // pred_check_branch
        %137 = sbr.rel (%p135) target = $region20
      $region19: #{encoder_cnn_forward.2} parent=11 // pred_region
        _
      $region20: #{encoder_cnn_forward.2} parent=11 // pred_fallthru
        _
    $region12: #{encoder_cnn_forward.2} parent=5 // pred_fallthru
      _
    %p138 = scmp.lt.s32.totalorder %s9, 2
    // Predicated region
    $region21: #{encoder_cnn_forward.2} parent=5 // pred_check
      %p139 = pneg %p138
    $region22: #{encoder_cnn_forward.2} parent=5 // pred_check_branch
      %141 = sbr.rel (%p139) target = $region24
    $region23: #{encoder_cnn_forward.2} parent=5 // pred_region
      // Predicated region
      $region25: #{encoder_cnn_forward.2} parent=23 // pred_check
        %p142 = pneg %p43
      $region26: #{encoder_cnn_forward.2} parent=23 // pred_check_branch
        %144 = sbr.rel (%p142) target = $region28
      $region27: #{encoder_cnn_forward.2} parent=23 // pred_region
        %s145 = smul.u32 32, %s17
        %p146 = scmp.lt.s32.totalorder %s16, 1
        %s147 = scalar_select %p146, %s16, 1
        %p148 = scmp.lt.s32.totalorder %s145, 31
        %s149 = scalar_select %p148, %s145, 31
        %s150 = smul.addr %s147, 32
        %s151 = sadd.s32 %s149, %s150
        %s152 = smul.addr %s151, 4
        %s153 = scalar_lea.vmem %s0, %s152
        %s154 = smul.u32 32, %s17
      $region28: #{encoder_cnn_forward.2} parent=23 // pred_fallthru
        _
    $region24: #{encoder_cnn_forward.2} parent=5 // pred_fallthru
      _
    %p155 = scmp.le.s32.totalorder 1, %s9
    %p156 = scmp.lt.s32.totalorder %s9, 3
    %p157 = pnand %p155, %p156
    %p158 = pneg %p157
    // Predicated region
    $region29: #{encoder_cnn_forward.2} parent=5 // pred_check
      _
    $region30: #{encoder_cnn_forward.2} parent=5 // pred_check_branch
      %160 = sbr.rel (%p157) target = $region32
    $region31: #{encoder_cnn_forward.2} parent=5 // pred_region
      %s161 = ssub.s32 %s9, 1
      %s162 = smul.u32 32, %s19
      %p163 = scmp.lt.s32.totalorder %s18, 1
      %s164 = scalar_select %p163, %s18, 1
      %p165 = scmp.lt.s32.totalorder %s162, 31
      %s166 = scalar_select %p165, %s162, 31
      %s167 = smul.addr %s164, 32
      %s168 = sadd.s32 %s166, %s167
      %s169 = smul.addr %s168, 4
      %s170 = scalar_lea.vmem %s0, %s169
      %p171 = pneg %p49
      %p172 = pneg %p46
      %p173 = pneg %p70
      %p174 = pneg %p67
      %p175 = pneg %p91
      %p176 = pneg %p88
      %p177 = pneg %p117
      %p178 = pneg %p114
      %p179 = scmp.lt.s32.totalorder %s18, 1
      %s180 = scalar_select %p179, %s18, 1
      %s181 = smul.addr %s180, 16
      %s182 = scalar_lea.vmem %s3, %s181
      %s183 = smul.u32 32, %s19
      %p184 = scmp.lt.s32.totalorder %s18, 1
      %s185 = scalar_select %p184, %s18, 1
      %p186 = scmp.lt.s32.totalorder %s183, 31
      %s187 = scalar_select %p186, %s183, 31
      %s188 = smul.addr %s185, 32
      %s189 = sadd.s32 %s187, %s188
      %s190 = smul.addr %s189, 4
      %s191 = scalar_lea.vmem %s0, %s190
      %s192 = smul.u32 32, %s19
      %p193 = scmp.lt.s32.totalorder %s18, 1
      %s194 = scalar_select %p193, %s18, 1
      %s195 = smul.addr %s194, 16
      %s196 = scalar_lea.vmem %s3, %s195
      %p198 = scmp.eq.s32.totalorder %s19, 0
      // Predicated region
      $region33: #{encoder_cnn_forward.2} parent=31 // pred_check
        %p199 = pneg %p198
      $region34: #{encoder_cnn_forward.2} parent=31 // pred_check_branch
        %201 = sbr.rel (%p199) target = $region36
      $region35: #{encoder_cnn_forward.2} parent=31 // pred_region
        %202 = vst [vmem:[%s196] sm:$0xff] 0.0
        %203 = vst [vmem:[%s196 + $0x8] sm:$0xff] 0.0
      $region36: #{encoder_cnn_forward.2} parent=31 // pred_fallthru
        _
      %v204 = vld [vmem:[%s191] sm:$0xf]
      %v205 = vld [vmem:[%s191 + $0x4] sm:$0xf]
      %v206 = vld [vmem:[%s191 + $0x8] sm:$0xf]
      %v207 = vld [vmem:[%s191 + $0xc] sm:$0xf]
      %v208 = vld [vmem:[%s191 + $0x10] sm:$0xf]
      %v209 = vld [vmem:[%s191 + $0x14] sm:$0xf]
      %v210 = vld [vmem:[%s191 + $0x18] sm:$0xf]
      %v211 = vld [vmem:[%s191 + $0x1c] sm:$0xf]
      %v212 = vld [vmem:[%s191 + $0x20] sm:$0xf]
      %v213 = vld [vmem:[%s191 + $0x24] sm:$0xf]
      %v214 = vld [vmem:[%s191 + $0x28] sm:$0xf]
      %v215 = vld [vmem:[%s191 + $0x2c] sm:$0xf]
      %v216 = vld [vmem:[%s191 + $0x30] sm:$0xf]
      %v217 = vld [vmem:[%s191 + $0x34] sm:$0xf]
      %v218 = vld [vmem:[%s191 + $0x38] sm:$0xf]
      %v219 = vld [vmem:[%s191 + $0x3c] sm:$0xf]
      %v220 = vld [vmem:[%s191 + $0x40] sm:$0xf]
      %v221 = vld [vmem:[%s191 + $0x44] sm:$0xf]
      %v222 = vld [vmem:[%s191 + $0x48] sm:$0xf]
      %v223 = vld [vmem:[%s191 + $0x4c] sm:$0xf]
      %v224 = vld [vmem:[%s191 + $0x50] sm:$0xf]
      %v225 = vld [vmem:[%s191 + $0x54] sm:$0xf]
      %v226 = vld [vmem:[%s191 + $0x58] sm:$0xf]
      %v227 = vld [vmem:[%s191 + $0x5c] sm:$0xf]
      %v228 = vld [vmem:[%s191 + $0x60] sm:$0xf]
      %v229 = vld [vmem:[%s191 + $0x64] sm:$0xf]
      %v230 = vld [vmem:[%s191 + $0x68] sm:$0xf]
      %v231 = vld [vmem:[%s191 + $0x6c] sm:$0xf]
      %v232 = vld [vmem:[%s191 + $0x70] sm:$0xf]
      %v233 = vld [vmem:[%s191 + $0x74] sm:$0xf]
      %v234 = vld [vmem:[%s191 + $0x78] sm:$0xf]
      %v235 = vld [vmem:[%s191 + $0x7c] sm:$0xf]
      %v236 = vld [vmem:[%s1] sm:$0xff]
      %v237 = vld [vmem:[%s1 + $0x8] sm:$0xff]
      %v238 = vld [vmem:[%s1 + $0x10] sm:$0xff]
      %v239 = vld [vmem:[%s1 + $0x18] sm:$0xff]
      %v240 = vld [vmem:[%s1 + $0x20] sm:$0xff]
      %v241 = vld [vmem:[%s1 + $0x28] sm:$0xff]
      %v242 = vld [vmem:[%s1 + $0x30] sm:$0xff]
      %v243 = vld [vmem:[%s1 + $0x38] sm:$0xff]
      %v244 = vld [vmem:[%s1 + $0x40] sm:$0xff]
      %v245 = vld [vmem:[%s1 + $0x48] sm:$0xff]
      %v246 = vld [vmem:[%s1 + $0x50] sm:$0xff]
      %v247 = vld [vmem:[%s1 + $0x58] sm:$0xff]
      %v248 = vld [vmem:[%s1 + $0x60] sm:$0xff]
      %v249 = vld [vmem:[%s1 + $0x68] sm:$0xff]
      %v250 = vld [vmem:[%s1 + $0x70] sm:$0xff]
      %v251 = vld [vmem:[%s1 + $0x78] sm:$0xff]
      %v252 = vld [vmem:[%s1 + $0x80] sm:$0xff]
      %v253 = vld [vmem:[%s1 + $0x88] sm:$0xff]
      %v254 = vld [vmem:[%s1 + $0x90] sm:$0xff]
      %v255 = vld [vmem:[%s1 + $0x98] sm:$0xff]
      %v256 = vld [vmem:[%s1 + $0xa0] sm:$0xff]
      %v257 = vld [vmem:[%s1 + $0xa8] sm:$0xff]
      %v258 = vld [vmem:[%s1 + $0xb0] sm:$0xff]
      %v259 = vld [vmem:[%s1 + $0xb8] sm:$0xff]
      %v260 = vld [vmem:[%s1 + $0xc0] sm:$0x33]
      %v261 = vld [vmem:[%s1 + $0xc8] sm:$0x33]
      %v262 = vld [vmem:[%s1 + $0xd0] sm:$0x33]
      %v263 = vld [vmem:[%s1 + $0xd8] sm:$0x33]
      %v264 = vld [vmem:[%s1 + $0xe0] sm:$0x33]
      %v265 = vld [vmem:[%s1 + $0xe8] sm:$0x33]
      %v266 = vld [vmem:[%s1 + $0xf0] sm:$0x33]
      %v267 = vld [vmem:[%s1 + $0xf8] sm:$0x33]
      %v268 = vld [vmem:[%s2] sm:$0xff]
      %v269 = vld [vmem:[%s2 + $0x8] sm:$0xff]
      %v272 = vperm.slane %v268, 0
      %v273 = vperm.slane %v268, 1
      %v274 = vperm.slane %v268, 2
      %v275 = vperm.slane %v268, 3
      %v276 = vperm.slane %v268, 4
      %v277 = vperm.slane %v268, 5
      %v278 = vperm.slane %v268, 6
      %v279 = vperm.slane %v268, 7
      %v280 = vperm.slane %v269, 0
      %v281 = vperm.slane %v269, 1
      %v282 = vperm.slane %v269, 2
      %v283 = vperm.slane %v269, 3
      %v284 = vperm.slane %v269, 4
      %v285 = vperm.slane %v269, 5
      %v286 = vperm.slane %v269, 6
      %v287 = vperm.slane %v269, 7
      %v336 = vunpack.c.l.b16 %v204
      %v337 = vunpack.c.l.b16 %v205
      %v338 = vunpack.c.l.b16 %v206
      %v339 = vunpack.c.l.b16 %v207
      %v340 = vunpack.c.l.b16 %v208
      %v341 = vunpack.c.l.b16 %v209
      %v342 = vunpack.c.l.b16 %v210
      %v343 = vunpack.c.l.b16 %v211
      %v344 = vunpack.c.l.b16 %v212
      %v345 = vunpack.c.l.b16 %v213
      %v346 = vunpack.c.l.b16 %v214
      %v347 = vunpack.c.l.b16 %v215
      %v348 = vunpack.c.l.b16 %v216
      %v349 = vunpack.c.l.b16 %v217
      %v350 = vunpack.c.l.b16 %v218
      %v351 = vunpack.c.l.b16 %v219
      %v352 = vunpack.c.l.b16 %v220
      %v353 = vunpack.c.l.b16 %v221
      %v354 = vunpack.c.l.b16 %v222
      %v355 = vunpack.c.l.b16 %v223
      %v356 = vunpack.c.l.b16 %v224
      %v357 = vunpack.c.l.b16 %v225
      %v358 = vunpack.c.l.b16 %v226
      %v359 = vunpack.c.l.b16 %v227
      %v360 = vunpack.c.l.b16 %v228
      %v361 = vunpack.c.l.b16 %v229
      %v362 = vunpack.c.l.b16 %v230
      %v363 = vunpack.c.l.b16 %v231
      %v364 = vunpack.c.l.b16 %v232
      %v365 = vunpack.c.l.b16 %v233
      %v366 = vunpack.c.l.b16 %v234
      %v367 = vunpack.c.l.b16 %v235
      %v368 = vpack.c.b16 %v337, %v336
      %v369 = vpack.c.b16 %v339, %v338
      %v370 = vpack.c.b16 %v341, %v340
      %v371 = vpack.c.b16 %v343, %v342
      %v372 = vpack.c.b16 %v345, %v344
      %v373 = vpack.c.b16 %v347, %v346
      %v374 = vpack.c.b16 %v349, %v348
      %v375 = vpack.c.b16 %v351, %v350
      %v376 = vpack.c.b16 %v353, %v352
      %v377 = vpack.c.b16 %v355, %v354
      %v378 = vpack.c.b16 %v357, %v356
      %v379 = vpack.c.b16 %v359, %v358
      %v380 = vpack.c.b16 %v361, %v360
      %v381 = vpack.c.b16 %v363, %v362
      %v382 = vpack.c.b16 %v365, %v364
      %v383 = vpack.c.b16 %v367, %v366
      %v416 = vunpack.c.l.b16 %v236
      %v417 = vunpack.c.h.b16 %v236
      %v418 = vunpack.c.l.b16 %v237
      %v419 = vunpack.c.h.b16 %v237
      %v420 = vunpack.c.l.b16 %v238
      %v421 = vunpack.c.h.b16 %v238
      %v422 = vunpack.c.l.b16 %v239
      %v423 = vunpack.c.h.b16 %v239
      %v424 = vunpack.c.l.b16 %v240
      %v425 = vunpack.c.h.b16 %v240
      %v426 = vunpack.c.l.b16 %v241
      %v427 = vunpack.c.h.b16 %v241
      %v428 = vunpack.c.l.b16 %v242
      %v429 = vunpack.c.h.b16 %v242
      %v430 = vunpack.c.l.b16 %v243
      %v431 = vunpack.c.h.b16 %v243
      %v432 = vunpack.c.l.b16 %v244
      %v433 = vunpack.c.h.b16 %v244
      %v434 = vunpack.c.l.b16 %v245
      %v435 = vunpack.c.h.b16 %v245
      %v436 = vunpack.c.l.b16 %v246
      %v437 = vunpack.c.h.b16 %v246
      %v438 = vunpack.c.l.b16 %v247
      %v439 = vunpack.c.h.b16 %v247
      %v440 = vunpack.c.l.b16 %v248
      %v441 = vunpack.c.h.b16 %v248
      %v442 = vunpack.c.l.b16 %v249
      %v443 = vunpack.c.h.b16 %v249
      %v444 = vunpack.c.l.b16 %v250
      %v445 = vunpack.c.h.b16 %v250
      %v446 = vunpack.c.l.b16 %v251
      %v447 = vunpack.c.h.b16 %v251
      %v448 = vunpack.c.l.b16 %v252
      %v449 = vunpack.c.h.b16 %v252
      %v450 = vunpack.c.l.b16 %v253
      %v451 = vunpack.c.h.b16 %v253
      %v452 = vunpack.c.l.b16 %v254
      %v453 = vunpack.c.h.b16 %v254
      %v454 = vunpack.c.l.b16 %v255
      %v455 = vunpack.c.h.b16 %v255
      %v456 = vunpack.c.l.b16 %v256
      %v457 = vunpack.c.h.b16 %v256
      %v458 = vunpack.c.l.b16 %v257
      %v459 = vunpack.c.h.b16 %v257
      %v460 = vunpack.c.l.b16 %v258
      %v461 = vunpack.c.h.b16 %v258
      %v462 = vunpack.c.l.b16 %v259
      %v463 = vunpack.c.h.b16 %v259
      %v464 = vunpack.c.l.b16 %v260
      %v465 = vunpack.c.h.b16 %v260
      %v466 = vunpack.c.l.b16 %v261
      %v467 = vunpack.c.h.b16 %v261
      %v468 = vunpack.c.l.b16 %v262
      %v469 = vunpack.c.h.b16 %v262
      %v470 = vunpack.c.l.b16 %v263
      %v471 = vunpack.c.h.b16 %v263
      %v472 = vunpack.c.l.b16 %v264
      %v473 = vunpack.c.h.b16 %v264
      %v474 = vunpack.c.l.b16 %v265
      %v475 = vunpack.c.h.b16 %v265
      %v476 = vunpack.c.l.b16 %v266
      %v477 = vunpack.c.h.b16 %v266
      %v478 = vunpack.c.l.b16 %v267
      %v479 = vunpack.c.h.b16 %v267
      %v480 = vpack.c.b16 %v432, %v416
      %v481 = vpack.c.b16 %v433, %v417
      %v482 = vpack.c.b16 %v434, %v418
      %v483 = vpack.c.b16 %v435, %v419
      %v484 = vpack.c.b16 %v436, %v420
      %v485 = vpack.c.b16 %v437, %v421
      %v486 = vpack.c.b16 %v438, %v422
      %v487 = vpack.c.b16 %v439, %v423
      %v488 = vpack.c.b16 %v440, %v424
      %v489 = vpack.c.b16 %v441, %v425
      %v490 = vpack.c.b16 %v442, %v426
      %v491 = vpack.c.b16 %v443, %v427
      %v492 = vpack.c.b16 %v444, %v428
      %v493 = vpack.c.b16 %v445, %v429
      %v494 = vpack.c.b16 %v446, %v430
      %v495 = vpack.c.b16 %v447, %v431
      %v496 = vpack.c.b16 %v464, %v448
      %v497 = vpack.c.b16 %v465, %v449
      %v498 = vpack.c.b16 %v466, %v450
      %v499 = vpack.c.b16 %v467, %v451
      %v500 = vpack.c.b16 %v468, %v452
      %v501 = vpack.c.b16 %v469, %v453
      %v502 = vpack.c.b16 %v470, %v454
      %v503 = vpack.c.b16 %v471, %v455
      %v504 = vpack.c.b16 %v472, %v456
      %v505 = vpack.c.b16 %v473, %v457
      %v506 = vpack.c.b16 %v474, %v458
      %v507 = vpack.c.b16 %v475, %v459
      %v508 = vpack.c.b16 %v476, %v460
      %v509 = vpack.c.b16 %v477, %v461
      %v510 = vpack.c.b16 %v478, %v462
      %v511 = vpack.c.b16 %v479, %v463
      %vm528 = vcmask 220160
      %v530 = vsel %vm528, %v368, 0
      %v533 = vsel %vm528, %v369, 0
      %v536 = vsel %vm528, %v370, 0
      %v539 = vsel %vm528, %v371, 0
      %v542 = vsel %vm528, %v372, 0
      %v545 = vsel %vm528, %v373, 0
      %v548 = vsel %vm528, %v374, 0
      %v551 = vsel %vm528, %v375, 0
      %v554 = vsel %vm528, %v376, 0
      %v557 = vsel %vm528, %v377, 0
      %v560 = vsel %vm528, %v378, 0
      %v563 = vsel %vm528, %v379, 0
      %v566 = vsel %vm528, %v380, 0
      %v569 = vsel %vm528, %v381, 0
      %v572 = vsel %vm528, %v382, 0
      %v575 = vsel %vm528, %v383, 0
      %vm577 = vcmask 1044480
      %vm578 = vcmask 1045504
      %v579 = vsel %vm577, 4294967295, 65535
      %v580 = vsel %vm578, %v579, 0
      %v582 = vand.u32 %v496, %v580
      %v585 = vand.u32 %v497, %v580
      %v588 = vand.u32 %v498, %v580
      %v591 = vand.u32 %v499, %v580
      %v594 = vand.u32 %v500, %v580
      %v597 = vand.u32 %v501, %v580
      %v600 = vand.u32 %v502, %v580
      %v603 = vand.u32 %v503, %v580
      %v606 = vand.u32 %v504, %v580
      %v609 = vand.u32 %v505, %v580
      %v612 = vand.u32 %v506, %v580
      %v615 = vand.u32 %v507, %v580
      %v618 = vand.u32 %v508, %v580
      %v621 = vand.u32 %v509, %v580
      %v624 = vand.u32 %v510, %v580
      %v627 = vand.u32 %v511, %v580
      %629 = vmatpush.bf16.msra.mxu0 0
      %630 = vmatpush.bf16.msra.mxu0 0
      %631 = vmatpush.bf16.msra.mxu0 0
      %632 = vmatpush.bf16.msra.mxu0 0
      %633 = vmatpush.bf16.msra.mxu0 0
      %634 = vmatpush.bf16.msra.mxu0 0
      %635 = vmatpush.bf16.msra.mxu0 %v582
      %636 = vmatpush.bf16.msra.mxu0 %v480
      %637 = vmatmul.bf16.gmra.mxu0 %v530
      %v638 = vpop.f32.mrf.mxu0
      %v639 = vadd.f32 %v272, %v638
      %v640 = vpop.f32.mrf.mxu0
      %v641 = vadd.f32 %v272, %v640
      %642 = vmatmul.bf16.gmra.mxu0 %v533
      %v643 = vpop.f32.mrf.mxu0
      %v644 = vadd.f32 %v272, %v643
      %v645 = vpop.f32.mrf.mxu0
      %v646 = vadd.f32 %v272, %v645
      %647 = vmatmul.bf16.gmra.mxu0 %v536
      %v648 = vpop.f32.mrf.mxu0
      %v649 = vadd.f32 %v272, %v648
      %v650 = vpop.f32.mrf.mxu0
      %v651 = vadd.f32 %v272, %v650
      %652 = vmatmul.bf16.gmra.mxu0 %v539
      %v653 = vpop.f32.mrf.mxu0
      %v654 = vadd.f32 %v272, %v653
      %v655 = vpop.f32.mrf.mxu0
      %v656 = vadd.f32 %v272, %v655
      %657 = vmatmul.bf16.gmra.mxu0 %v542
      %v658 = vpop.f32.mrf.mxu0
      %v659 = vadd.f32 %v272, %v658
      %v660 = vpop.f32.mrf.mxu0
      %v661 = vadd.f32 %v272, %v660
      %662 = vmatmul.bf16.gmra.mxu0 %v545
      %v663 = vpop.f32.mrf.mxu0
      %v664 = vadd.f32 %v272, %v663
      %v665 = vpop.f32.mrf.mxu0
      %v666 = vadd.f32 %v272, %v665
      %667 = vmatmul.bf16.gmra.mxu0 %v548
      %v668 = vpop.f32.mrf.mxu0
      %v669 = vadd.f32 %v272, %v668
      %v670 = vpop.f32.mrf.mxu0
      %v671 = vadd.f32 %v272, %v670
      %672 = vmatmul.bf16.gmra.mxu0 %v551
      %v673 = vpop.f32.mrf.mxu0
      %v674 = vadd.f32 %v272, %v673
      %v675 = vpop.f32.mrf.mxu0
      %v676 = vadd.f32 %v272, %v675
      %677 = vmatmul.bf16.gmra.mxu0 %v554
      %v678 = vpop.f32.mrf.mxu0
      %v679 = vadd.f32 %v272, %v678
      %v680 = vpop.f32.mrf.mxu0
      %v681 = vadd.f32 %v272, %v680
      %682 = vmatmul.bf16.gmra.mxu0 %v557
      %v683 = vpop.f32.mrf.mxu0
      %v684 = vadd.f32 %v272, %v683
      %v685 = vpop.f32.mrf.mxu0
      %v686 = vadd.f32 %v272, %v685
      %687 = vmatmul.bf16.gmra.mxu0 %v560
      %v688 = vpop.f32.mrf.mxu0
      %v689 = vadd.f32 %v272, %v688
      %v690 = vpop.f32.mrf.mxu0
      %v691 = vadd.f32 %v272, %v690
      %692 = vmatmul.bf16.gmra.mxu0 %v563
      %v693 = vpop.f32.mrf.mxu0
      %v694 = vadd.f32 %v272, %v693
      %v695 = vpop.f32.mrf.mxu0
      %v696 = vadd.f32 %v272, %v695
      %697 = vmatmul.bf16.gmra.mxu0 %v566
      %v698 = vpop.f32.mrf.mxu0
      %v699 = vadd.f32 %v272, %v698
      %v700 = vpop.f32.mrf.mxu0
      %v701 = vadd.f32 %v272, %v700
      %702 = vmatmul.bf16.gmra.mxu0 %v569
      %v703 = vpop.f32.mrf.mxu0
      %v704 = vadd.f32 %v272, %v703
      %v705 = vpop.f32.mrf.mxu0
      %v706 = vadd.f32 %v272, %v705
      %707 = vmatmul.bf16.gmra.mxu0 %v572
      %v708 = vpop.f32.mrf.mxu0
      %v709 = vadd.f32 %v272, %v708
      %v710 = vpop.f32.mrf.mxu0
      %v711 = vadd.f32 %v272, %v710
      %712 = vmatmul.bf16.gmra.mxu0 %v575
      %v713 = vpop.f32.mrf.mxu0
      %v714 = vadd.f32 %v272, %v713
      %v715 = vpop.f32.mrf.mxu0
      %v716 = vadd.f32 %v272, %v715
      %717 = vdwg.mxu0
      %718 = vmatpush.bf16.msra.mxu0 0
      %719 = vmatpush.bf16.msra.mxu0 0
      %720 = vmatpush.bf16.msra.mxu0 0
      %721 = vmatpush.bf16.msra.mxu0 0
      %722 = vmatpush.bf16.msra.mxu0 0
      %723 = vmatpush.bf16.msra.mxu0 0
      %724 = vmatpush.bf16.msra.mxu0 %v585
      %725 = vmatpush.bf16.msra.mxu0 %v481
      %726 = vmatmul.bf16.gmra.mxu0 %v530
      %v727 = vpop.f32.mrf.mxu0
      %v728 = vadd.f32 %v273, %v727
      %v729 = vpop.f32.mrf.mxu0
      %v730 = vadd.f32 %v273, %v729
      %731 = vmatmul.bf16.gmra.mxu0 %v533
      %v732 = vpop.f32.mrf.mxu0
      %v733 = vadd.f32 %v273, %v732
      %v734 = vpop.f32.mrf.mxu0
      %v735 = vadd.f32 %v273, %v734
      %736 = vmatmul.bf16.gmra.mxu0 %v536
      %v737 = vpop.f32.mrf.mxu0
      %v738 = vadd.f32 %v273, %v737
      %v739 = vpop.f32.mrf.mxu0
      %v740 = vadd.f32 %v273, %v739
      %741 = vmatmul.bf16.gmra.mxu0 %v539
      %v742 = vpop.f32.mrf.mxu0
      %v743 = vadd.f32 %v273, %v742
      %v744 = vpop.f32.mrf.mxu0
      %v745 = vadd.f32 %v273, %v744
      %746 = vmatmul.bf16.gmra.mxu0 %v542
      %v747 = vpop.f32.mrf.mxu0
      %v748 = vadd.f32 %v273, %v747
      %v749 = vpop.f32.mrf.mxu0
      %v750 = vadd.f32 %v273, %v749
      %751 = vmatmul.bf16.gmra.mxu0 %v545
      %v752 = vpop.f32.mrf.mxu0
      %v753 = vadd.f32 %v273, %v752
      %v754 = vpop.f32.mrf.mxu0
      %v755 = vadd.f32 %v273, %v754
      %756 = vmatmul.bf16.gmra.mxu0 %v548
      %v757 = vpop.f32.mrf.mxu0
      %v758 = vadd.f32 %v273, %v757
      %v759 = vpop.f32.mrf.mxu0
      %v760 = vadd.f32 %v273, %v759
      %761 = vmatmul.bf16.gmra.mxu0 %v551
      %v762 = vpop.f32.mrf.mxu0
      %v763 = vadd.f32 %v273, %v762
      %v764 = vpop.f32.mrf.mxu0
      %v765 = vadd.f32 %v273, %v764
      %766 = vmatmul.bf16.gmra.mxu0 %v554
      %v767 = vpop.f32.mrf.mxu0
      %v768 = vadd.f32 %v273, %v767
      %v769 = vpop.f32.mrf.mxu0
      %v770 = vadd.f32 %v273, %v769
      %771 = vmatmul.bf16.gmra.mxu0 %v557
      %v772 = vpop.f32.mrf.mxu0
      %v773 = vadd.f32 %v273, %v772
      %v774 = vpop.f32.mrf.mxu0
      %v775 = vadd.f32 %v273, %v774
      %776 = vmatmul.bf16.gmra.mxu0 %v560
      %v777 = vpop.f32.mrf.mxu0
      %v778 = vadd.f32 %v273, %v777
      %v779 = vpop.f32.mrf.mxu0
      %v780 = vadd.f32 %v273, %v779
      %781 = vmatmul.bf16.gmra.mxu0 %v563
      %v782 = vpop.f32.mrf.mxu0
      %v783 = vadd.f32 %v273, %v782
      %v784 = vpop.f32.mrf.mxu0
      %v785 = vadd.f32 %v273, %v784
      %786 = vmatmul.bf16.gmra.mxu0 %v566
      %v787 = vpop.f32.mrf.mxu0
      %v788 = vadd.f32 %v273, %v787
      %v789 = vpop.f32.mrf.mxu0
      %v790 = vadd.f32 %v273, %v789
      %791 = vmatmul.bf16.gmra.mxu0 %v569
      %v792 = vpop.f32.mrf.mxu0
      %v793 = vadd.f32 %v273, %v792
      %v794 = vpop.f32.mrf.mxu0
      %v795 = vadd.f32 %v273, %v794
      %796 = vmatmul.bf16.gmra.mxu0 %v572
      %v797 = vpop.f32.mrf.mxu0
      %v798 = vadd.f32 %v273, %v797
      %v799 = vpop.f32.mrf.mxu0
      %v800 = vadd.f32 %v273, %v799
      %801 = vmatmul.bf16.gmra.mxu0 %v575
      %v802 = vpop.f32.mrf.mxu0
      %v803 = vadd.f32 %v273, %v802
      %v804 = vpop.f32.mrf.mxu0
      %v805 = vadd.f32 %v273, %v804
      %806 = vdwg.mxu0
      %807 = vmatpush.bf16.msra.mxu0 0
      %808 = vmatpush.bf16.msra.mxu0 0
      %809 = vmatpush.bf16.msra.mxu0 0
      %810 = vmatpush.bf16.msra.mxu0 0
      %811 = vmatpush.bf16.msra.mxu0 0
      %812 = vmatpush.bf16.msra.mxu0 0
      %813 = vmatpush.bf16.msra.mxu0 %v588
      %814 = vmatpush.bf16.msra.mxu0 %v482
      %815 = vmatmul.bf16.gmra.mxu0 %v530
      %v816 = vpop.f32.mrf.mxu0
      %v817 = vadd.f32 %v274, %v816
      %v818 = vpop.f32.mrf.mxu0
      %v819 = vadd.f32 %v274, %v818
      %820 = vmatmul.bf16.gmra.mxu0 %v533
      %v821 = vpop.f32.mrf.mxu0
      %v822 = vadd.f32 %v274, %v821
      %v823 = vpop.f32.mrf.mxu0
      %v824 = vadd.f32 %v274, %v823
      %825 = vmatmul.bf16.gmra.mxu0 %v536
      %v826 = vpop.f32.mrf.mxu0
      %v827 = vadd.f32 %v274, %v826
      %v828 = vpop.f32.mrf.mxu0
      %v829 = vadd.f32 %v274, %v828
      %830 = vmatmul.bf16.gmra.mxu0 %v539
      %v831 = vpop.f32.mrf.mxu0
      %v832 = vadd.f32 %v274, %v831
      %v833 = vpop.f32.mrf.mxu0
      %v834 = vadd.f32 %v274, %v833
      %835 = vmatmul.bf16.gmra.mxu0 %v542
      %v836 = vpop.f32.mrf.mxu0
      %v837 = vadd.f32 %v274, %v836
      %v838 = vpop.f32.mrf.mxu0
      %v839 = vadd.f32 %v274, %v838
      %840 = vmatmul.bf16.gmra.mxu0 %v545
      %v841 = vpop.f32.mrf.mxu0
      %v842 = vadd.f32 %v274, %v841
      %v843 = vpop.f32.mrf.mxu0
      %v844 = vadd.f32 %v274, %v843
      %845 = vmatmul.bf16.gmra.mxu0 %v548
      %v846 = vpop.f32.mrf.mxu0
      %v847 = vadd.f32 %v274, %v846
      %v848 = vpop.f32.mrf.mxu0
      %v849 = vadd.f32 %v274, %v848
      %850 = vmatmul.bf16.gmra.mxu0 %v551
      %v851 = vpop.f32.mrf.mxu0
      %v852 = vadd.f32 %v274, %v851
      %v853 = vpop.f32.mrf.mxu0
      %v854 = vadd.f32 %v274, %v853
      %855 = vmatmul.bf16.gmra.mxu0 %v554
      %v856 = vpop.f32.mrf.mxu0
      %v857 = vadd.f32 %v274, %v856
      %v858 = vpop.f32.mrf.mxu0
      %v859 = vadd.f32 %v274, %v858
      %860 = vmatmul.bf16.gmra.mxu0 %v557
      %v861 = vpop.f32.mrf.mxu0
      %v862 = vadd.f32 %v274, %v861
      %v863 = vpop.f32.mrf.mxu0
      %v864 = vadd.f32 %v274, %v863
      %865 = vmatmul.bf16.gmra.mxu0 %v560
      %v866 = vpop.f32.mrf.mxu0
      %v867 = vadd.f32 %v274, %v866
      %v868 = vpop.f32.mrf.mxu0
      %v869 = vadd.f32 %v274, %v868
      %870 = vmatmul.bf16.gmra.mxu0 %v563
      %v871 = vpop.f32.mrf.mxu0
      %v872 = vadd.f32 %v274, %v871
      %v873 = vpop.f32.mrf.mxu0
      %v874 = vadd.f32 %v274, %v873
      %875 = vmatmul.bf16.gmra.mxu0 %v566
      %v876 = vpop.f32.mrf.mxu0
      %v877 = vadd.f32 %v274, %v876
      %v878 = vpop.f32.mrf.mxu0
      %v879 = vadd.f32 %v274, %v878
      %880 = vmatmul.bf16.gmra.mxu0 %v569
      %v881 = vpop.f32.mrf.mxu0
      %v882 = vadd.f32 %v274, %v881
      %v883 = vpop.f32.mrf.mxu0
      %v884 = vadd.f32 %v274, %v883
      %885 = vmatmul.bf16.gmra.mxu0 %v572
      %v886 = vpop.f32.mrf.mxu0
      %v887 = vadd.f32 %v274, %v886
      %v888 = vpop.f32.mrf.mxu0
      %v889 = vadd.f32 %v274, %v888
      %890 = vmatmul.bf16.gmra.mxu0 %v575
      %v891 = vpop.f32.mrf.mxu0
      %v892 = vadd.f32 %v274, %v891
      %v893 = vpop.f32.mrf.mxu0
      %v894 = vadd.f32 %v274, %v893
      %895 = vdwg.mxu0
      %896 = vmatpush.bf16.msra.mxu0 0
      %897 = vmatpush.bf16.msra.mxu0 0
      %898 = vmatpush.bf16.msra.mxu0 0
      %899 = vmatpush.bf16.msra.mxu0 0
      %900 = vmatpush.bf16.msra.mxu0 0
      %901 = vmatpush.bf16.msra.mxu0 0
      %902 = vmatpush.bf16.msra.mxu0 %v591
      %903 = vmatpush.bf16.msra.mxu0 %v483
      %904 = vmatmul.bf16.gmra.mxu0 %v530
      %v905 = vpop.f32.mrf.mxu0
      %v906 = vadd.f32 %v275, %v905
      %v907 = vpop.f32.mrf.mxu0
      %v908 = vadd.f32 %v275, %v907
      %909 = vmatmul.bf16.gmra.mxu0 %v533
      %v910 = vpop.f32.mrf.mxu0
      %v911 = vadd.f32 %v275, %v910
      %v912 = vpop.f32.mrf.mxu0
      %v913 = vadd.f32 %v275, %v912
      %914 = vmatmul.bf16.gmra.mxu0 %v536
      %v915 = vpop.f32.mrf.mxu0
      %v916 = vadd.f32 %v275, %v915
      %v917 = vpop.f32.mrf.mxu0
      %v918 = vadd.f32 %v275, %v917
      %919 = vmatmul.bf16.gmra.mxu0 %v539
      %v920 = vpop.f32.mrf.mxu0
      %v921 = vadd.f32 %v275, %v920
      %v922 = vpop.f32.mrf.mxu0
      %v923 = vadd.f32 %v275, %v922
      %924 = vmatmul.bf16.gmra.mxu0 %v542
      %v925 = vpop.f32.mrf.mxu0
      %v926 = vadd.f32 %v275, %v925
      %v927 = vpop.f32.mrf.mxu0
      %v928 = vadd.f32 %v275, %v927
      %929 = vmatmul.bf16.gmra.mxu0 %v545
      %v930 = vpop.f32.mrf.mxu0
      %v931 = vadd.f32 %v275, %v930
      %v932 = vpop.f32.mrf.mxu0
      %v933 = vadd.f32 %v275, %v932
      %934 = vmatmul.bf16.gmra.mxu0 %v548
      %v935 = vpop.f32.mrf.mxu0
      %v936 = vadd.f32 %v275, %v935
      %v937 = vpop.f32.mrf.mxu0
      %v938 = vadd.f32 %v275, %v937
      %939 = vmatmul.bf16.gmra.mxu0 %v551
      %v940 = vpop.f32.mrf.mxu0
      %v941 = vadd.f32 %v275, %v940
      %v942 = vpop.f32.mrf.mxu0
      %v943 = vadd.f32 %v275, %v942
      %944 = vmatmul.bf16.gmra.mxu0 %v554
      %v945 = vpop.f32.mrf.mxu0
      %v946 = vadd.f32 %v275, %v945
      %v947 = vpop.f32.mrf.mxu0
      %v948 = vadd.f32 %v275, %v947
      %949 = vmatmul.bf16.gmra.mxu0 %v557
      %v950 = vpop.f32.mrf.mxu0
      %v951 = vadd.f32 %v275, %v950
      %v952 = vpop.f32.mrf.mxu0
      %v953 = vadd.f32 %v275, %v952
      %954 = vmatmul.bf16.gmra.mxu0 %v560
      %v955 = vpop.f32.mrf.mxu0
      %v956 = vadd.f32 %v275, %v955
      %v957 = vpop.f32.mrf.mxu0
      %v958 = vadd.f32 %v275, %v957
      %959 = vmatmul.bf16.gmra.mxu0 %v563
      %v960 = vpop.f32.mrf.mxu0
      %v961 = vadd.f32 %v275, %v960
      %v962 = vpop.f32.mrf.mxu0
      %v963 = vadd.f32 %v275, %v962
      %964 = vmatmul.bf16.gmra.mxu0 %v566
      %v965 = vpop.f32.mrf.mxu0
      %v966 = vadd.f32 %v275, %v965
      %v967 = vpop.f32.mrf.mxu0
      %v968 = vadd.f32 %v275, %v967
      %969 = vmatmul.bf16.gmra.mxu0 %v569
      %v970 = vpop.f32.mrf.mxu0
      %v971 = vadd.f32 %v275, %v970
      %v972 = vpop.f32.mrf.mxu0
      %v973 = vadd.f32 %v275, %v972
      %974 = vmatmul.bf16.gmra.mxu0 %v572
      %v975 = vpop.f32.mrf.mxu0
      %v976 = vadd.f32 %v275, %v975
      %v977 = vpop.f32.mrf.mxu0
      %v978 = vadd.f32 %v275, %v977
      %979 = vmatmul.bf16.gmra.mxu0 %v575
      %v980 = vpop.f32.mrf.mxu0
      %v981 = vadd.f32 %v275, %v980
      %v982 = vpop.f32.mrf.mxu0
      %v983 = vadd.f32 %v275, %v982
      %984 = vdwg.mxu0
      %985 = vmatpush.bf16.msra.mxu0 0
      %986 = vmatpush.bf16.msra.mxu0 0
      %987 = vmatpush.bf16.msra.mxu0 0
      %988 = vmatpush.bf16.msra.mxu0 0
      %989 = vmatpush.bf16.msra.mxu0 0
      %990 = vmatpush.bf16.msra.mxu0 0
      %991 = vmatpush.bf16.msra.mxu0 %v594
      %992 = vmatpush.bf16.msra.mxu0 %v484
      %993 = vmatmul.bf16.gmra.mxu0 %v530
      %v994 = vpop.f32.mrf.mxu0
      %v995 = vadd.f32 %v276, %v994
      %v996 = vpop.f32.mrf.mxu0
      %v997 = vadd.f32 %v276, %v996
      %998 = vmatmul.bf16.gmra.mxu0 %v533
      %v999 = vpop.f32.mrf.mxu0
      %v1000 = vadd.f32 %v276, %v999
      %v1001 = vpop.f32.mrf.mxu0
      %v1002 = vadd.f32 %v276, %v1001
      %1003 = vmatmul.bf16.gmra.mxu0 %v536
      %v1004 = vpop.f32.mrf.mxu0
      %v1005 = vadd.f32 %v276, %v1004
      %v1006 = vpop.f32.mrf.mxu0
      %v1007 = vadd.f32 %v276, %v1006
      %1008 = vmatmul.bf16.gmra.mxu0 %v539
      %v1009 = vpop.f32.mrf.mxu0
      %v1010 = vadd.f32 %v276, %v1009
      %v1011 = vpop.f32.mrf.mxu0
      %v1012 = vadd.f32 %v276, %v1011
      %1013 = vmatmul.bf16.gmra.mxu0 %v542
      %v1014 = vpop.f32.mrf.mxu0
      %v1015 = vadd.f32 %v276, %v1014
      %v1016 = vpop.f32.mrf.mxu0
      %v1017 = vadd.f32 %v276, %v1016
      %1018 = vmatmul.bf16.gmra.mxu0 %v545
      %v1019 = vpop.f32.mrf.mxu0
      %v1020 = vadd.f32 %v276, %v1019
      %v1021 = vpop.f32.mrf.mxu0
      %v1022 = vadd.f32 %v276, %v1021
      %1023 = vmatmul.bf16.gmra.mxu0 %v548
      %v1024 = vpop.f32.mrf.mxu0
      %v1025 = vadd.f32 %v276, %v1024
      %v1026 = vpop.f32.mrf.mxu0
      %v1027 = vadd.f32 %v276, %v1026
      %1028 = vmatmul.bf16.gmra.mxu0 %v551
      %v1029 = vpop.f32.mrf.mxu0
      %v1030 = vadd.f32 %v276, %v1029
      %v1031 = vpop.f32.mrf.mxu0
      %v1032 = vadd.f32 %v276, %v1031
      %1033 = vmatmul.bf16.gmra.mxu0 %v554
      %v1034 = vpop.f32.mrf.mxu0
      %v1035 = vadd.f32 %v276, %v1034
      %v1036 = vpop.f32.mrf.mxu0
      %v1037 = vadd.f32 %v276, %v1036
      %1038 = vmatmul.bf16.gmra.mxu0 %v557
      %v1039 = vpop.f32.mrf.mxu0
      %v1040 = vadd.f32 %v276, %v1039
      %v1041 = vpop.f32.mrf.mxu0
      %v1042 = vadd.f32 %v276, %v1041
      %1043 = vmatmul.bf16.gmra.mxu0 %v560
      %v1044 = vpop.f32.mrf.mxu0
      %v1045 = vadd.f32 %v276, %v1044
      %v1046 = vpop.f32.mrf.mxu0
      %v1047 = vadd.f32 %v276, %v1046
      %1048 = vmatmul.bf16.gmra.mxu0 %v563
      %v1049 = vpop.f32.mrf.mxu0
      %v1050 = vadd.f32 %v276, %v1049
      %v1051 = vpop.f32.mrf.mxu0
      %v1052 = vadd.f32 %v276, %v1051
      %1053 = vmatmul.bf16.gmra.mxu0 %v566
      %v1054 = vpop.f32.mrf.mxu0
      %v1055 = vadd.f32 %v276, %v1054
      %v1056 = vpop.f32.mrf.mxu0
      %v1057 = vadd.f32 %v276, %v1056
      %1058 = vmatmul.bf16.gmra.mxu0 %v569
      %v1059 = vpop.f32.mrf.mxu0
      %v1060 = vadd.f32 %v276, %v1059
      %v1061 = vpop.f32.mrf.mxu0
      %v1062 = vadd.f32 %v276, %v1061
      %1063 = vmatmul.bf16.gmra.mxu0 %v572
      %v1064 = vpop.f32.mrf.mxu0
      %v1065 = vadd.f32 %v276, %v1064
      %v1066 = vpop.f32.mrf.mxu0
      %v1067 = vadd.f32 %v276, %v1066
      %1068 = vmatmul.bf16.gmra.mxu0 %v575
      %v1069 = vpop.f32.mrf.mxu0
      %v1070 = vadd.f32 %v276, %v1069
      %v1071 = vpop.f32.mrf.mxu0
      %v1072 = vadd.f32 %v276, %v1071
      %1073 = vdwg.mxu0
      %1074 = vmatpush.bf16.msra.mxu0 0
      %1075 = vmatpush.bf16.msra.mxu0 0
      %1076 = vmatpush.bf16.msra.mxu0 0
      %1077 = vmatpush.bf16.msra.mxu0 0
      %1078 = vmatpush.bf16.msra.mxu0 0
      %1079 = vmatpush.bf16.msra.mxu0 0
      %1080 = vmatpush.bf16.msra.mxu0 %v597
      %1081 = vmatpush.bf16.msra.mxu0 %v485
      %1082 = vmatmul.bf16.gmra.mxu0 %v530
      %v1083 = vpop.f32.mrf.mxu0
      %v1084 = vadd.f32 %v277, %v1083
      %v1085 = vpop.f32.mrf.mxu0
      %v1086 = vadd.f32 %v277, %v1085
      %1087 = vmatmul.bf16.gmra.mxu0 %v533
      %v1088 = vpop.f32.mrf.mxu0
      %v1089 = vadd.f32 %v277, %v1088
      %v1090 = vpop.f32.mrf.mxu0
      %v1091 = vadd.f32 %v277, %v1090
      %1092 = vmatmul.bf16.gmra.mxu0 %v536
      %v1093 = vpop.f32.mrf.mxu0
      %v1094 = vadd.f32 %v277, %v1093
      %v1095 = vpop.f32.mrf.mxu0
      %v1096 = vadd.f32 %v277, %v1095
      %1097 = vmatmul.bf16.gmra.mxu0 %v539
      %v1098 = vpop.f32.mrf.mxu0
      %v1099 = vadd.f32 %v277, %v1098
      %v1100 = vpop.f32.mrf.mxu0
      %v1101 = vadd.f32 %v277, %v1100
      %1102 = vmatmul.bf16.gmra.mxu0 %v542
      %v1103 = vpop.f32.mrf.mxu0
      %v1104 = vadd.f32 %v277, %v1103
      %v1105 = vpop.f32.mrf.mxu0
      %v1106 = vadd.f32 %v277, %v1105
      %1107 = vmatmul.bf16.gmra.mxu0 %v545
      %v1108 = vpop.f32.mrf.mxu0
      %v1109 = vadd.f32 %v277, %v1108
      %v1110 = vpop.f32.mrf.mxu0
      %v1111 = vadd.f32 %v277, %v1110
      %1112 = vmatmul.bf16.gmra.mxu0 %v548
      %v1113 = vpop.f32.mrf.mxu0
      %v1114 = vadd.f32 %v277, %v1113
      %v1115 = vpop.f32.mrf.mxu0
      %v1116 = vadd.f32 %v277, %v1115
      %1117 = vmatmul.bf16.gmra.mxu0 %v551
      %v1118 = vpop.f32.mrf.mxu0
      %v1119 = vadd.f32 %v277, %v1118
      %v1120 = vpop.f32.mrf.mxu0
      %v1121 = vadd.f32 %v277, %v1120
      %1122 = vmatmul.bf16.gmra.mxu0 %v554
      %v1123 = vpop.f32.mrf.mxu0
      %v1124 = vadd.f32 %v277, %v1123
      %v1125 = vpop.f32.mrf.mxu0
      %v1126 = vadd.f32 %v277, %v1125
      %1127 = vmatmul.bf16.gmra.mxu0 %v557
      %v1128 = vpop.f32.mrf.mxu0
      %v1129 = vadd.f32 %v277, %v1128
      %v1130 = vpop.f32.mrf.mxu0
      %v1131 = vadd.f32 %v277, %v1130
      %1132 = vmatmul.bf16.gmra.mxu0 %v560
      %v1133 = vpop.f32.mrf.mxu0
      %v1134 = vadd.f32 %v277, %v1133
      %v1135 = vpop.f32.mrf.mxu0
      %v1136 = vadd.f32 %v277, %v1135
      %1137 = vmatmul.bf16.gmra.mxu0 %v563
      %v1138 = vpop.f32.mrf.mxu0
      %v1139 = vadd.f32 %v277, %v1138
      %v1140 = vpop.f32.mrf.mxu0
      %v1141 = vadd.f32 %v277, %v1140
      %1142 = vmatmul.bf16.gmra.mxu0 %v566
      %v1143 = vpop.f32.mrf.mxu0
      %v1144 = vadd.f32 %v277, %v1143
      %v1145 = vpop.f32.mrf.mxu0
      %v1146 = vadd.f32 %v277, %v1145
      %1147 = vmatmul.bf16.gmra.mxu0 %v569
      %v1148 = vpop.f32.mrf.mxu0
      %v1149 = vadd.f32 %v277, %v1148
      %v1150 = vpop.f32.mrf.mxu0
      %v1151 = vadd.f32 %v277, %v1150
      %1152 = vmatmul.bf16.gmra.mxu0 %v572
      %v1153 = vpop.f32.mrf.mxu0
      %v1154 = vadd.f32 %v277, %v1153
      %v1155 = vpop.f32.mrf.mxu0
      %v1156 = vadd.f32 %v277, %v1155
      %1157 = vmatmul.bf16.gmra.mxu0 %v575
      %v1158 = vpop.f32.mrf.mxu0
      %v1159 = vadd.f32 %v277, %v1158
      %v1160 = vpop.f32.mrf.mxu0
      %v1161 = vadd.f32 %v277, %v1160
      %1162 = vdwg.mxu0
      %1163 = vmatpush.bf16.msra.mxu0 0
      %1164 = vmatpush.bf16.msra.mxu0 0
      %1165 = vmatpush.bf16.msra.mxu0 0
      %1166 = vmatpush.bf16.msra.mxu0 0
      %1167 = vmatpush.bf16.msra.mxu0 0
      %1168 = vmatpush.bf16.msra.mxu0 0
      %1169 = vmatpush.bf16.msra.mxu0 %v600
      %1170 = vmatpush.bf16.msra.mxu0 %v486
      %1171 = vmatmul.bf16.gmra.mxu0 %v530
      %v1172 = vpop.f32.mrf.mxu0
      %v1173 = vadd.f32 %v278, %v1172
      %v1174 = vpop.f32.mrf.mxu0
      %v1175 = vadd.f32 %v278, %v1174
      %1176 = vmatmul.bf16.gmra.mxu0 %v533
      %v1177 = vpop.f32.mrf.mxu0
      %v1178 = vadd.f32 %v278, %v1177
      %v1179 = vpop.f32.mrf.mxu0
      %v1180 = vadd.f32 %v278, %v1179
      %1181 = vmatmul.bf16.gmra.mxu0 %v536
      %v1182 = vpop.f32.mrf.mxu0
      %v1183 = vadd.f32 %v278, %v1182
      %v1184 = vpop.f32.mrf.mxu0
      %v1185 = vadd.f32 %v278, %v1184
      %1186 = vmatmul.bf16.gmra.mxu0 %v539
      %v1187 = vpop.f32.mrf.mxu0
      %v1188 = vadd.f32 %v278, %v1187
      %v1189 = vpop.f32.mrf.mxu0
      %v1190 = vadd.f32 %v278, %v1189
      %1191 = vmatmul.bf16.gmra.mxu0 %v542
      %v1192 = vpop.f32.mrf.mxu0
      %v1193 = vadd.f32 %v278, %v1192
      %v1194 = vpop.f32.mrf.mxu0
      %v1195 = vadd.f32 %v278, %v1194
      %1196 = vmatmul.bf16.gmra.mxu0 %v545
      %v1197 = vpop.f32.mrf.mxu0
      %v1198 = vadd.f32 %v278, %v1197
      %v1199 = vpop.f32.mrf.mxu0
      %v1200 = vadd.f32 %v278, %v1199
      %1201 = vmatmul.bf16.gmra.mxu0 %v548
      %v1202 = vpop.f32.mrf.mxu0
      %v1203 = vadd.f32 %v278, %v1202
      %v1204 = vpop.f32.mrf.mxu0
      %v1205 = vadd.f32 %v278, %v1204
      %1206 = vmatmul.bf16.gmra.mxu0 %v551
      %v1207 = vpop.f32.mrf.mxu0
      %v1208 = vadd.f32 %v278, %v1207
      %v1209 = vpop.f32.mrf.mxu0
      %v1210 = vadd.f32 %v278, %v1209
      %1211 = vmatmul.bf16.gmra.mxu0 %v554
      %v1212 = vpop.f32.mrf.mxu0
      %v1213 = vadd.f32 %v278, %v1212
      %v1214 = vpop.f32.mrf.mxu0
      %v1215 = vadd.f32 %v278, %v1214
      %1216 = vmatmul.bf16.gmra.mxu0 %v557
      %v1217 = vpop.f32.mrf.mxu0
      %v1218 = vadd.f32 %v278, %v1217
      %v1219 = vpop.f32.mrf.mxu0
      %v1220 = vadd.f32 %v278, %v1219
      %1221 = vmatmul.bf16.gmra.mxu0 %v560
      %v1222 = vpop.f32.mrf.mxu0
      %v1223 = vadd.f32 %v278, %v1222
      %v1224 = vpop.f32.mrf.mxu0
      %v1225 = vadd.f32 %v278, %v1224
      %1226 = vmatmul.bf16.gmra.mxu0 %v563
      %v1227 = vpop.f32.mrf.mxu0
      %v1228 = vadd.f32 %v278, %v1227
      %v1229 = vpop.f32.mrf.mxu0
      %v1230 = vadd.f32 %v278, %v1229
      %1231 = vmatmul.bf16.gmra.mxu0 %v566
      %v1232 = vpop.f32.mrf.mxu0
      %v1233 = vadd.f32 %v278, %v1232
      %v1234 = vpop.f32.mrf.mxu0
      %v1235 = vadd.f32 %v278, %v1234
      %1236 = vmatmul.bf16.gmra.mxu0 %v569
      %v1237 = vpop.f32.mrf.mxu0
      %v1238 = vadd.f32 %v278, %v1237
      %v1239 = vpop.f32.mrf.mxu0
      %v1240 = vadd.f32 %v278, %v1239
      %1241 = vmatmul.bf16.gmra.mxu0 %v572
      %v1242 = vpop.f32.mrf.mxu0
      %v1243 = vadd.f32 %v278, %v1242
      %v1244 = vpop.f32.mrf.mxu0
      %v1245 = vadd.f32 %v278, %v1244
      %1246 = vmatmul.bf16.gmra.mxu0 %v575
      %v1247 = vpop.f32.mrf.mxu0
      %v1248 = vadd.f32 %v278, %v1247
      %v1249 = vpop.f32.mrf.mxu0
      %v1250 = vadd.f32 %v278, %v1249
      %1251 = vdwg.mxu0
      %1252 = vmatpush.bf16.msra.mxu0 0
      %1253 = vmatpush.bf16.msra.mxu0 0
      %1254 = vmatpush.bf16.msra.mxu0 0
      %1255 = vmatpush.bf16.msra.mxu0 0
      %1256 = vmatpush.bf16.msra.mxu0 0
      %1257 = vmatpush.bf16.msra.mxu0 0
      %1258 = vmatpush.bf16.msra.mxu0 %v603
      %1259 = vmatpush.bf16.msra.mxu0 %v487
      %1260 = vmatmul.bf16.gmra.mxu0 %v530
      %v1261 = vpop.f32.mrf.mxu0
      %v1262 = vadd.f32 %v279, %v1261
      %v1263 = vpop.f32.mrf.mxu0
      %v1264 = vadd.f32 %v279, %v1263
      %1265 = vmatmul.bf16.gmra.mxu0 %v533
      %v1266 = vpop.f32.mrf.mxu0
      %v1267 = vadd.f32 %v279, %v1266
      %v1268 = vpop.f32.mrf.mxu0
      %v1269 = vadd.f32 %v279, %v1268
      %1270 = vmatmul.bf16.gmra.mxu0 %v536
      %v1271 = vpop.f32.mrf.mxu0
      %v1272 = vadd.f32 %v279, %v1271
      %v1273 = vpop.f32.mrf.mxu0
      %v1274 = vadd.f32 %v279, %v1273
      %1275 = vmatmul.bf16.gmra.mxu0 %v539
      %v1276 = vpop.f32.mrf.mxu0
      %v1277 = vadd.f32 %v279, %v1276
      %v1278 = vpop.f32.mrf.mxu0
      %v1279 = vadd.f32 %v279, %v1278
      %1280 = vmatmul.bf16.gmra.mxu0 %v542
      %v1281 = vpop.f32.mrf.mxu0
      %v1282 = vadd.f32 %v279, %v1281
      %v1283 = vpop.f32.mrf.mxu0
      %v1284 = vadd.f32 %v279, %v1283
      %1285 = vmatmul.bf16.gmra.mxu0 %v545
      %v1286 = vpop.f32.mrf.mxu0
      %v1287 = vadd.f32 %v279, %v1286
      %v1288 = vpop.f32.mrf.mxu0
      %v1289 = vadd.f32 %v279, %v1288
      %1290 = vmatmul.bf16.gmra.mxu0 %v548
      %v1291 = vpop.f32.mrf.mxu0
      %v1292 = vadd.f32 %v279, %v1291
      %v1293 = vpop.f32.mrf.mxu0
      %v1294 = vadd.f32 %v279, %v1293
      %1295 = vmatmul.bf16.gmra.mxu0 %v551
      %v1296 = vpop.f32.mrf.mxu0
      %v1297 = vadd.f32 %v279, %v1296
      %v1298 = vpop.f32.mrf.mxu0
      %v1299 = vadd.f32 %v279, %v1298
      %1300 = vmatmul.bf16.gmra.mxu0 %v554
      %v1301 = vpop.f32.mrf.mxu0
      %v1302 = vadd.f32 %v279, %v1301
      %v1303 = vpop.f32.mrf.mxu0
      %v1304 = vadd.f32 %v279, %v1303
      %1305 = vmatmul.bf16.gmra.mxu0 %v557
      %v1306 = vpop.f32.mrf.mxu0
      %v1307 = vadd.f32 %v279, %v1306
      %v1308 = vpop.f32.mrf.mxu0
      %v1309 = vadd.f32 %v279, %v1308
      %1310 = vmatmul.bf16.gmra.mxu0 %v560
      %v1311 = vpop.f32.mrf.mxu0
      %v1312 = vadd.f32 %v279, %v1311
      %v1313 = vpop.f32.mrf.mxu0
      %v1314 = vadd.f32 %v279, %v1313
      %1315 = vmatmul.bf16.gmra.mxu0 %v563
      %v1316 = vpop.f32.mrf.mxu0
      %v1317 = vadd.f32 %v279, %v1316
      %v1318 = vpop.f32.mrf.mxu0
      %v1319 = vadd.f32 %v279, %v1318
      %1320 = vmatmul.bf16.gmra.mxu0 %v566
      %v1321 = vpop.f32.mrf.mxu0
      %v1322 = vadd.f32 %v279, %v1321
      %v1323 = vpop.f32.mrf.mxu0
      %v1324 = vadd.f32 %v279, %v1323
      %1325 = vmatmul.bf16.gmra.mxu0 %v569
      %v1326 = vpop.f32.mrf.mxu0
      %v1327 = vadd.f32 %v279, %v1326
      %v1328 = vpop.f32.mrf.mxu0
      %v1329 = vadd.f32 %v279, %v1328
      %1330 = vmatmul.bf16.gmra.mxu0 %v572
      %v1331 = vpop.f32.mrf.mxu0
      %v1332 = vadd.f32 %v279, %v1331
      %v1333 = vpop.f32.mrf.mxu0
      %v1334 = vadd.f32 %v279, %v1333
      %1335 = vmatmul.bf16.gmra.mxu0 %v575
      %v1336 = vpop.f32.mrf.mxu0
      %v1337 = vadd.f32 %v279, %v1336
      %v1338 = vpop.f32.mrf.mxu0
      %v1339 = vadd.f32 %v279, %v1338
      %1340 = vdwg.mxu0
      %1341 = vmatpush.bf16.msra.mxu0 0
      %1342 = vmatpush.bf16.msra.mxu0 0
      %1343 = vmatpush.bf16.msra.mxu0 0
      %1344 = vmatpush.bf16.msra.mxu0 0
      %1345 = vmatpush.bf16.msra.mxu0 0
      %1346 = vmatpush.bf16.msra.mxu0 0
      %1347 = vmatpush.bf16.msra.mxu0 %v606
      %1348 = vmatpush.bf16.msra.mxu0 %v488
      %1349 = vmatmul.bf16.gmra.mxu0 %v530
      %v1350 = vpop.f32.mrf.mxu0
      %v1351 = vadd.f32 %v280, %v1350
      %v1352 = vpop.f32.mrf.mxu0
      %v1353 = vadd.f32 %v280, %v1352
      %1354 = vmatmul.bf16.gmra.mxu0 %v533
      %v1355 = vpop.f32.mrf.mxu0
      %v1356 = vadd.f32 %v280, %v1355
      %v1357 = vpop.f32.mrf.mxu0
      %v1358 = vadd.f32 %v280, %v1357
      %1359 = vmatmul.bf16.gmra.mxu0 %v536
      %v1360 = vpop.f32.mrf.mxu0
      %v1361 = vadd.f32 %v280, %v1360
      %v1362 = vpop.f32.mrf.mxu0
      %v1363 = vadd.f32 %v280, %v1362
      %1364 = vmatmul.bf16.gmra.mxu0 %v539
      %v1365 = vpop.f32.mrf.mxu0
      %v1366 = vadd.f32 %v280, %v1365
      %v1367 = vpop.f32.mrf.mxu0
      %v1368 = vadd.f32 %v280, %v1367
      %1369 = vmatmul.bf16.gmra.mxu0 %v542
      %v1370 = vpop.f32.mrf.mxu0
      %v1371 = vadd.f32 %v280, %v1370
      %v1372 = vpop.f32.mrf.mxu0
      %v1373 = vadd.f32 %v280, %v1372
      %1374 = vmatmul.bf16.gmra.mxu0 %v545
      %v1375 = vpop.f32.mrf.mxu0
      %v1376 = vadd.f32 %v280, %v1375
      %v1377 = vpop.f32.mrf.mxu0
      %v1378 = vadd.f32 %v280, %v1377
      %1379 = vmatmul.bf16.gmra.mxu0 %v548
      %v1380 = vpop.f32.mrf.mxu0
      %v1381 = vadd.f32 %v280, %v1380
      %v1382 = vpop.f32.mrf.mxu0
      %v1383 = vadd.f32 %v280, %v1382
      %1384 = vmatmul.bf16.gmra.mxu0 %v551
      %v1385 = vpop.f32.mrf.mxu0
      %v1386 = vadd.f32 %v280, %v1385
      %v1387 = vpop.f32.mrf.mxu0
      %v1388 = vadd.f32 %v280, %v1387
      %1389 = vmatmul.bf16.gmra.mxu0 %v554
      %v1390 = vpop.f32.mrf.mxu0
      %v1391 = vadd.f32 %v280, %v1390
      %v1392 = vpop.f32.mrf.mxu0
      %v1393 = vadd.f32 %v280, %v1392
      %1394 = vmatmul.bf16.gmra.mxu0 %v557
      %v1395 = vpop.f32.mrf.mxu0
      %v1396 = vadd.f32 %v280, %v1395
      %v1397 = vpop.f32.mrf.mxu0
      %v1398 = vadd.f32 %v280, %v1397
      %1399 = vmatmul.bf16.gmra.mxu0 %v560
      %v1400 = vpop.f32.mrf.mxu0
      %v1401 = vadd.f32 %v280, %v1400
      %v1402 = vpop.f32.mrf.mxu0
      %v1403 = vadd.f32 %v280, %v1402
      %1404 = vmatmul.bf16.gmra.mxu0 %v563
      %v1405 = vpop.f32.mrf.mxu0
      %v1406 = vadd.f32 %v280, %v1405
      %v1407 = vpop.f32.mrf.mxu0
      %v1408 = vadd.f32 %v280, %v1407
      %1409 = vmatmul.bf16.gmra.mxu0 %v566
      %v1410 = vpop.f32.mrf.mxu0
      %v1411 = vadd.f32 %v280, %v1410
      %v1412 = vpop.f32.mrf.mxu0
      %v1413 = vadd.f32 %v280, %v1412
      %1414 = vmatmul.bf16.gmra.mxu0 %v569
      %v1415 = vpop.f32.mrf.mxu0
      %v1416 = vadd.f32 %v280, %v1415
      %v1417 = vpop.f32.mrf.mxu0
      %v1418 = vadd.f32 %v280, %v1417
      %1419 = vmatmul.bf16.gmra.mxu0 %v572
      %v1420 = vpop.f32.mrf.mxu0
      %v1421 = vadd.f32 %v280, %v1420
      %v1422 = vpop.f32.mrf.mxu0
      %v1423 = vadd.f32 %v280, %v1422
      %1424 = vmatmul.bf16.gmra.mxu0 %v575
      %v1425 = vpop.f32.mrf.mxu0
      %v1426 = vadd.f32 %v280, %v1425
      %v1427 = vpop.f32.mrf.mxu0
      %v1428 = vadd.f32 %v280, %v1427
      %1429 = vdwg.mxu0
      %1430 = vmatpush.bf16.msra.mxu0 0
      %1431 = vmatpush.bf16.msra.mxu0 0
      %1432 = vmatpush.bf16.msra.mxu0 0
      %1433 = vmatpush.bf16.msra.mxu0 0
      %1434 = vmatpush.bf16.msra.mxu0 0
      %1435 = vmatpush.bf16.msra.mxu0 0
      %1436 = vmatpush.bf16.msra.mxu0 %v609
      %1437 = vmatpush.bf16.msra.mxu0 %v489
      %1438 = vmatmul.bf16.gmra.mxu0 %v530
      %v1439 = vpop.f32.mrf.mxu0
      %v1440 = vadd.f32 %v281, %v1439
      %v1441 = vpop.f32.mrf.mxu0
      %v1442 = vadd.f32 %v281, %v1441
      %1443 = vmatmul.bf16.gmra.mxu0 %v533
      %v1444 = vpop.f32.mrf.mxu0
      %v1445 = vadd.f32 %v281, %v1444
      %v1446 = vpop.f32.mrf.mxu0
      %v1447 = vadd.f32 %v281, %v1446
      %1448 = vmatmul.bf16.gmra.mxu0 %v536
      %v1449 = vpop.f32.mrf.mxu0
      %v1450 = vadd.f32 %v281, %v1449
      %v1451 = vpop.f32.mrf.mxu0
      %v1452 = vadd.f32 %v281, %v1451
      %1453 = vmatmul.bf16.gmra.mxu0 %v539
      %v1454 = vpop.f32.mrf.mxu0
      %v1455 = vadd.f32 %v281, %v1454
      %v1456 = vpop.f32.mrf.mxu0
      %v1457 = vadd.f32 %v281, %v1456
      %1458 = vmatmul.bf16.gmra.mxu0 %v542
      %v1459 = vpop.f32.mrf.mxu0
      %v1460 = vadd.f32 %v281, %v1459
      %v1461 = vpop.f32.mrf.mxu0
      %v1462 = vadd.f32 %v281, %v1461
      %1463 = vmatmul.bf16.gmra.mxu0 %v545
      %v1464 = vpop.f32.mrf.mxu0
      %v1465 = vadd.f32 %v281, %v1464
      %v1466 = vpop.f32.mrf.mxu0
      %v1467 = vadd.f32 %v281, %v1466
      %1468 = vmatmul.bf16.gmra.mxu0 %v548
      %v1469 = vpop.f32.mrf.mxu0
      %v1470 = vadd.f32 %v281, %v1469
      %v1471 = vpop.f32.mrf.mxu0
      %v1472 = vadd.f32 %v281, %v1471
      %1473 = vmatmul.bf16.gmra.mxu0 %v551
      %v1474 = vpop.f32.mrf.mxu0
      %v1475 = vadd.f32 %v281, %v1474
      %v1476 = vpop.f32.mrf.mxu0
      %v1477 = vadd.f32 %v281, %v1476
      %1478 = vmatmul.bf16.gmra.mxu0 %v554
      %v1479 = vpop.f32.mrf.mxu0
      %v1480 = vadd.f32 %v281, %v1479
      %v1481 = vpop.f32.mrf.mxu0
      %v1482 = vadd.f32 %v281, %v1481
      %1483 = vmatmul.bf16.gmra.mxu0 %v557
      %v1484 = vpop.f32.mrf.mxu0
      %v1485 = vadd.f32 %v281, %v1484
      %v1486 = vpop.f32.mrf.mxu0
      %v1487 = vadd.f32 %v281, %v1486
      %1488 = vmatmul.bf16.gmra.mxu0 %v560
      %v1489 = vpop.f32.mrf.mxu0
      %v1490 = vadd.f32 %v281, %v1489
      %v1491 = vpop.f32.mrf.mxu0
      %v1492 = vadd.f32 %v281, %v1491
      %1493 = vmatmul.bf16.gmra.mxu0 %v563
      %v1494 = vpop.f32.mrf.mxu0
      %v1495 = vadd.f32 %v281, %v1494
      %v1496 = vpop.f32.mrf.mxu0
      %v1497 = vadd.f32 %v281, %v1496
      %1498 = vmatmul.bf16.gmra.mxu0 %v566
      %v1499 = vpop.f32.mrf.mxu0
      %v1500 = vadd.f32 %v281, %v1499
      %v1501 = vpop.f32.mrf.mxu0
      %v1502 = vadd.f32 %v281, %v1501
      %1503 = vmatmul.bf16.gmra.mxu0 %v569
      %v1504 = vpop.f32.mrf.mxu0
      %v1505 = vadd.f32 %v281, %v1504
      %v1506 = vpop.f32.mrf.mxu0
      %v1507 = vadd.f32 %v281, %v1506
      %1508 = vmatmul.bf16.gmra.mxu0 %v572
      %v1509 = vpop.f32.mrf.mxu0
      %v1510 = vadd.f32 %v281, %v1509
      %v1511 = vpop.f32.mrf.mxu0
      %v1512 = vadd.f32 %v281, %v1511
      %1513 = vmatmul.bf16.gmra.mxu0 %v575
      %v1514 = vpop.f32.mrf.mxu0
      %v1515 = vadd.f32 %v281, %v1514
      %v1516 = vpop.f32.mrf.mxu0
      %v1517 = vadd.f32 %v281, %v1516
      %1518 = vdwg.mxu0
      %1519 = vmatpush.bf16.msra.mxu0 0
      %1520 = vmatpush.bf16.msra.mxu0 0
      %1521 = vmatpush.bf16.msra.mxu0 0
      %1522 = vmatpush.bf16.msra.mxu0 0
      %1523 = vmatpush.bf16.msra.mxu0 0
      %1524 = vmatpush.bf16.msra.mxu0 0
      %1525 = vmatpush.bf16.msra.mxu0 %v612
      %1526 = vmatpush.bf16.msra.mxu0 %v490
      %1527 = vmatmul.bf16.gmra.mxu0 %v530
      %v1528 = vpop.f32.mrf.mxu0
      %v1529 = vadd.f32 %v282, %v1528
      %v1530 = vpop.f32.mrf.mxu0
      %v1531 = vadd.f32 %v282, %v1530
      %1532 = vmatmul.bf16.gmra.mxu0 %v533
      %v1533 = vpop.f32.mrf.mxu0
      %v1534 = vadd.f32 %v282, %v1533
      %v1535 = vpop.f32.mrf.mxu0
      %v1536 = vadd.f32 %v282, %v1535
      %1537 = vmatmul.bf16.gmra.mxu0 %v536
      %v1538 = vpop.f32.mrf.mxu0
      %v1539 = vadd.f32 %v282, %v1538
      %v1540 = vpop.f32.mrf.mxu0
      %v1541 = vadd.f32 %v282, %v1540
      %1542 = vmatmul.bf16.gmra.mxu0 %v539
      %v1543 = vpop.f32.mrf.mxu0
      %v1544 = vadd.f32 %v282, %v1543
      %v1545 = vpop.f32.mrf.mxu0
      %v1546 = vadd.f32 %v282, %v1545
      %1547 = vmatmul.bf16.gmra.mxu0 %v542
      %v1548 = vpop.f32.mrf.mxu0
      %v1549 = vadd.f32 %v282, %v1548
      %v1550 = vpop.f32.mrf.mxu0
      %v1551 = vadd.f32 %v282, %v1550
      %1552 = vmatmul.bf16.gmra.mxu0 %v545
      %v1553 = vpop.f32.mrf.mxu0
      %v1554 = vadd.f32 %v282, %v1553
      %v1555 = vpop.f32.mrf.mxu0
      %v1556 = vadd.f32 %v282, %v1555
      %1557 = vmatmul.bf16.gmra.mxu0 %v548
      %v1558 = vpop.f32.mrf.mxu0
      %v1559 = vadd.f32 %v282, %v1558
      %v1560 = vpop.f32.mrf.mxu0
      %v1561 = vadd.f32 %v282, %v1560
      %1562 = vmatmul.bf16.gmra.mxu0 %v551
      %v1563 = vpop.f32.mrf.mxu0
      %v1564 = vadd.f32 %v282, %v1563
      %v1565 = vpop.f32.mrf.mxu0
      %v1566 = vadd.f32 %v282, %v1565
      %1567 = vmatmul.bf16.gmra.mxu0 %v554
      %v1568 = vpop.f32.mrf.mxu0
      %v1569 = vadd.f32 %v282, %v1568
      %v1570 = vpop.f32.mrf.mxu0
      %v1571 = vadd.f32 %v282, %v1570
      %1572 = vmatmul.bf16.gmra.mxu0 %v557
      %v1573 = vpop.f32.mrf.mxu0
      %v1574 = vadd.f32 %v282, %v1573
      %v1575 = vpop.f32.mrf.mxu0
      %v1576 = vadd.f32 %v282, %v1575
      %1577 = vmatmul.bf16.gmra.mxu0 %v560
      %v1578 = vpop.f32.mrf.mxu0
      %v1579 = vadd.f32 %v282, %v1578
      %v1580 = vpop.f32.mrf.mxu0
      %v1581 = vadd.f32 %v282, %v1580
      %1582 = vmatmul.bf16.gmra.mxu0 %v563
      %v1583 = vpop.f32.mrf.mxu0
      %v1584 = vadd.f32 %v282, %v1583
      %v1585 = vpop.f32.mrf.mxu0
      %v1586 = vadd.f32 %v282, %v1585
      %1587 = vmatmul.bf16.gmra.mxu0 %v566
      %v1588 = vpop.f32.mrf.mxu0
      %v1589 = vadd.f32 %v282, %v1588
      %v1590 = vpop.f32.mrf.mxu0
      %v1591 = vadd.f32 %v282, %v1590
      %1592 = vmatmul.bf16.gmra.mxu0 %v569
      %v1593 = vpop.f32.mrf.mxu0
      %v1594 = vadd.f32 %v282, %v1593
      %v1595 = vpop.f32.mrf.mxu0
      %v1596 = vadd.f32 %v282, %v1595
      %1597 = vmatmul.bf16.gmra.mxu0 %v572
      %v1598 = vpop.f32.mrf.mxu0
      %v1599 = vadd.f32 %v282, %v1598
      %v1600 = vpop.f32.mrf.mxu0
      %v1601 = vadd.f32 %v282, %v1600
      %1602 = vmatmul.bf16.gmra.mxu0 %v575
      %v1603 = vpop.f32.mrf.mxu0
      %v1604 = vadd.f32 %v282, %v1603
      %v1605 = vpop.f32.mrf.mxu0
      %v1606 = vadd.f32 %v282, %v1605
      %1607 = vdwg.mxu0
      %1608 = vmatpush.bf16.msra.mxu0 0
      %1609 = vmatpush.bf16.msra.mxu0 0
      %1610 = vmatpush.bf16.msra.mxu0 0
      %1611 = vmatpush.bf16.msra.mxu0 0
      %1612 = vmatpush.bf16.msra.mxu0 0
      %1613 = vmatpush.bf16.msra.mxu0 0
      %1614 = vmatpush.bf16.msra.mxu0 %v615
      %1615 = vmatpush.bf16.msra.mxu0 %v491
      %1616 = vmatmul.bf16.gmra.mxu0 %v530
      %v1617 = vpop.f32.mrf.mxu0
      %v1618 = vadd.f32 %v283, %v1617
      %v1619 = vpop.f32.mrf.mxu0
      %v1620 = vadd.f32 %v283, %v1619
      %1621 = vmatmul.bf16.gmra.mxu0 %v533
      %v1622 = vpop.f32.mrf.mxu0
      %v1623 = vadd.f32 %v283, %v1622
      %v1624 = vpop.f32.mrf.mxu0
      %v1625 = vadd.f32 %v283, %v1624
      %1626 = vmatmul.bf16.gmra.mxu0 %v536
      %v1627 = vpop.f32.mrf.mxu0
      %v1628 = vadd.f32 %v283, %v1627
      %v1629 = vpop.f32.mrf.mxu0
      %v1630 = vadd.f32 %v283, %v1629
      %1631 = vmatmul.bf16.gmra.mxu0 %v539
      %v1632 = vpop.f32.mrf.mxu0
      %v1633 = vadd.f32 %v283, %v1632
      %v1634 = vpop.f32.mrf.mxu0
      %v1635 = vadd.f32 %v283, %v1634
      %1636 = vmatmul.bf16.gmra.mxu0 %v542
      %v1637 = vpop.f32.mrf.mxu0
      %v1638 = vadd.f32 %v283, %v1637
      %v1639 = vpop.f32.mrf.mxu0
      %v1640 = vadd.f32 %v283, %v1639
      %1641 = vmatmul.bf16.gmra.mxu0 %v545
      %v1642 = vpop.f32.mrf.mxu0
      %v1643 = vadd.f32 %v283, %v1642
      %v1644 = vpop.f32.mrf.mxu0
      %v1645 = vadd.f32 %v283, %v1644
      %1646 = vmatmul.bf16.gmra.mxu0 %v548
      %v1647 = vpop.f32.mrf.mxu0
      %v1648 = vadd.f32 %v283, %v1647
      %v1649 = vpop.f32.mrf.mxu0
      %v1650 = vadd.f32 %v283, %v1649
      %1651 = vmatmul.bf16.gmra.mxu0 %v551
      %v1652 = vpop.f32.mrf.mxu0
      %v1653 = vadd.f32 %v283, %v1652
      %v1654 = vpop.f32.mrf.mxu0
      %v1655 = vadd.f32 %v283, %v1654
      %1656 = vmatmul.bf16.gmra.mxu0 %v554
      %v1657 = vpop.f32.mrf.mxu0
      %v1658 = vadd.f32 %v283, %v1657
      %v1659 = vpop.f32.mrf.mxu0
      %v1660 = vadd.f32 %v283, %v1659
      %1661 = vmatmul.bf16.gmra.mxu0 %v557
      %v1662 = vpop.f32.mrf.mxu0
      %v1663 = vadd.f32 %v283, %v1662
      %v1664 = vpop.f32.mrf.mxu0
      %v1665 = vadd.f32 %v283, %v1664
      %1666 = vmatmul.bf16.gmra.mxu0 %v560
      %v1667 = vpop.f32.mrf.mxu0
      %v1668 = vadd.f32 %v283, %v1667
      %v1669 = vpop.f32.mrf.mxu0
      %v1670 = vadd.f32 %v283, %v1669
      %1671 = vmatmul.bf16.gmra.mxu0 %v563
      %v1672 = vpop.f32.mrf.mxu0
      %v1673 = vadd.f32 %v283, %v1672
      %v1674 = vpop.f32.mrf.mxu0
      %v1675 = vadd.f32 %v283, %v1674
      %1676 = vmatmul.bf16.gmra.mxu0 %v566
      %v1677 = vpop.f32.mrf.mxu0
      %v1678 = vadd.f32 %v283, %v1677
      %v1679 = vpop.f32.mrf.mxu0
      %v1680 = vadd.f32 %v283, %v1679
      %1681 = vmatmul.bf16.gmra.mxu0 %v569
      %v1682 = vpop.f32.mrf.mxu0
      %v1683 = vadd.f32 %v283, %v1682
      %v1684 = vpop.f32.mrf.mxu0
      %v1685 = vadd.f32 %v283, %v1684
      %1686 = vmatmul.bf16.gmra.mxu0 %v572
      %v1687 = vpop.f32.mrf.mxu0
      %v1688 = vadd.f32 %v283, %v1687
      %v1689 = vpop.f32.mrf.mxu0
      %v1690 = vadd.f32 %v283, %v1689
      %1691 = vmatmul.bf16.gmra.mxu0 %v575
      %v1692 = vpop.f32.mrf.mxu0
      %v1693 = vadd.f32 %v283, %v1692
      %v1694 = vpop.f32.mrf.mxu0
      %v1695 = vadd.f32 %v283, %v1694
      %1696 = vdwg.mxu0
      %1697 = vmatpush.bf16.msra.mxu0 0
      %1698 = vmatpush.bf16.msra.mxu0 0
      %1699 = vmatpush.bf16.msra.mxu0 0
      %1700 = vmatpush.bf16.msra.mxu0 0
      %1701 = vmatpush.bf16.msra.mxu0 0
      %1702 = vmatpush.bf16.msra.mxu0 0
      %1703 = vmatpush.bf16.msra.mxu0 %v618
      %1704 = vmatpush.bf16.msra.mxu0 %v492
      %1705 = vmatmul.bf16.gmra.mxu0 %v530
      %v1706 = vpop.f32.mrf.mxu0
      %v1707 = vadd.f32 %v284, %v1706
      %v1708 = vpop.f32.mrf.mxu0
      %v1709 = vadd.f32 %v284, %v1708
      %1710 = vmatmul.bf16.gmra.mxu0 %v533
      %v1711 = vpop.f32.mrf.mxu0
      %v1712 = vadd.f32 %v284, %v1711
      %v1713 = vpop.f32.mrf.mxu0
      %v1714 = vadd.f32 %v284, %v1713
      %1715 = vmatmul.bf16.gmra.mxu0 %v536
      %v1716 = vpop.f32.mrf.mxu0
      %v1717 = vadd.f32 %v284, %v1716
      %v1718 = vpop.f32.mrf.mxu0
      %v1719 = vadd.f32 %v284, %v1718
      %1720 = vmatmul.bf16.gmra.mxu0 %v539
      %v1721 = vpop.f32.mrf.mxu0
      %v1722 = vadd.f32 %v284, %v1721
      %v1723 = vpop.f32.mrf.mxu0
      %v1724 = vadd.f32 %v284, %v1723
      %1725 = vmatmul.bf16.gmra.mxu0 %v542
      %v1726 = vpop.f32.mrf.mxu0
      %v1727 = vadd.f32 %v284, %v1726
      %v1728 = vpop.f32.mrf.mxu0
      %v1729 = vadd.f32 %v284, %v1728
      %1730 = vmatmul.bf16.gmra.mxu0 %v545
      %v1731 = vpop.f32.mrf.mxu0
      %v1732 = vadd.f32 %v284, %v1731
      %v1733 = vpop.f32.mrf.mxu0
      %v1734 = vadd.f32 %v284, %v1733
      %1735 = vmatmul.bf16.gmra.mxu0 %v548
      %v1736 = vpop.f32.mrf.mxu0
      %v1737 = vadd.f32 %v284, %v1736
      %v1738 = vpop.f32.mrf.mxu0
      %v1739 = vadd.f32 %v284, %v1738
      %1740 = vmatmul.bf16.gmra.mxu0 %v551
      %v1741 = vpop.f32.mrf.mxu0
      %v1742 = vadd.f32 %v284, %v1741
      %v1743 = vpop.f32.mrf.mxu0
      %v1744 = vadd.f32 %v284, %v1743
      %1745 = vmatmul.bf16.gmra.mxu0 %v554
      %v1746 = vpop.f32.mrf.mxu0
      %v1747 = vadd.f32 %v284, %v1746
      %v1748 = vpop.f32.mrf.mxu0
      %v1749 = vadd.f32 %v284, %v1748
      %1750 = vmatmul.bf16.gmra.mxu0 %v557
      %v1751 = vpop.f32.mrf.mxu0
      %v1752 = vadd.f32 %v284, %v1751
      %v1753 = vpop.f32.mrf.mxu0
      %v1754 = vadd.f32 %v284, %v1753
      %1755 = vmatmul.bf16.gmra.mxu0 %v560
      %v1756 = vpop.f32.mrf.mxu0
      %v1757 = vadd.f32 %v284, %v1756
      %v1758 = vpop.f32.mrf.mxu0
      %v1759 = vadd.f32 %v284, %v1758
      %1760 = vmatmul.bf16.gmra.mxu0 %v563
      %v1761 = vpop.f32.mrf.mxu0
      %v1762 = vadd.f32 %v284, %v1761
      %v1763 = vpop.f32.mrf.mxu0
      %v1764 = vadd.f32 %v284, %v1763
      %1765 = vmatmul.bf16.gmra.mxu0 %v566
      %v1766 = vpop.f32.mrf.mxu0
      %v1767 = vadd.f32 %v284, %v1766
      %v1768 = vpop.f32.mrf.mxu0
      %v1769 = vadd.f32 %v284, %v1768
      %1770 = vmatmul.bf16.gmra.mxu0 %v569
      %v1771 = vpop.f32.mrf.mxu0
      %v1772 = vadd.f32 %v284, %v1771
      %v1773 = vpop.f32.mrf.mxu0
      %v1774 = vadd.f32 %v284, %v1773
      %1775 = vmatmul.bf16.gmra.mxu0 %v572
      %v1776 = vpop.f32.mrf.mxu0
      %v1777 = vadd.f32 %v284, %v1776
      %v1778 = vpop.f32.mrf.mxu0
      %v1779 = vadd.f32 %v284, %v1778
      %1780 = vmatmul.bf16.gmra.mxu0 %v575
      %v1781 = vpop.f32.mrf.mxu0
      %v1782 = vadd.f32 %v284, %v1781
      %v1783 = vpop.f32.mrf.mxu0
      %v1784 = vadd.f32 %v284, %v1783
      %1785 = vdwg.mxu0
      %1786 = vmatpush.bf16.msra.mxu0 0
      %1787 = vmatpush.bf16.msra.mxu0 0
      %1788 = vmatpush.bf16.msra.mxu0 0
      %1789 = vmatpush.bf16.msra.mxu0 0
      %1790 = vmatpush.bf16.msra.mxu0 0
      %1791 = vmatpush.bf16.msra.mxu0 0
      %1792 = vmatpush.bf16.msra.mxu0 %v621
      %1793 = vmatpush.bf16.msra.mxu0 %v493
      %1794 = vmatmul.bf16.gmra.mxu0 %v530
      %v1795 = vpop.f32.mrf.mxu0
      %v1796 = vadd.f32 %v285, %v1795
      %v1797 = vpop.f32.mrf.mxu0
      %v1798 = vadd.f32 %v285, %v1797
      %1799 = vmatmul.bf16.gmra.mxu0 %v533
      %v1800 = vpop.f32.mrf.mxu0
      %v1801 = vadd.f32 %v285, %v1800
      %v1802 = vpop.f32.mrf.mxu0
      %v1803 = vadd.f32 %v285, %v1802
      %1804 = vmatmul.bf16.gmra.mxu0 %v536
      %v1805 = vpop.f32.mrf.mxu0
      %v1806 = vadd.f32 %v285, %v1805
      %v1807 = vpop.f32.mrf.mxu0
      %v1808 = vadd.f32 %v285, %v1807
      %1809 = vmatmul.bf16.gmra.mxu0 %v539
      %v1810 = vpop.f32.mrf.mxu0
      %v1811 = vadd.f32 %v285, %v1810
      %v1812 = vpop.f32.mrf.mxu0
      %v1813 = vadd.f32 %v285, %v1812
      %1814 = vmatmul.bf16.gmra.mxu0 %v542
      %v1815 = vpop.f32.mrf.mxu0
      %v1816 = vadd.f32 %v285, %v1815
      %v1817 = vpop.f32.mrf.mxu0
      %v1818 = vadd.f32 %v285, %v1817
      %1819 = vmatmul.bf16.gmra.mxu0 %v545
      %v1820 = vpop.f32.mrf.mxu0
      %v1821 = vadd.f32 %v285, %v1820
      %v1822 = vpop.f32.mrf.mxu0
      %v1823 = vadd.f32 %v285, %v1822
      %1824 = vmatmul.bf16.gmra.mxu0 %v548
      %v1825 = vpop.f32.mrf.mxu0
      %v1826 = vadd.f32 %v285, %v1825
      %v1827 = vpop.f32.mrf.mxu0
      %v1828 = vadd.f32 %v285, %v1827
      %1829 = vmatmul.bf16.gmra.mxu0 %v551
      %v1830 = vpop.f32.mrf.mxu0
      %v1831 = vadd.f32 %v285, %v1830
      %v1832 = vpop.f32.mrf.mxu0
      %v1833 = vadd.f32 %v285, %v1832
      %1834 = vmatmul.bf16.gmra.mxu0 %v554
      %v1835 = vpop.f32.mrf.mxu0
      %v1836 = vadd.f32 %v285, %v1835
      %v1837 = vpop.f32.mrf.mxu0
      %v1838 = vadd.f32 %v285, %v1837
      %1839 = vmatmul.bf16.gmra.mxu0 %v557
      %v1840 = vpop.f32.mrf.mxu0
      %v1841 = vadd.f32 %v285, %v1840
      %v1842 = vpop.f32.mrf.mxu0
      %v1843 = vadd.f32 %v285, %v1842
      %1844 = vmatmul.bf16.gmra.mxu0 %v560
      %v1845 = vpop.f32.mrf.mxu0
      %v1846 = vadd.f32 %v285, %v1845
      %v1847 = vpop.f32.mrf.mxu0
      %v1848 = vadd.f32 %v285, %v1847
      %1849 = vmatmul.bf16.gmra.mxu0 %v563
      %v1850 = vpop.f32.mrf.mxu0
      %v1851 = vadd.f32 %v285, %v1850
      %v1852 = vpop.f32.mrf.mxu0
      %v1853 = vadd.f32 %v285, %v1852
      %1854 = vmatmul.bf16.gmra.mxu0 %v566
      %v1855 = vpop.f32.mrf.mxu0
      %v1856 = vadd.f32 %v285, %v1855
      %v1857 = vpop.f32.mrf.mxu0
      %v1858 = vadd.f32 %v285, %v1857
      %1859 = vmatmul.bf16.gmra.mxu0 %v569
      %v1860 = vpop.f32.mrf.mxu0
      %v1861 = vadd.f32 %v285, %v1860
      %v1862 = vpop.f32.mrf.mxu0
      %v1863 = vadd.f32 %v285, %v1862
      %1864 = vmatmul.bf16.gmra.mxu0 %v572
      %v1865 = vpop.f32.mrf.mxu0
      %v1866 = vadd.f32 %v285, %v1865
      %v1867 = vpop.f32.mrf.mxu0
      %v1868 = vadd.f32 %v285, %v1867
      %1869 = vmatmul.bf16.gmra.mxu0 %v575
      %v1870 = vpop.f32.mrf.mxu0
      %v1871 = vadd.f32 %v285, %v1870
      %v1872 = vpop.f32.mrf.mxu0
      %v1873 = vadd.f32 %v285, %v1872
      %1874 = vdwg.mxu0
      %1875 = vmatpush.bf16.msra.mxu0 0
      %1876 = vmatpush.bf16.msra.mxu0 0
      %1877 = vmatpush.bf16.msra.mxu0 0
      %1878 = vmatpush.bf16.msra.mxu0 0
      %1879 = vmatpush.bf16.msra.mxu0 0
      %1880 = vmatpush.bf16.msra.mxu0 0
      %1881 = vmatpush.bf16.msra.mxu0 %v624
      %1882 = vmatpush.bf16.msra.mxu0 %v494
      %1883 = vmatmul.bf16.gmra.mxu0 %v530
      %v1884 = vpop.f32.mrf.mxu0
      %v1885 = vadd.f32 %v286, %v1884
      %v1886 = vpop.f32.mrf.mxu0
      %v1887 = vadd.f32 %v286, %v1886
      %1888 = vmatmul.bf16.gmra.mxu0 %v533
      %v1889 = vpop.f32.mrf.mxu0
      %v1890 = vadd.f32 %v286, %v1889
      %v1891 = vpop.f32.mrf.mxu0
      %v1892 = vadd.f32 %v286, %v1891
      %1893 = vmatmul.bf16.gmra.mxu0 %v536
      %v1894 = vpop.f32.mrf.mxu0
      %v1895 = vadd.f32 %v286, %v1894
      %v1896 = vpop.f32.mrf.mxu0
      %v1897 = vadd.f32 %v286, %v1896
      %1898 = vmatmul.bf16.gmra.mxu0 %v539
      %v1899 = vpop.f32.mrf.mxu0
      %v1900 = vadd.f32 %v286, %v1899
      %v1901 = vpop.f32.mrf.mxu0
      %v1902 = vadd.f32 %v286, %v1901
      %1903 = vmatmul.bf16.gmra.mxu0 %v542
      %v1904 = vpop.f32.mrf.mxu0
      %v1905 = vadd.f32 %v286, %v1904
      %v1906 = vpop.f32.mrf.mxu0
      %v1907 = vadd.f32 %v286, %v1906
      %1908 = vmatmul.bf16.gmra.mxu0 %v545
      %v1909 = vpop.f32.mrf.mxu0
      %v1910 = vadd.f32 %v286, %v1909
      %v1911 = vpop.f32.mrf.mxu0
      %v1912 = vadd.f32 %v286, %v1911
      %1913 = vmatmul.bf16.gmra.mxu0 %v548
      %v1914 = vpop.f32.mrf.mxu0
      %v1915 = vadd.f32 %v286, %v1914
      %v1916 = vpop.f32.mrf.mxu0
      %v1917 = vadd.f32 %v286, %v1916
      %1918 = vmatmul.bf16.gmra.mxu0 %v551
      %v1919 = vpop.f32.mrf.mxu0
      %v1920 = vadd.f32 %v286, %v1919
      %v1921 = vpop.f32.mrf.mxu0
      %v1922 = vadd.f32 %v286, %v1921
      %1923 = vmatmul.bf16.gmra.mxu0 %v554
      %v1924 = vpop.f32.mrf.mxu0
      %v1925 = vadd.f32 %v286, %v1924
      %v1926 = vpop.f32.mrf.mxu0
      %v1927 = vadd.f32 %v286, %v1926
      %1928 = vmatmul.bf16.gmra.mxu0 %v557
      %v1929 = vpop.f32.mrf.mxu0
      %v1930 = vadd.f32 %v286, %v1929
      %v1931 = vpop.f32.mrf.mxu0
      %v1932 = vadd.f32 %v286, %v1931
      %1933 = vmatmul.bf16.gmra.mxu0 %v560
      %v1934 = vpop.f32.mrf.mxu0
      %v1935 = vadd.f32 %v286, %v1934
      %v1936 = vpop.f32.mrf.mxu0
      %v1937 = vadd.f32 %v286, %v1936
      %1938 = vmatmul.bf16.gmra.mxu0 %v563
      %v1939 = vpop.f32.mrf.mxu0
      %v1940 = vadd.f32 %v286, %v1939
      %v1941 = vpop.f32.mrf.mxu0
      %v1942 = vadd.f32 %v286, %v1941
      %1943 = vmatmul.bf16.gmra.mxu0 %v566
      %v1944 = vpop.f32.mrf.mxu0
      %v1945 = vadd.f32 %v286, %v1944
      %v1946 = vpop.f32.mrf.mxu0
      %v1947 = vadd.f32 %v286, %v1946
      %1948 = vmatmul.bf16.gmra.mxu0 %v569
      %v1949 = vpop.f32.mrf.mxu0
      %v1950 = vadd.f32 %v286, %v1949
      %v1951 = vpop.f32.mrf.mxu0
      %v1952 = vadd.f32 %v286, %v1951
      %1953 = vmatmul.bf16.gmra.mxu0 %v572
      %v1954 = vpop.f32.mrf.mxu0
      %v1955 = vadd.f32 %v286, %v1954
      %v1956 = vpop.f32.mrf.mxu0
      %v1957 = vadd.f32 %v286, %v1956
      %1958 = vmatmul.bf16.gmra.mxu0 %v575
      %v1959 = vpop.f32.mrf.mxu0
      %v1960 = vadd.f32 %v286, %v1959
      %v1961 = vpop.f32.mrf.mxu0
      %v1962 = vadd.f32 %v286, %v1961
      %1963 = vdwg.mxu0
      %1964 = vmatpush.bf16.msra.mxu0 0
      %1965 = vmatpush.bf16.msra.mxu0 0
      %1966 = vmatpush.bf16.msra.mxu0 0
      %1967 = vmatpush.bf16.msra.mxu0 0
      %1968 = vmatpush.bf16.msra.mxu0 0
      %1969 = vmatpush.bf16.msra.mxu0 0
      %1970 = vmatpush.bf16.msra.mxu0 %v627
      %1971 = vmatpush.bf16.msra.mxu0 %v495
      %1972 = vmatmul.bf16.gmra.mxu0 %v530
      %v1973 = vpop.f32.mrf.mxu0
      %v1974 = vadd.f32 %v287, %v1973
      %v1975 = vpop.f32.mrf.mxu0
      %v1976 = vadd.f32 %v287, %v1975
      %1977 = vmatmul.bf16.gmra.mxu0 %v533
      %v1978 = vpop.f32.mrf.mxu0
      %v1979 = vadd.f32 %v287, %v1978
      %v1980 = vpop.f32.mrf.mxu0
      %v1981 = vadd.f32 %v287, %v1980
      %1982 = vmatmul.bf16.gmra.mxu0 %v536
      %v1983 = vpop.f32.mrf.mxu0
      %v1984 = vadd.f32 %v287, %v1983
      %v1985 = vpop.f32.mrf.mxu0
      %v1986 = vadd.f32 %v287, %v1985
      %1987 = vmatmul.bf16.gmra.mxu0 %v539
      %v1988 = vpop.f32.mrf.mxu0
      %v1989 = vadd.f32 %v287, %v1988
      %v1990 = vpop.f32.mrf.mxu0
      %v1991 = vadd.f32 %v287, %v1990
      %1992 = vmatmul.bf16.gmra.mxu0 %v542
      %v1993 = vpop.f32.mrf.mxu0
      %v1994 = vadd.f32 %v287, %v1993
      %v1995 = vpop.f32.mrf.mxu0
      %v1996 = vadd.f32 %v287, %v1995
      %1997 = vmatmul.bf16.gmra.mxu0 %v545
      %v1998 = vpop.f32.mrf.mxu0
      %v1999 = vadd.f32 %v287, %v1998
      %v2000 = vpop.f32.mrf.mxu0
      %v2001 = vadd.f32 %v287, %v2000
      %2002 = vmatmul.bf16.gmra.mxu0 %v548
      %v2003 = vpop.f32.mrf.mxu0
      %v2004 = vadd.f32 %v287, %v2003
      %v2005 = vpop.f32.mrf.mxu0
      %v2006 = vadd.f32 %v287, %v2005
      %2007 = vmatmul.bf16.gmra.mxu0 %v551
      %v2008 = vpop.f32.mrf.mxu0
      %v2009 = vadd.f32 %v287, %v2008
      %v2010 = vpop.f32.mrf.mxu0
      %v2011 = vadd.f32 %v287, %v2010
      %2012 = vmatmul.bf16.gmra.mxu0 %v554
      %v2013 = vpop.f32.mrf.mxu0
      %v2014 = vadd.f32 %v287, %v2013
      %v2015 = vpop.f32.mrf.mxu0
      %v2016 = vadd.f32 %v287, %v2015
      %2017 = vmatmul.bf16.gmra.mxu0 %v557
      %v2018 = vpop.f32.mrf.mxu0
      %v2019 = vadd.f32 %v287, %v2018
      %v2020 = vpop.f32.mrf.mxu0
      %v2021 = vadd.f32 %v287, %v2020
      %2022 = vmatmul.bf16.gmra.mxu0 %v560
      %v2023 = vpop.f32.mrf.mxu0
      %v2024 = vadd.f32 %v287, %v2023
      %v2025 = vpop.f32.mrf.mxu0
      %v2026 = vadd.f32 %v287, %v2025
      %2027 = vmatmul.bf16.gmra.mxu0 %v563
      %v2028 = vpop.f32.mrf.mxu0
      %v2029 = vadd.f32 %v287, %v2028
      %v2030 = vpop.f32.mrf.mxu0
      %v2031 = vadd.f32 %v287, %v2030
      %2032 = vmatmul.bf16.gmra.mxu0 %v566
      %v2033 = vpop.f32.mrf.mxu0
      %v2034 = vadd.f32 %v287, %v2033
      %v2035 = vpop.f32.mrf.mxu0
      %v2036 = vadd.f32 %v287, %v2035
      %2037 = vmatmul.bf16.gmra.mxu0 %v569
      %v2038 = vpop.f32.mrf.mxu0
      %v2039 = vadd.f32 %v287, %v2038
      %v2040 = vpop.f32.mrf.mxu0
      %v2041 = vadd.f32 %v287, %v2040
      %2042 = vmatmul.bf16.gmra.mxu0 %v572
      %v2043 = vpop.f32.mrf.mxu0
      %v2044 = vadd.f32 %v287, %v2043
      %v2045 = vpop.f32.mrf.mxu0
      %v2046 = vadd.f32 %v287, %v2045
      %2047 = vmatmul.bf16.gmra.mxu0 %v575
      %v2048 = vpop.f32.mrf.mxu0
      %v2049 = vadd.f32 %v287, %v2048
      %v2050 = vpop.f32.mrf.mxu0
      %v2051 = vadd.f32 %v287, %v2050
      %2052 = vdwg.mxu0
      %v2053 = vmax.f32 %v639, 0.0
      %v2054 = vmax.f32 %v728, 0.0
      %v2055 = vmax.f32 %v817, 0.0
      %v2056 = vmax.f32 %v906, 0.0
      %v2057 = vmax.f32 %v995, 0.0
      %v2058 = vmax.f32 %v1084, 0.0
      %v2059 = vmax.f32 %v1173, 0.0
      %v2060 = vmax.f32 %v1262, 0.0
      %v2061 = vmax.f32 %v1351, 0.0
      %v2062 = vmax.f32 %v1440, 0.0
      %v2063 = vmax.f32 %v1529, 0.0
      %v2064 = vmax.f32 %v1618, 0.0
      %v2065 = vmax.f32 %v1707, 0.0
      %v2066 = vmax.f32 %v1796, 0.0
      %v2067 = vmax.f32 %v1885, 0.0
      %v2068 = vmax.f32 %v1974, 0.0
      %v2069 = vmax.f32 %v641, 0.0
      %v2070 = vmax.f32 %v730, 0.0
      %v2071 = vmax.f32 %v819, 0.0
      %v2072 = vmax.f32 %v908, 0.0
      %v2073 = vmax.f32 %v997, 0.0
      %v2074 = vmax.f32 %v1086, 0.0
      %v2075 = vmax.f32 %v1175, 0.0
      %v2076 = vmax.f32 %v1264, 0.0
      %v2077 = vmax.f32 %v1353, 0.0
      %v2078 = vmax.f32 %v1442, 0.0
      %v2079 = vmax.f32 %v1531, 0.0
      %v2080 = vmax.f32 %v1620, 0.0
      %v2081 = vmax.f32 %v1709, 0.0
      %v2082 = vmax.f32 %v1798, 0.0
      %v2083 = vmax.f32 %v1887, 0.0
      %v2084 = vmax.f32 %v1976, 0.0
      %v2085 = vmax.f32 %v644, 0.0
      %v2086 = vmax.f32 %v733, 0.0
      %v2087 = vmax.f32 %v822, 0.0
      %v2088 = vmax.f32 %v911, 0.0
      %v2089 = vmax.f32 %v1000, 0.0
      %v2090 = vmax.f32 %v1089, 0.0
      %v2091 = vmax.f32 %v1178, 0.0
      %v2092 = vmax.f32 %v1267, 0.0
      %v2093 = vmax.f32 %v1356, 0.0
      %v2094 = vmax.f32 %v1445, 0.0
      %v2095 = vmax.f32 %v1534, 0.0
      %v2096 = vmax.f32 %v1623, 0.0
      %v2097 = vmax.f32 %v1712, 0.0
      %v2098 = vmax.f32 %v1801, 0.0
      %v2099 = vmax.f32 %v1890, 0.0
      %v2100 = vmax.f32 %v1979, 0.0
      %v2101 = vmax.f32 %v646, 0.0
      %v2102 = vmax.f32 %v735, 0.0
      %v2103 = vmax.f32 %v824, 0.0
      %v2104 = vmax.f32 %v913, 0.0
      %v2105 = vmax.f32 %v1002, 0.0
      %v2106 = vmax.f32 %v1091, 0.0
      %v2107 = vmax.f32 %v1180, 0.0
      %v2108 = vmax.f32 %v1269, 0.0
      %v2109 = vmax.f32 %v1358, 0.0
      %v2110 = vmax.f32 %v1447, 0.0
      %v2111 = vmax.f32 %v1536, 0.0
      %v2112 = vmax.f32 %v1625, 0.0
      %v2113 = vmax.f32 %v1714, 0.0
      %v2114 = vmax.f32 %v1803, 0.0
      %v2115 = vmax.f32 %v1892, 0.0
      %v2116 = vmax.f32 %v1981, 0.0
      %v2117 = vmax.f32 %v649, 0.0
      %v2118 = vmax.f32 %v738, 0.0
      %v2119 = vmax.f32 %v827, 0.0
      %v2120 = vmax.f32 %v916, 0.0
      %v2121 = vmax.f32 %v1005, 0.0
      %v2122 = vmax.f32 %v1094, 0.0
      %v2123 = vmax.f32 %v1183, 0.0
      %v2124 = vmax.f32 %v1272, 0.0
      %v2125 = vmax.f32 %v1361, 0.0
      %v2126 = vmax.f32 %v1450, 0.0
      %v2127 = vmax.f32 %v1539, 0.0
      %v2128 = vmax.f32 %v1628, 0.0
      %v2129 = vmax.f32 %v1717, 0.0
      %v2130 = vmax.f32 %v1806, 0.0
      %v2131 = vmax.f32 %v1895, 0.0
      %v2132 = vmax.f32 %v1984, 0.0
      %v2133 = vmax.f32 %v651, 0.0
      %v2134 = vmax.f32 %v740, 0.0
      %v2135 = vmax.f32 %v829, 0.0
      %v2136 = vmax.f32 %v918, 0.0
      %v2137 = vmax.f32 %v1007, 0.0
      %v2138 = vmax.f32 %v1096, 0.0
      %v2139 = vmax.f32 %v1185, 0.0
      %v2140 = vmax.f32 %v1274, 0.0
      %v2141 = vmax.f32 %v1363, 0.0
      %v2142 = vmax.f32 %v1452, 0.0
      %v2143 = vmax.f32 %v1541, 0.0
      %v2144 = vmax.f32 %v1630, 0.0
      %v2145 = vmax.f32 %v1719, 0.0
      %v2146 = vmax.f32 %v1808, 0.0
      %v2147 = vmax.f32 %v1897, 0.0
      %v2148 = vmax.f32 %v1986, 0.0
      %v2149 = vmax.f32 %v654, 0.0
      %v2150 = vmax.f32 %v743, 0.0
      %v2151 = vmax.f32 %v832, 0.0
      %v2152 = vmax.f32 %v921, 0.0
      %v2153 = vmax.f32 %v1010, 0.0
      %v2154 = vmax.f32 %v1099, 0.0
      %v2155 = vmax.f32 %v1188, 0.0
      %v2156 = vmax.f32 %v1277, 0.0
      %v2157 = vmax.f32 %v1366, 0.0
      %v2158 = vmax.f32 %v1455, 0.0
      %v2159 = vmax.f32 %v1544, 0.0
      %v2160 = vmax.f32 %v1633, 0.0
      %v2161 = vmax.f32 %v1722, 0.0
      %v2162 = vmax.f32 %v1811, 0.0
      %v2163 = vmax.f32 %v1900, 0.0
      %v2164 = vmax.f32 %v1989, 0.0
      %v2165 = vmax.f32 %v656, 0.0
      %v2166 = vmax.f32 %v745, 0.0
      %v2167 = vmax.f32 %v834, 0.0
      %v2168 = vmax.f32 %v923, 0.0
      %v2169 = vmax.f32 %v1012, 0.0
      %v2170 = vmax.f32 %v1101, 0.0
      %v2171 = vmax.f32 %v1190, 0.0
      %v2172 = vmax.f32 %v1279, 0.0
      %v2173 = vmax.f32 %v1368, 0.0
      %v2174 = vmax.f32 %v1457, 0.0
      %v2175 = vmax.f32 %v1546, 0.0
      %v2176 = vmax.f32 %v1635, 0.0
      %v2177 = vmax.f32 %v1724, 0.0
      %v2178 = vmax.f32 %v1813, 0.0
      %v2179 = vmax.f32 %v1902, 0.0
      %v2180 = vmax.f32 %v1991, 0.0
      %v2181 = vmax.f32 %v659, 0.0
      %v2182 = vmax.f32 %v748, 0.0
      %v2183 = vmax.f32 %v837, 0.0
      %v2184 = vmax.f32 %v926, 0.0
      %v2185 = vmax.f32 %v1015, 0.0
      %v2186 = vmax.f32 %v1104, 0.0
      %v2187 = vmax.f32 %v1193, 0.0
      %v2188 = vmax.f32 %v1282, 0.0
      %v2189 = vmax.f32 %v1371, 0.0
      %v2190 = vmax.f32 %v1460, 0.0
      %v2191 = vmax.f32 %v1549, 0.0
      %v2192 = vmax.f32 %v1638, 0.0
      %v2193 = vmax.f32 %v1727, 0.0
      %v2194 = vmax.f32 %v1816, 0.0
      %v2195 = vmax.f32 %v1905, 0.0
      %v2196 = vmax.f32 %v1994, 0.0
      %v2197 = vmax.f32 %v661, 0.0
      %v2198 = vmax.f32 %v750, 0.0
      %v2199 = vmax.f32 %v839, 0.0
      %v2200 = vmax.f32 %v928, 0.0
      %v2201 = vmax.f32 %v1017, 0.0
      %v2202 = vmax.f32 %v1106, 0.0
      %v2203 = vmax.f32 %v1195, 0.0
      %v2204 = vmax.f32 %v1284, 0.0
      %v2205 = vmax.f32 %v1373, 0.0
      %v2206 = vmax.f32 %v1462, 0.0
      %v2207 = vmax.f32 %v1551, 0.0
      %v2208 = vmax.f32 %v1640, 0.0
      %v2209 = vmax.f32 %v1729, 0.0
      %v2210 = vmax.f32 %v1818, 0.0
      %v2211 = vmax.f32 %v1907, 0.0
      %v2212 = vmax.f32 %v1996, 0.0
      %v2213 = vmax.f32 %v664, 0.0
      %v2214 = vmax.f32 %v753, 0.0
      %v2215 = vmax.f32 %v842, 0.0
      %v2216 = vmax.f32 %v931, 0.0
      %v2217 = vmax.f32 %v1020, 0.0
      %v2218 = vmax.f32 %v1109, 0.0
      %v2219 = vmax.f32 %v1198, 0.0
      %v2220 = vmax.f32 %v1287, 0.0
      %v2221 = vmax.f32 %v1376, 0.0
      %v2222 = vmax.f32 %v1465, 0.0
      %v2223 = vmax.f32 %v1554, 0.0
      %v2224 = vmax.f32 %v1643, 0.0
      %v2225 = vmax.f32 %v1732, 0.0
      %v2226 = vmax.f32 %v1821, 0.0
      %v2227 = vmax.f32 %v1910, 0.0
      %v2228 = vmax.f32 %v1999, 0.0
      %v2229 = vmax.f32 %v666, 0.0
      %v2230 = vmax.f32 %v755, 0.0
      %v2231 = vmax.f32 %v844, 0.0
      %v2232 = vmax.f32 %v933, 0.0
      %v2233 = vmax.f32 %v1022, 0.0
      %v2234 = vmax.f32 %v1111, 0.0
      %v2235 = vmax.f32 %v1200, 0.0
      %v2236 = vmax.f32 %v1289, 0.0
      %v2237 = vmax.f32 %v1378, 0.0
      %v2238 = vmax.f32 %v1467, 0.0
      %v2239 = vmax.f32 %v1556, 0.0
      %v2240 = vmax.f32 %v1645, 0.0
      %v2241 = vmax.f32 %v1734, 0.0
      %v2242 = vmax.f32 %v1823, 0.0
      %v2243 = vmax.f32 %v1912, 0.0
      %v2244 = vmax.f32 %v2001, 0.0
      %v2245 = vmax.f32 %v669, 0.0
      %v2246 = vmax.f32 %v758, 0.0
      %v2247 = vmax.f32 %v847, 0.0
      %v2248 = vmax.f32 %v936, 0.0
      %v2249 = vmax.f32 %v1025, 0.0
      %v2250 = vmax.f32 %v1114, 0.0
      %v2251 = vmax.f32 %v1203, 0.0
      %v2252 = vmax.f32 %v1292, 0.0
      %v2253 = vmax.f32 %v1381, 0.0
      %v2254 = vmax.f32 %v1470, 0.0
      %v2255 = vmax.f32 %v1559, 0.0
      %v2256 = vmax.f32 %v1648, 0.0
      %v2257 = vmax.f32 %v1737, 0.0
      %v2258 = vmax.f32 %v1826, 0.0
      %v2259 = vmax.f32 %v1915, 0.0
      %v2260 = vmax.f32 %v2004, 0.0
      %v2261 = vmax.f32 %v671, 0.0
      %v2262 = vmax.f32 %v760, 0.0
      %v2263 = vmax.f32 %v849, 0.0
      %v2264 = vmax.f32 %v938, 0.0
      %v2265 = vmax.f32 %v1027, 0.0
      %v2266 = vmax.f32 %v1116, 0.0
      %v2267 = vmax.f32 %v1205, 0.0
      %v2268 = vmax.f32 %v1294, 0.0
      %v2269 = vmax.f32 %v1383, 0.0
      %v2270 = vmax.f32 %v1472, 0.0
      %v2271 = vmax.f32 %v1561, 0.0
      %v2272 = vmax.f32 %v1650, 0.0
      %v2273 = vmax.f32 %v1739, 0.0
      %v2274 = vmax.f32 %v1828, 0.0
      %v2275 = vmax.f32 %v1917, 0.0
      %v2276 = vmax.f32 %v2006, 0.0
      %v2277 = vmax.f32 %v674, 0.0
      %v2278 = vmax.f32 %v763, 0.0
      %v2279 = vmax.f32 %v852, 0.0
      %v2280 = vmax.f32 %v941, 0.0
      %v2281 = vmax.f32 %v1030, 0.0
      %v2282 = vmax.f32 %v1119, 0.0
      %v2283 = vmax.f32 %v1208, 0.0
      %v2284 = vmax.f32 %v1297, 0.0
      %v2285 = vmax.f32 %v1386, 0.0
      %v2286 = vmax.f32 %v1475, 0.0
      %v2287 = vmax.f32 %v1564, 0.0
      %v2288 = vmax.f32 %v1653, 0.0
      %v2289 = vmax.f32 %v1742, 0.0
      %v2290 = vmax.f32 %v1831, 0.0
      %v2291 = vmax.f32 %v1920, 0.0
      %v2292 = vmax.f32 %v2009, 0.0
      %v2293 = vmax.f32 %v676, 0.0
      %v2294 = vmax.f32 %v765, 0.0
      %v2295 = vmax.f32 %v854, 0.0
      %v2296 = vmax.f32 %v943, 0.0
      %v2297 = vmax.f32 %v1032, 0.0
      %v2298 = vmax.f32 %v1121, 0.0
      %v2299 = vmax.f32 %v1210, 0.0
      %v2300 = vmax.f32 %v1299, 0.0
      %v2301 = vmax.f32 %v1388, 0.0
      %v2302 = vmax.f32 %v1477, 0.0
      %v2303 = vmax.f32 %v1566, 0.0
      %v2304 = vmax.f32 %v1655, 0.0
      %v2305 = vmax.f32 %v1744, 0.0
      %v2306 = vmax.f32 %v1833, 0.0
      %v2307 = vmax.f32 %v1922, 0.0
      %v2308 = vmax.f32 %v2011, 0.0
      %v2309 = vmax.f32 %v679, 0.0
      %v2310 = vmax.f32 %v768, 0.0
      %v2311 = vmax.f32 %v857, 0.0
      %v2312 = vmax.f32 %v946, 0.0
      %v2313 = vmax.f32 %v1035, 0.0
      %v2314 = vmax.f32 %v1124, 0.0
      %v2315 = vmax.f32 %v1213, 0.0
      %v2316 = vmax.f32 %v1302, 0.0
      %v2317 = vmax.f32 %v1391, 0.0
      %v2318 = vmax.f32 %v1480, 0.0
      %v2319 = vmax.f32 %v1569, 0.0
      %v2320 = vmax.f32 %v1658, 0.0
      %v2321 = vmax.f32 %v1747, 0.0
      %v2322 = vmax.f32 %v1836, 0.0
      %v2323 = vmax.f32 %v1925, 0.0
      %v2324 = vmax.f32 %v2014, 0.0
      %v2325 = vmax.f32 %v681, 0.0
      %v2326 = vmax.f32 %v770, 0.0
      %v2327 = vmax.f32 %v859, 0.0
      %v2328 = vmax.f32 %v948, 0.0
      %v2329 = vmax.f32 %v1037, 0.0
      %v2330 = vmax.f32 %v1126, 0.0
      %v2331 = vmax.f32 %v1215, 0.0
      %v2332 = vmax.f32 %v1304, 0.0
      %v2333 = vmax.f32 %v1393, 0.0
      %v2334 = vmax.f32 %v1482, 0.0
      %v2335 = vmax.f32 %v1571, 0.0
      %v2336 = vmax.f32 %v1660, 0.0
      %v2337 = vmax.f32 %v1749, 0.0
      %v2338 = vmax.f32 %v1838, 0.0
      %v2339 = vmax.f32 %v1927, 0.0
      %v2340 = vmax.f32 %v2016, 0.0
      %v2341 = vmax.f32 %v684, 0.0
      %v2342 = vmax.f32 %v773, 0.0
      %v2343 = vmax.f32 %v862, 0.0
      %v2344 = vmax.f32 %v951, 0.0
      %v2345 = vmax.f32 %v1040, 0.0
      %v2346 = vmax.f32 %v1129, 0.0
      %v2347 = vmax.f32 %v1218, 0.0
      %v2348 = vmax.f32 %v1307, 0.0
      %v2349 = vmax.f32 %v1396, 0.0
      %v2350 = vmax.f32 %v1485, 0.0
      %v2351 = vmax.f32 %v1574, 0.0
      %v2352 = vmax.f32 %v1663, 0.0
      %v2353 = vmax.f32 %v1752, 0.0
      %v2354 = vmax.f32 %v1841, 0.0
      %v2355 = vmax.f32 %v1930, 0.0
      %v2356 = vmax.f32 %v2019, 0.0
      %v2357 = vmax.f32 %v686, 0.0
      %v2358 = vmax.f32 %v775, 0.0
      %v2359 = vmax.f32 %v864, 0.0
      %v2360 = vmax.f32 %v953, 0.0
      %v2361 = vmax.f32 %v1042, 0.0
      %v2362 = vmax.f32 %v1131, 0.0
      %v2363 = vmax.f32 %v1220, 0.0
      %v2364 = vmax.f32 %v1309, 0.0
      %v2365 = vmax.f32 %v1398, 0.0
      %v2366 = vmax.f32 %v1487, 0.0
      %v2367 = vmax.f32 %v1576, 0.0
      %v2368 = vmax.f32 %v1665, 0.0
      %v2369 = vmax.f32 %v1754, 0.0
      %v2370 = vmax.f32 %v1843, 0.0
      %v2371 = vmax.f32 %v1932, 0.0
      %v2372 = vmax.f32 %v2021, 0.0
      %v2373 = vmax.f32 %v689, 0.0
      %v2374 = vmax.f32 %v778, 0.0
      %v2375 = vmax.f32 %v867, 0.0
      %v2376 = vmax.f32 %v956, 0.0
      %v2377 = vmax.f32 %v1045, 0.0
      %v2378 = vmax.f32 %v1134, 0.0
      %v2379 = vmax.f32 %v1223, 0.0
      %v2380 = vmax.f32 %v1312, 0.0
      %v2381 = vmax.f32 %v1401, 0.0
      %v2382 = vmax.f32 %v1490, 0.0
      %v2383 = vmax.f32 %v1579, 0.0
      %v2384 = vmax.f32 %v1668, 0.0
      %v2385 = vmax.f32 %v1757, 0.0
      %v2386 = vmax.f32 %v1846, 0.0
      %v2387 = vmax.f32 %v1935, 0.0
      %v2388 = vmax.f32 %v2024, 0.0
      %v2389 = vmax.f32 %v691, 0.0
      %v2390 = vmax.f32 %v780, 0.0
      %v2391 = vmax.f32 %v869, 0.0
      %v2392 = vmax.f32 %v958, 0.0
      %v2393 = vmax.f32 %v1047, 0.0
      %v2394 = vmax.f32 %v1136, 0.0
      %v2395 = vmax.f32 %v1225, 0.0
      %v2396 = vmax.f32 %v1314, 0.0
      %v2397 = vmax.f32 %v1403, 0.0
      %v2398 = vmax.f32 %v1492, 0.0
      %v2399 = vmax.f32 %v1581, 0.0
      %v2400 = vmax.f32 %v1670, 0.0
      %v2401 = vmax.f32 %v1759, 0.0
      %v2402 = vmax.f32 %v1848, 0.0
      %v2403 = vmax.f32 %v1937, 0.0
      %v2404 = vmax.f32 %v2026, 0.0
      %v2405 = vmax.f32 %v694, 0.0
      %v2406 = vmax.f32 %v783, 0.0
      %v2407 = vmax.f32 %v872, 0.0
      %v2408 = vmax.f32 %v961, 0.0
      %v2409 = vmax.f32 %v1050, 0.0
      %v2410 = vmax.f32 %v1139, 0.0
      %v2411 = vmax.f32 %v1228, 0.0
      %v2412 = vmax.f32 %v1317, 0.0
      %v2413 = vmax.f32 %v1406, 0.0
      %v2414 = vmax.f32 %v1495, 0.0
      %v2415 = vmax.f32 %v1584, 0.0
      %v2416 = vmax.f32 %v1673, 0.0
      %v2417 = vmax.f32 %v1762, 0.0
      %v2418 = vmax.f32 %v1851, 0.0
      %v2419 = vmax.f32 %v1940, 0.0
      %v2420 = vmax.f32 %v2029, 0.0
      %v2421 = vmax.f32 %v696, 0.0
      %v2422 = vmax.f32 %v785, 0.0
      %v2423 = vmax.f32 %v874, 0.0
      %v2424 = vmax.f32 %v963, 0.0
      %v2425 = vmax.f32 %v1052, 0.0
      %v2426 = vmax.f32 %v1141, 0.0
      %v2427 = vmax.f32 %v1230, 0.0
      %v2428 = vmax.f32 %v1319, 0.0
      %v2429 = vmax.f32 %v1408, 0.0
      %v2430 = vmax.f32 %v1497, 0.0
      %v2431 = vmax.f32 %v1586, 0.0
      %v2432 = vmax.f32 %v1675, 0.0
      %v2433 = vmax.f32 %v1764, 0.0
      %v2434 = vmax.f32 %v1853, 0.0
      %v2435 = vmax.f32 %v1942, 0.0
      %v2436 = vmax.f32 %v2031, 0.0
      %v2437 = vmax.f32 %v699, 0.0
      %v2438 = vmax.f32 %v788, 0.0
      %v2439 = vmax.f32 %v877, 0.0
      %v2440 = vmax.f32 %v966, 0.0
      %v2441 = vmax.f32 %v1055, 0.0
      %v2442 = vmax.f32 %v1144, 0.0
      %v2443 = vmax.f32 %v1233, 0.0
      %v2444 = vmax.f32 %v1322, 0.0
      %v2445 = vmax.f32 %v1411, 0.0
      %v2446 = vmax.f32 %v1500, 0.0
      %v2447 = vmax.f32 %v1589, 0.0
      %v2448 = vmax.f32 %v1678, 0.0
      %v2449 = vmax.f32 %v1767, 0.0
      %v2450 = vmax.f32 %v1856, 0.0
      %v2451 = vmax.f32 %v1945, 0.0
      %v2452 = vmax.f32 %v2034, 0.0
      %v2453 = vmax.f32 %v701, 0.0
      %v2454 = vmax.f32 %v790, 0.0
      %v2455 = vmax.f32 %v879, 0.0
      %v2456 = vmax.f32 %v968, 0.0
      %v2457 = vmax.f32 %v1057, 0.0
      %v2458 = vmax.f32 %v1146, 0.0
      %v2459 = vmax.f32 %v1235, 0.0
      %v2460 = vmax.f32 %v1324, 0.0
      %v2461 = vmax.f32 %v1413, 0.0
      %v2462 = vmax.f32 %v1502, 0.0
      %v2463 = vmax.f32 %v1591, 0.0
      %v2464 = vmax.f32 %v1680, 0.0
      %v2465 = vmax.f32 %v1769, 0.0
      %v2466 = vmax.f32 %v1858, 0.0
      %v2467 = vmax.f32 %v1947, 0.0
      %v2468 = vmax.f32 %v2036, 0.0
      %v2469 = vmax.f32 %v704, 0.0
      %v2470 = vmax.f32 %v793, 0.0
      %v2471 = vmax.f32 %v882, 0.0
      %v2472 = vmax.f32 %v971, 0.0
      %v2473 = vmax.f32 %v1060, 0.0
      %v2474 = vmax.f32 %v1149, 0.0
      %v2475 = vmax.f32 %v1238, 0.0
      %v2476 = vmax.f32 %v1327, 0.0
      %v2477 = vmax.f32 %v1416, 0.0
      %v2478 = vmax.f32 %v1505, 0.0
      %v2479 = vmax.f32 %v1594, 0.0
      %v2480 = vmax.f32 %v1683, 0.0
      %v2481 = vmax.f32 %v1772, 0.0
      %v2482 = vmax.f32 %v1861, 0.0
      %v2483 = vmax.f32 %v1950, 0.0
      %v2484 = vmax.f32 %v2039, 0.0
      %v2485 = vmax.f32 %v706, 0.0
      %v2486 = vmax.f32 %v795, 0.0
      %v2487 = vmax.f32 %v884, 0.0
      %v2488 = vmax.f32 %v973, 0.0
      %v2489 = vmax.f32 %v1062, 0.0
      %v2490 = vmax.f32 %v1151, 0.0
      %v2491 = vmax.f32 %v1240, 0.0
      %v2492 = vmax.f32 %v1329, 0.0
      %v2493 = vmax.f32 %v1418, 0.0
      %v2494 = vmax.f32 %v1507, 0.0
      %v2495 = vmax.f32 %v1596, 0.0
      %v2496 = vmax.f32 %v1685, 0.0
      %v2497 = vmax.f32 %v1774, 0.0
      %v2498 = vmax.f32 %v1863, 0.0
      %v2499 = vmax.f32 %v1952, 0.0
      %v2500 = vmax.f32 %v2041, 0.0
      %v2501 = vmax.f32 %v709, 0.0
      %v2502 = vmax.f32 %v798, 0.0
      %v2503 = vmax.f32 %v887, 0.0
      %v2504 = vmax.f32 %v976, 0.0
      %v2505 = vmax.f32 %v1065, 0.0
      %v2506 = vmax.f32 %v1154, 0.0
      %v2507 = vmax.f32 %v1243, 0.0
      %v2508 = vmax.f32 %v1332, 0.0
      %v2509 = vmax.f32 %v1421, 0.0
      %v2510 = vmax.f32 %v1510, 0.0
      %v2511 = vmax.f32 %v1599, 0.0
      %v2512 = vmax.f32 %v1688, 0.0
      %v2513 = vmax.f32 %v1777, 0.0
      %v2514 = vmax.f32 %v1866, 0.0
      %v2515 = vmax.f32 %v1955, 0.0
      %v2516 = vmax.f32 %v2044, 0.0
      %v2517 = vmax.f32 %v711, 0.0
      %v2518 = vmax.f32 %v800, 0.0
      %v2519 = vmax.f32 %v889, 0.0
      %v2520 = vmax.f32 %v978, 0.0
      %v2521 = vmax.f32 %v1067, 0.0
      %v2522 = vmax.f32 %v1156, 0.0
      %v2523 = vmax.f32 %v1245, 0.0
      %v2524 = vmax.f32 %v1334, 0.0
      %v2525 = vmax.f32 %v1423, 0.0
      %v2526 = vmax.f32 %v1512, 0.0
      %v2527 = vmax.f32 %v1601, 0.0
      %v2528 = vmax.f32 %v1690, 0.0
      %v2529 = vmax.f32 %v1779, 0.0
      %v2530 = vmax.f32 %v1868, 0.0
      %v2531 = vmax.f32 %v1957, 0.0
      %v2532 = vmax.f32 %v2046, 0.0
      %v2533 = vmax.f32 %v714, 0.0
      %v2534 = vmax.f32 %v803, 0.0
      %v2535 = vmax.f32 %v892, 0.0
      %v2536 = vmax.f32 %v981, 0.0
      %v2537 = vmax.f32 %v1070, 0.0
      %v2538 = vmax.f32 %v1159, 0.0
      %v2539 = vmax.f32 %v1248, 0.0
      %v2540 = vmax.f32 %v1337, 0.0
      %v2541 = vmax.f32 %v1426, 0.0
      %v2542 = vmax.f32 %v1515, 0.0
      %v2543 = vmax.f32 %v1604, 0.0
      %v2544 = vmax.f32 %v1693, 0.0
      %v2545 = vmax.f32 %v1782, 0.0
      %v2546 = vmax.f32 %v1871, 0.0
      %v2547 = vmax.f32 %v1960, 0.0
      %v2548 = vmax.f32 %v2049, 0.0
      %v2549 = vmax.f32 %v716, 0.0
      %v2550 = vmax.f32 %v805, 0.0
      %v2551 = vmax.f32 %v894, 0.0
      %v2552 = vmax.f32 %v983, 0.0
      %v2553 = vmax.f32 %v1072, 0.0
      %v2554 = vmax.f32 %v1161, 0.0
      %v2555 = vmax.f32 %v1250, 0.0
      %v2556 = vmax.f32 %v1339, 0.0
      %v2557 = vmax.f32 %v1428, 0.0
      %v2558 = vmax.f32 %v1517, 0.0
      %v2559 = vmax.f32 %v1606, 0.0
      %v2560 = vmax.f32 %v1695, 0.0
      %v2561 = vmax.f32 %v1784, 0.0
      %v2562 = vmax.f32 %v1873, 0.0
      %v2563 = vmax.f32 %v1962, 0.0
      %v2564 = vmax.f32 %v2051, 0.0
      %v2565 = vld [vmem:[%s196] sm:$0xff]
      %v2566 = vld [vmem:[%s196 + $0x8] sm:$0xff]
      %v2567 = vadd.f32 %v2053, %v2069
      %v2568 = vadd.f32 %v2567, %v2085
      %v2569 = vadd.f32 %v2568, %v2101
      %v2570 = vadd.f32 %v2569, %v2117
      %v2571 = vadd.f32 %v2570, %v2133
      %v2572 = vadd.f32 %v2571, %v2149
      %v2573 = vadd.f32 %v2572, %v2165
      %v2574 = vadd.f32 %v2573, %v2181
      %v2575 = vadd.f32 %v2574, %v2197
      %v2576 = vadd.f32 %v2575, %v2213
      %v2577 = vadd.f32 %v2576, %v2229
      %v2578 = vadd.f32 %v2577, %v2245
      %v2579 = vadd.f32 %v2578, %v2261
      %v2580 = vadd.f32 %v2579, %v2277
      %v2581 = vadd.f32 %v2580, %v2293
      %v2582 = vadd.f32 %v2581, %v2309
      %v2583 = vadd.f32 %v2582, %v2325
      %v2584 = vadd.f32 %v2583, %v2341
      %v2585 = vadd.f32 %v2584, %v2357
      %v2586 = vadd.f32 %v2585, %v2373
      %v2587 = vadd.f32 %v2586, %v2389
      %v2588 = vadd.f32 %v2587, %v2405
      %v2589 = vadd.f32 %v2588, %v2421
      %v2590 = vadd.f32 %v2589, %v2437
      %v2591 = vadd.f32 %v2590, %v2453
      %v2592 = vadd.f32 %v2591, %v2469
      %v2593 = vadd.f32 %v2592, %v2485
      %v2594 = vadd.f32 %v2593, %v2501
      %v2595 = vadd.f32 %v2594, %v2517
      %v2596 = vadd.f32 %v2595, %v2533
      %v2597 = vadd.f32 %v2596, %v2549
      %v2598 = vrot.slane %v2597, 4
      %v2599 = vadd.f32 %v2597, %v2598
      %v2600 = vrot.slane %v2599, 2
      %v2601 = vadd.f32 %v2599, %v2600
      %v2602 = vrot.slane %v2601, 1
      %v2603 = vadd.f32 %v2601, %v2602
      %v2604 = vadd.f32 %v2054, %v2070
      %v2605 = vadd.f32 %v2604, %v2086
      %v2606 = vadd.f32 %v2605, %v2102
      %v2607 = vadd.f32 %v2606, %v2118
      %v2608 = vadd.f32 %v2607, %v2134
      %v2609 = vadd.f32 %v2608, %v2150
      %v2610 = vadd.f32 %v2609, %v2166
      %v2611 = vadd.f32 %v2610, %v2182
      %v2612 = vadd.f32 %v2611, %v2198
      %v2613 = vadd.f32 %v2612, %v2214
      %v2614 = vadd.f32 %v2613, %v2230
      %v2615 = vadd.f32 %v2614, %v2246
      %v2616 = vadd.f32 %v2615, %v2262
      %v2617 = vadd.f32 %v2616, %v2278
      %v2618 = vadd.f32 %v2617, %v2294
      %v2619 = vadd.f32 %v2618, %v2310
      %v2620 = vadd.f32 %v2619, %v2326
      %v2621 = vadd.f32 %v2620, %v2342
      %v2622 = vadd.f32 %v2621, %v2358
      %v2623 = vadd.f32 %v2622, %v2374
      %v2624 = vadd.f32 %v2623, %v2390
      %v2625 = vadd.f32 %v2624, %v2406
      %v2626 = vadd.f32 %v2625, %v2422
      %v2627 = vadd.f32 %v2626, %v2438
      %v2628 = vadd.f32 %v2627, %v2454
      %v2629 = vadd.f32 %v2628, %v2470
      %v2630 = vadd.f32 %v2629, %v2486
      %v2631 = vadd.f32 %v2630, %v2502
      %v2632 = vadd.f32 %v2631, %v2518
      %v2633 = vadd.f32 %v2632, %v2534
      %v2634 = vadd.f32 %v2633, %v2550
      %v2635 = vrot.slane %v2634, 4
      %v2636 = vadd.f32 %v2634, %v2635
      %v2637 = vrot.slane %v2636, 2
      %v2638 = vadd.f32 %v2636, %v2637
      %v2639 = vrot.slane %v2638, 1
      %v2640 = vadd.f32 %v2638, %v2639
      %v2641 = vadd.f32 %v2055, %v2071
      %v2642 = vadd.f32 %v2641, %v2087
      %v2643 = vadd.f32 %v2642, %v2103
      %v2644 = vadd.f32 %v2643, %v2119
      %v2645 = vadd.f32 %v2644, %v2135
      %v2646 = vadd.f32 %v2645, %v2151
      %v2647 = vadd.f32 %v2646, %v2167
      %v2648 = vadd.f32 %v2647, %v2183
      %v2649 = vadd.f32 %v2648, %v2199
      %v2650 = vadd.f32 %v2649, %v2215
      %v2651 = vadd.f32 %v2650, %v2231
      %v2652 = vadd.f32 %v2651, %v2247
      %v2653 = vadd.f32 %v2652, %v2263
      %v2654 = vadd.f32 %v2653, %v2279
      %v2655 = vadd.f32 %v2654, %v2295
      %v2656 = vadd.f32 %v2655, %v2311
      %v2657 = vadd.f32 %v2656, %v2327
      %v2658 = vadd.f32 %v2657, %v2343
      %v2659 = vadd.f32 %v2658, %v2359
      %v2660 = vadd.f32 %v2659, %v2375
      %v2661 = vadd.f32 %v2660, %v2391
      %v2662 = vadd.f32 %v2661, %v2407
      %v2663 = vadd.f32 %v2662, %v2423
      %v2664 = vadd.f32 %v2663, %v2439
      %v2665 = vadd.f32 %v2664, %v2455
      %v2666 = vadd.f32 %v2665, %v2471
      %v2667 = vadd.f32 %v2666, %v2487
      %v2668 = vadd.f32 %v2667, %v2503
      %v2669 = vadd.f32 %v2668, %v2519
      %v2670 = vadd.f32 %v2669, %v2535
      %v2671 = vadd.f32 %v2670, %v2551
      %v2672 = vrot.slane %v2671, 4
      %v2673 = vadd.f32 %v2671, %v2672
      %v2674 = vrot.slane %v2673, 2
      %v2675 = vadd.f32 %v2673, %v2674
      %v2676 = vrot.slane %v2675, 1
      %v2677 = vadd.f32 %v2675, %v2676
      %v2678 = vadd.f32 %v2056, %v2072
      %v2679 = vadd.f32 %v2678, %v2088
      %v2680 = vadd.f32 %v2679, %v2104
      %v2681 = vadd.f32 %v2680, %v2120
      %v2682 = vadd.f32 %v2681, %v2136
      %v2683 = vadd.f32 %v2682, %v2152
      %v2684 = vadd.f32 %v2683, %v2168
      %v2685 = vadd.f32 %v2684, %v2184
      %v2686 = vadd.f32 %v2685, %v2200
      %v2687 = vadd.f32 %v2686, %v2216
      %v2688 = vadd.f32 %v2687, %v2232
      %v2689 = vadd.f32 %v2688, %v2248
      %v2690 = vadd.f32 %v2689, %v2264
      %v2691 = vadd.f32 %v2690, %v2280
      %v2692 = vadd.f32 %v2691, %v2296
      %v2693 = vadd.f32 %v2692, %v2312
      %v2694 = vadd.f32 %v2693, %v2328
      %v2695 = vadd.f32 %v2694, %v2344
      %v2696 = vadd.f32 %v2695, %v2360
      %v2697 = vadd.f32 %v2696, %v2376
      %v2698 = vadd.f32 %v2697, %v2392
      %v2699 = vadd.f32 %v2698, %v2408
      %v2700 = vadd.f32 %v2699, %v2424
      %v2701 = vadd.f32 %v2700, %v2440
      %v2702 = vadd.f32 %v2701, %v2456
      %v2703 = vadd.f32 %v2702, %v2472
      %v2704 = vadd.f32 %v2703, %v2488
      %v2705 = vadd.f32 %v2704, %v2504
      %v2706 = vadd.f32 %v2705, %v2520
      %v2707 = vadd.f32 %v2706, %v2536
      %v2708 = vadd.f32 %v2707, %v2552
      %v2709 = vrot.slane %v2708, 4
      %v2710 = vadd.f32 %v2708, %v2709
      %v2711 = vrot.slane %v2710, 2
      %v2712 = vadd.f32 %v2710, %v2711
      %v2713 = vrot.slane %v2712, 1
      %v2714 = vadd.f32 %v2712, %v2713
      %v2715 = vadd.f32 %v2057, %v2073
      %v2716 = vadd.f32 %v2715, %v2089
      %v2717 = vadd.f32 %v2716, %v2105
      %v2718 = vadd.f32 %v2717, %v2121
      %v2719 = vadd.f32 %v2718, %v2137
      %v2720 = vadd.f32 %v2719, %v2153
      %v2721 = vadd.f32 %v2720, %v2169
      %v2722 = vadd.f32 %v2721, %v2185
      %v2723 = vadd.f32 %v2722, %v2201
      %v2724 = vadd.f32 %v2723, %v2217
      %v2725 = vadd.f32 %v2724, %v2233
      %v2726 = vadd.f32 %v2725, %v2249
      %v2727 = vadd.f32 %v2726, %v2265
      %v2728 = vadd.f32 %v2727, %v2281
      %v2729 = vadd.f32 %v2728, %v2297
      %v2730 = vadd.f32 %v2729, %v2313
      %v2731 = vadd.f32 %v2730, %v2329
      %v2732 = vadd.f32 %v2731, %v2345
      %v2733 = vadd.f32 %v2732, %v2361
      %v2734 = vadd.f32 %v2733, %v2377
      %v2735 = vadd.f32 %v2734, %v2393
      %v2736 = vadd.f32 %v2735, %v2409
      %v2737 = vadd.f32 %v2736, %v2425
      %v2738 = vadd.f32 %v2737, %v2441
      %v2739 = vadd.f32 %v2738, %v2457
      %v2740 = vadd.f32 %v2739, %v2473
      %v2741 = vadd.f32 %v2740, %v2489
      %v2742 = vadd.f32 %v2741, %v2505
      %v2743 = vadd.f32 %v2742, %v2521
      %v2744 = vadd.f32 %v2743, %v2537
      %v2745 = vadd.f32 %v2744, %v2553
      %v2746 = vrot.slane %v2745, 4
      %v2747 = vadd.f32 %v2745, %v2746
      %v2748 = vrot.slane %v2747, 2
      %v2749 = vadd.f32 %v2747, %v2748
      %v2750 = vrot.slane %v2749, 1
      %v2751 = vadd.f32 %v2749, %v2750
      %v2752 = vadd.f32 %v2058, %v2074
      %v2753 = vadd.f32 %v2752, %v2090
      %v2754 = vadd.f32 %v2753, %v2106
      %v2755 = vadd.f32 %v2754, %v2122
      %v2756 = vadd.f32 %v2755, %v2138
      %v2757 = vadd.f32 %v2756, %v2154
      %v2758 = vadd.f32 %v2757, %v2170
      %v2759 = vadd.f32 %v2758, %v2186
      %v2760 = vadd.f32 %v2759, %v2202
      %v2761 = vadd.f32 %v2760, %v2218
      %v2762 = vadd.f32 %v2761, %v2234
      %v2763 = vadd.f32 %v2762, %v2250
      %v2764 = vadd.f32 %v2763, %v2266
      %v2765 = vadd.f32 %v2764, %v2282
      %v2766 = vadd.f32 %v2765, %v2298
      %v2767 = vadd.f32 %v2766, %v2314
      %v2768 = vadd.f32 %v2767, %v2330
      %v2769 = vadd.f32 %v2768, %v2346
      %v2770 = vadd.f32 %v2769, %v2362
      %v2771 = vadd.f32 %v2770, %v2378
      %v2772 = vadd.f32 %v2771, %v2394
      %v2773 = vadd.f32 %v2772, %v2410
      %v2774 = vadd.f32 %v2773, %v2426
      %v2775 = vadd.f32 %v2774, %v2442
      %v2776 = vadd.f32 %v2775, %v2458
      %v2777 = vadd.f32 %v2776, %v2474
      %v2778 = vadd.f32 %v2777, %v2490
      %v2779 = vadd.f32 %v2778, %v2506
      %v2780 = vadd.f32 %v2779, %v2522
      %v2781 = vadd.f32 %v2780, %v2538
      %v2782 = vadd.f32 %v2781, %v2554
      %v2783 = vrot.slane %v2782, 4
      %v2784 = vadd.f32 %v2782, %v2783
      %v2785 = vrot.slane %v2784, 2
      %v2786 = vadd.f32 %v2784, %v2785
      %v2787 = vrot.slane %v2786, 1
      %v2788 = vadd.f32 %v2786, %v2787
      %v2789 = vadd.f32 %v2059, %v2075
      %v2790 = vadd.f32 %v2789, %v2091
      %v2791 = vadd.f32 %v2790, %v2107
      %v2792 = vadd.f32 %v2791, %v2123
      %v2793 = vadd.f32 %v2792, %v2139
      %v2794 = vadd.f32 %v2793, %v2155
      %v2795 = vadd.f32 %v2794, %v2171
      %v2796 = vadd.f32 %v2795, %v2187
      %v2797 = vadd.f32 %v2796, %v2203
      %v2798 = vadd.f32 %v2797, %v2219
      %v2799 = vadd.f32 %v2798, %v2235
      %v2800 = vadd.f32 %v2799, %v2251
      %v2801 = vadd.f32 %v2800, %v2267
      %v2802 = vadd.f32 %v2801, %v2283
      %v2803 = vadd.f32 %v2802, %v2299
      %v2804 = vadd.f32 %v2803, %v2315
      %v2805 = vadd.f32 %v2804, %v2331
      %v2806 = vadd.f32 %v2805, %v2347
      %v2807 = vadd.f32 %v2806, %v2363
      %v2808 = vadd.f32 %v2807, %v2379
      %v2809 = vadd.f32 %v2808, %v2395
      %v2810 = vadd.f32 %v2809, %v2411
      %v2811 = vadd.f32 %v2810, %v2427
      %v2812 = vadd.f32 %v2811, %v2443
      %v2813 = vadd.f32 %v2812, %v2459
      %v2814 = vadd.f32 %v2813, %v2475
      %v2815 = vadd.f32 %v2814, %v2491
      %v2816 = vadd.f32 %v2815, %v2507
      %v2817 = vadd.f32 %v2816, %v2523
      %v2818 = vadd.f32 %v2817, %v2539
      %v2819 = vadd.f32 %v2818, %v2555
      %v2820 = vrot.slane %v2819, 4
      %v2821 = vadd.f32 %v2819, %v2820
      %v2822 = vrot.slane %v2821, 2
      %v2823 = vadd.f32 %v2821, %v2822
      %v2824 = vrot.slane %v2823, 1
      %v2825 = vadd.f32 %v2823, %v2824
      %v2826 = vadd.f32 %v2060, %v2076
      %v2827 = vadd.f32 %v2826, %v2092
      %v2828 = vadd.f32 %v2827, %v2108
      %v2829 = vadd.f32 %v2828, %v2124
      %v2830 = vadd.f32 %v2829, %v2140
      %v2831 = vadd.f32 %v2830, %v2156
      %v2832 = vadd.f32 %v2831, %v2172
      %v2833 = vadd.f32 %v2832, %v2188
      %v2834 = vadd.f32 %v2833, %v2204
      %v2835 = vadd.f32 %v2834, %v2220
      %v2836 = vadd.f32 %v2835, %v2236
      %v2837 = vadd.f32 %v2836, %v2252
      %v2838 = vadd.f32 %v2837, %v2268
      %v2839 = vadd.f32 %v2838, %v2284
      %v2840 = vadd.f32 %v2839, %v2300
      %v2841 = vadd.f32 %v2840, %v2316
      %v2842 = vadd.f32 %v2841, %v2332
      %v2843 = vadd.f32 %v2842, %v2348
      %v2844 = vadd.f32 %v2843, %v2364
      %v2845 = vadd.f32 %v2844, %v2380
      %v2846 = vadd.f32 %v2845, %v2396
      %v2847 = vadd.f32 %v2846, %v2412
      %v2848 = vadd.f32 %v2847, %v2428
      %v2849 = vadd.f32 %v2848, %v2444
      %v2850 = vadd.f32 %v2849, %v2460
      %v2851 = vadd.f32 %v2850, %v2476
      %v2852 = vadd.f32 %v2851, %v2492
      %v2853 = vadd.f32 %v2852, %v2508
      %v2854 = vadd.f32 %v2853, %v2524
      %v2855 = vadd.f32 %v2854, %v2540
      %v2856 = vadd.f32 %v2855, %v2556
      %v2857 = vrot.slane %v2856, 4
      %v2858 = vadd.f32 %v2856, %v2857
      %v2859 = vrot.slane %v2858, 2
      %v2860 = vadd.f32 %v2858, %v2859
      %v2861 = vrot.slane %v2860, 1
      %v2862 = vadd.f32 %v2860, %v2861
      %v2863 = vadd.f32 %v2061, %v2077
      %v2864 = vadd.f32 %v2863, %v2093
      %v2865 = vadd.f32 %v2864, %v2109
      %v2866 = vadd.f32 %v2865, %v2125
      %v2867 = vadd.f32 %v2866, %v2141
      %v2868 = vadd.f32 %v2867, %v2157
      %v2869 = vadd.f32 %v2868, %v2173
      %v2870 = vadd.f32 %v2869, %v2189
      %v2871 = vadd.f32 %v2870, %v2205
      %v2872 = vadd.f32 %v2871, %v2221
      %v2873 = vadd.f32 %v2872, %v2237
      %v2874 = vadd.f32 %v2873, %v2253
      %v2875 = vadd.f32 %v2874, %v2269
      %v2876 = vadd.f32 %v2875, %v2285
      %v2877 = vadd.f32 %v2876, %v2301
      %v2878 = vadd.f32 %v2877, %v2317
      %v2879 = vadd.f32 %v2878, %v2333
      %v2880 = vadd.f32 %v2879, %v2349
      %v2881 = vadd.f32 %v2880, %v2365
      %v2882 = vadd.f32 %v2881, %v2381
      %v2883 = vadd.f32 %v2882, %v2397
      %v2884 = vadd.f32 %v2883, %v2413
      %v2885 = vadd.f32 %v2884, %v2429
      %v2886 = vadd.f32 %v2885, %v2445
      %v2887 = vadd.f32 %v2886, %v2461
      %v2888 = vadd.f32 %v2887, %v2477
      %v2889 = vadd.f32 %v2888, %v2493
      %v2890 = vadd.f32 %v2889, %v2509
      %v2891 = vadd.f32 %v2890, %v2525
      %v2892 = vadd.f32 %v2891, %v2541
      %v2893 = vadd.f32 %v2892, %v2557
      %v2894 = vrot.slane %v2893, 4
      %v2895 = vadd.f32 %v2893, %v2894
      %v2896 = vrot.slane %v2895, 2
      %v2897 = vadd.f32 %v2895, %v2896
      %v2898 = vrot.slane %v2897, 1
      %v2899 = vadd.f32 %v2897, %v2898
      %v2900 = vadd.f32 %v2062, %v2078
      %v2901 = vadd.f32 %v2900, %v2094
      %v2902 = vadd.f32 %v2901, %v2110
      %v2903 = vadd.f32 %v2902, %v2126
      %v2904 = vadd.f32 %v2903, %v2142
      %v2905 = vadd.f32 %v2904, %v2158
      %v2906 = vadd.f32 %v2905, %v2174
      %v2907 = vadd.f32 %v2906, %v2190
      %v2908 = vadd.f32 %v2907, %v2206
      %v2909 = vadd.f32 %v2908, %v2222
      %v2910 = vadd.f32 %v2909, %v2238
      %v2911 = vadd.f32 %v2910, %v2254
      %v2912 = vadd.f32 %v2911, %v2270
      %v2913 = vadd.f32 %v2912, %v2286
      %v2914 = vadd.f32 %v2913, %v2302
      %v2915 = vadd.f32 %v2914, %v2318
      %v2916 = vadd.f32 %v2915, %v2334
      %v2917 = vadd.f32 %v2916, %v2350
      %v2918 = vadd.f32 %v2917, %v2366
      %v2919 = vadd.f32 %v2918, %v2382
      %v2920 = vadd.f32 %v2919, %v2398
      %v2921 = vadd.f32 %v2920, %v2414
      %v2922 = vadd.f32 %v2921, %v2430
      %v2923 = vadd.f32 %v2922, %v2446
      %v2924 = vadd.f32 %v2923, %v2462
      %v2925 = vadd.f32 %v2924, %v2478
      %v2926 = vadd.f32 %v2925, %v2494
      %v2927 = vadd.f32 %v2926, %v2510
      %v2928 = vadd.f32 %v2927, %v2526
      %v2929 = vadd.f32 %v2928, %v2542
      %v2930 = vadd.f32 %v2929, %v2558
      %v2931 = vrot.slane %v2930, 4
      %v2932 = vadd.f32 %v2930, %v2931
      %v2933 = vrot.slane %v2932, 2
      %v2934 = vadd.f32 %v2932, %v2933
      %v2935 = vrot.slane %v2934, 1
      %v2936 = vadd.f32 %v2934, %v2935
      %v2937 = vadd.f32 %v2063, %v2079
      %v2938 = vadd.f32 %v2937, %v2095
      %v2939 = vadd.f32 %v2938, %v2111
      %v2940 = vadd.f32 %v2939, %v2127
      %v2941 = vadd.f32 %v2940, %v2143
      %v2942 = vadd.f32 %v2941, %v2159
      %v2943 = vadd.f32 %v2942, %v2175
      %v2944 = vadd.f32 %v2943, %v2191
      %v2945 = vadd.f32 %v2944, %v2207
      %v2946 = vadd.f32 %v2945, %v2223
      %v2947 = vadd.f32 %v2946, %v2239
      %v2948 = vadd.f32 %v2947, %v2255
      %v2949 = vadd.f32 %v2948, %v2271
      %v2950 = vadd.f32 %v2949, %v2287
      %v2951 = vadd.f32 %v2950, %v2303
      %v2952 = vadd.f32 %v2951, %v2319
      %v2953 = vadd.f32 %v2952, %v2335
      %v2954 = vadd.f32 %v2953, %v2351
      %v2955 = vadd.f32 %v2954, %v2367
      %v2956 = vadd.f32 %v2955, %v2383
      %v2957 = vadd.f32 %v2956, %v2399
      %v2958 = vadd.f32 %v2957, %v2415
      %v2959 = vadd.f32 %v2958, %v2431
      %v2960 = vadd.f32 %v2959, %v2447
      %v2961 = vadd.f32 %v2960, %v2463
      %v2962 = vadd.f32 %v2961, %v2479
      %v2963 = vadd.f32 %v2962, %v2495
      %v2964 = vadd.f32 %v2963, %v2511
      %v2965 = vadd.f32 %v2964, %v2527
      %v2966 = vadd.f32 %v2965, %v2543
      %v2967 = vadd.f32 %v2966, %v2559
      %v2968 = vrot.slane %v2967, 4
      %v2969 = vadd.f32 %v2967, %v2968
      %v2970 = vrot.slane %v2969, 2
      %v2971 = vadd.f32 %v2969, %v2970
      %v2972 = vrot.slane %v2971, 1
      %v2973 = vadd.f32 %v2971, %v2972
      %v2974 = vadd.f32 %v2064, %v2080
      %v2975 = vadd.f32 %v2974, %v2096
      %v2976 = vadd.f32 %v2975, %v2112
      %v2977 = vadd.f32 %v2976, %v2128
      %v2978 = vadd.f32 %v2977, %v2144
      %v2979 = vadd.f32 %v2978, %v2160
      %v2980 = vadd.f32 %v2979, %v2176
      %v2981 = vadd.f32 %v2980, %v2192
      %v2982 = vadd.f32 %v2981, %v2208
      %v2983 = vadd.f32 %v2982, %v2224
      %v2984 = vadd.f32 %v2983, %v2240
      %v2985 = vadd.f32 %v2984, %v2256
      %v2986 = vadd.f32 %v2985, %v2272
      %v2987 = vadd.f32 %v2986, %v2288
      %v2988 = vadd.f32 %v2987, %v2304
      %v2989 = vadd.f32 %v2988, %v2320
      %v2990 = vadd.f32 %v2989, %v2336
      %v2991 = vadd.f32 %v2990, %v2352
      %v2992 = vadd.f32 %v2991, %v2368
      %v2993 = vadd.f32 %v2992, %v2384
      %v2994 = vadd.f32 %v2993, %v2400
      %v2995 = vadd.f32 %v2994, %v2416
      %v2996 = vadd.f32 %v2995, %v2432
      %v2997 = vadd.f32 %v2996, %v2448
      %v2998 = vadd.f32 %v2997, %v2464
      %v2999 = vadd.f32 %v2998, %v2480
      %v3000 = vadd.f32 %v2999, %v2496
      %v3001 = vadd.f32 %v3000, %v2512
      %v3002 = vadd.f32 %v3001, %v2528
      %v3003 = vadd.f32 %v3002, %v2544
      %v3004 = vadd.f32 %v3003, %v2560
      %v3005 = vrot.slane %v3004, 4
      %v3006 = vadd.f32 %v3004, %v3005
      %v3007 = vrot.slane %v3006, 2
      %v3008 = vadd.f32 %v3006, %v3007
      %v3009 = vrot.slane %v3008, 1
      %v3010 = vadd.f32 %v3008, %v3009
      %v3011 = vadd.f32 %v2065, %v2081
      %v3012 = vadd.f32 %v3011, %v2097
      %v3013 = vadd.f32 %v3012, %v2113
      %v3014 = vadd.f32 %v3013, %v2129
      %v3015 = vadd.f32 %v3014, %v2145
      %v3016 = vadd.f32 %v3015, %v2161
      %v3017 = vadd.f32 %v3016, %v2177
      %v3018 = vadd.f32 %v3017, %v2193
      %v3019 = vadd.f32 %v3018, %v2209
      %v3020 = vadd.f32 %v3019, %v2225
      %v3021 = vadd.f32 %v3020, %v2241
      %v3022 = vadd.f32 %v3021, %v2257
      %v3023 = vadd.f32 %v3022, %v2273
      %v3024 = vadd.f32 %v3023, %v2289
      %v3025 = vadd.f32 %v3024, %v2305
      %v3026 = vadd.f32 %v3025, %v2321
      %v3027 = vadd.f32 %v3026, %v2337
      %v3028 = vadd.f32 %v3027, %v2353
      %v3029 = vadd.f32 %v3028, %v2369
      %v3030 = vadd.f32 %v3029, %v2385
      %v3031 = vadd.f32 %v3030, %v2401
      %v3032 = vadd.f32 %v3031, %v2417
      %v3033 = vadd.f32 %v3032, %v2433
      %v3034 = vadd.f32 %v3033, %v2449
      %v3035 = vadd.f32 %v3034, %v2465
      %v3036 = vadd.f32 %v3035, %v2481
      %v3037 = vadd.f32 %v3036, %v2497
      %v3038 = vadd.f32 %v3037, %v2513
      %v3039 = vadd.f32 %v3038, %v2529
      %v3040 = vadd.f32 %v3039, %v2545
      %v3041 = vadd.f32 %v3040, %v2561
      %v3042 = vrot.slane %v3041, 4
      %v3043 = vadd.f32 %v3041, %v3042
      %v3044 = vrot.slane %v3043, 2
      %v3045 = vadd.f32 %v3043, %v3044
      %v3046 = vrot.slane %v3045, 1
      %v3047 = vadd.f32 %v3045, %v3046
      %v3048 = vadd.f32 %v2066, %v2082
      %v3049 = vadd.f32 %v3048, %v2098
      %v3050 = vadd.f32 %v3049, %v2114
      %v3051 = vadd.f32 %v3050, %v2130
      %v3052 = vadd.f32 %v3051, %v2146
      %v3053 = vadd.f32 %v3052, %v2162
      %v3054 = vadd.f32 %v3053, %v2178
      %v3055 = vadd.f32 %v3054, %v2194
      %v3056 = vadd.f32 %v3055, %v2210
      %v3057 = vadd.f32 %v3056, %v2226
      %v3058 = vadd.f32 %v3057, %v2242
      %v3059 = vadd.f32 %v3058, %v2258
      %v3060 = vadd.f32 %v3059, %v2274
      %v3061 = vadd.f32 %v3060, %v2290
      %v3062 = vadd.f32 %v3061, %v2306
      %v3063 = vadd.f32 %v3062, %v2322
      %v3064 = vadd.f32 %v3063, %v2338
      %v3065 = vadd.f32 %v3064, %v2354
      %v3066 = vadd.f32 %v3065, %v2370
      %v3067 = vadd.f32 %v3066, %v2386
      %v3068 = vadd.f32 %v3067, %v2402
      %v3069 = vadd.f32 %v3068, %v2418
      %v3070 = vadd.f32 %v3069, %v2434
      %v3071 = vadd.f32 %v3070, %v2450
      %v3072 = vadd.f32 %v3071, %v2466
      %v3073 = vadd.f32 %v3072, %v2482
      %v3074 = vadd.f32 %v3073, %v2498
      %v3075 = vadd.f32 %v3074, %v2514
      %v3076 = vadd.f32 %v3075, %v2530
      %v3077 = vadd.f32 %v3076, %v2546
      %v3078 = vadd.f32 %v3077, %v2562
      %v3079 = vrot.slane %v3078, 4
      %v3080 = vadd.f32 %v3078, %v3079
      %v3081 = vrot.slane %v3080, 2
      %v3082 = vadd.f32 %v3080, %v3081
      %v3083 = vrot.slane %v3082, 1
      %v3084 = vadd.f32 %v3082, %v3083
      %v3085 = vadd.f32 %v2067, %v2083
      %v3086 = vadd.f32 %v3085, %v2099
      %v3087 = vadd.f32 %v3086, %v2115
      %v3088 = vadd.f32 %v3087, %v2131
      %v3089 = vadd.f32 %v3088, %v2147
      %v3090 = vadd.f32 %v3089, %v2163
      %v3091 = vadd.f32 %v3090, %v2179
      %v3092 = vadd.f32 %v3091, %v2195
      %v3093 = vadd.f32 %v3092, %v2211
      %v3094 = vadd.f32 %v3093, %v2227
      %v3095 = vadd.f32 %v3094, %v2243
      %v3096 = vadd.f32 %v3095, %v2259
      %v3097 = vadd.f32 %v3096, %v2275
      %v3098 = vadd.f32 %v3097, %v2291
      %v3099 = vadd.f32 %v3098, %v2307
      %v3100 = vadd.f32 %v3099, %v2323
      %v3101 = vadd.f32 %v3100, %v2339
      %v3102 = vadd.f32 %v3101, %v2355
      %v3103 = vadd.f32 %v3102, %v2371
      %v3104 = vadd.f32 %v3103, %v2387
      %v3105 = vadd.f32 %v3104, %v2403
      %v3106 = vadd.f32 %v3105, %v2419
      %v3107 = vadd.f32 %v3106, %v2435
      %v3108 = vadd.f32 %v3107, %v2451
      %v3109 = vadd.f32 %v3108, %v2467
      %v3110 = vadd.f32 %v3109, %v2483
      %v3111 = vadd.f32 %v3110, %v2499
      %v3112 = vadd.f32 %v3111, %v2515
      %v3113 = vadd.f32 %v3112, %v2531
      %v3114 = vadd.f32 %v3113, %v2547
      %v3115 = vadd.f32 %v3114, %v2563
      %v3116 = vrot.slane %v3115, 4
      %v3117 = vadd.f32 %v3115, %v3116
      %v3118 = vrot.slane %v3117, 2
      %v3119 = vadd.f32 %v3117, %v3118
      %v3120 = vrot.slane %v3119, 1
      %v3121 = vadd.f32 %v3119, %v3120
      %v3122 = vadd.f32 %v2068, %v2084
      %v3123 = vadd.f32 %v3122, %v2100
      %v3124 = vadd.f32 %v3123, %v2116
      %v3125 = vadd.f32 %v3124, %v2132
      %v3126 = vadd.f32 %v3125, %v2148
      %v3127 = vadd.f32 %v3126, %v2164
      %v3128 = vadd.f32 %v3127, %v2180
      %v3129 = vadd.f32 %v3128, %v2196
      %v3130 = vadd.f32 %v3129, %v2212
      %v3131 = vadd.f32 %v3130, %v2228
      %v3132 = vadd.f32 %v3131, %v2244
      %v3133 = vadd.f32 %v3132, %v2260
      %v3134 = vadd.f32 %v3133, %v2276
      %v3135 = vadd.f32 %v3134, %v2292
      %v3136 = vadd.f32 %v3135, %v2308
      %v3137 = vadd.f32 %v3136, %v2324
      %v3138 = vadd.f32 %v3137, %v2340
      %v3139 = vadd.f32 %v3138, %v2356
      %v3140 = vadd.f32 %v3139, %v2372
      %v3141 = vadd.f32 %v3140, %v2388
      %v3142 = vadd.f32 %v3141, %v2404
      %v3143 = vadd.f32 %v3142, %v2420
      %v3144 = vadd.f32 %v3143, %v2436
      %v3145 = vadd.f32 %v3144, %v2452
      %v3146 = vadd.f32 %v3145, %v2468
      %v3147 = vadd.f32 %v3146, %v2484
      %v3148 = vadd.f32 %v3147, %v2500
      %v3149 = vadd.f32 %v3148, %v2516
      %v3150 = vadd.f32 %v3149, %v2532
      %v3151 = vadd.f32 %v3150, %v2548
      %v3152 = vadd.f32 %v3151, %v2564
      %v3153 = vrot.slane %v3152, 4
      %v3154 = vadd.f32 %v3152, %v3153
      %v3155 = vrot.slane %v3154, 2
      %v3156 = vadd.f32 %v3154, %v3155
      %v3157 = vrot.slane %v3156, 1
      %v3158 = vadd.f32 %v3156, %v3157
      %v3175 = vrot.slane %v2640, 7
      %v3176 = vrot.slane %v2677, 6
      %v3177 = vrot.slane %v2714, 5
      %v3178 = vrot.slane %v2751, 4
      %v3179 = vrot.slane %v2788, 3
      %v3180 = vrot.slane %v2825, 2
      %v3181 = vrot.slane %v2862, 1
      %v3182 = vrot.slane %v2936, 7
      %v3183 = vrot.slane %v2973, 6
      %v3184 = vrot.slane %v3010, 5
      %v3185 = vrot.slane %v3047, 4
      %v3186 = vrot.slane %v3084, 3
      %v3187 = vrot.slane %v3121, 2
      %v3188 = vrot.slane %v3158, 1
      %vm3189 = vcmask 1040384
      %v3190 = vsel %vm3189, %v2603, %v3175
      %vm3191 = vcmask 1042434
      %v3192 = vsel %vm3191, %v3176, %v3177
      %vm3193 = vcmask 1041408
      %v3194 = vsel %vm3193, %v3190, %v3192
      %vm3195 = vcmask 1044484
      %v3196 = vsel %vm3195, %v3178, %v3179
      %vm3197 = vcmask 1046534
      %v3198 = vsel %vm3197, %v3180, %v3181
      %vm3199 = vcmask 1045508
      %v3200 = vsel %vm3199, %v3196, %v3198
      %vm3201 = vcmask 1043456
      %v3202 = vsel %vm3201, %v3194, %v3200
      %v3203 = vsel %vm3189, %v2899, %v3182
      %v3204 = vsel %vm3191, %v3183, %v3184
      %v3205 = vsel %vm3193, %v3203, %v3204
      %v3206 = vsel %vm3195, %v3185, %v3186
      %v3207 = vsel %vm3197, %v3187, %v3188
      %v3208 = vsel %vm3199, %v3206, %v3207
      %v3209 = vsel %vm3201, %v3205, %v3208
      %v3212 = vadd.f32 %v2565, %v3202
      %v3213 = vadd.f32 %v2566, %v3209
      %3214 = vst [vmem:[%s196] sm:$0xff] %v3212
      %3215 = vst [vmem:[%s196 + $0x8] sm:$0xff] %v3213
      // Predicated region
      $region37: #{encoder_cnn_forward.2} parent=31 // pred_check
        %p3216 = pneg %p198
      $region38: #{encoder_cnn_forward.2} parent=31 // pred_check_branch
        %3218 = sbr.rel (%p3216) target = $region40
      $region39: #{encoder_cnn_forward.2} parent=31 // pred_region
        %v3219 = vld [vmem:[%s196] sm:$0xff]
        %v3220 = vld [vmem:[%s196 + $0x8] sm:$0xff]
        %v3221 = vmul.f32 %v3219, 0.00390625
        %v3222 = vmul.f32 %v3220, 0.00390625
        %3223 = vst [vmem:[%s196] sm:$0xff] %v3221
        %3224 = vst [vmem:[%s196 + $0x8] sm:$0xff] %v3222
      $region40: #{encoder_cnn_forward.2} parent=31 // pred_fallthru
        _
      %p3225 = scmp.lt.s32.totalorder %s18, 1
      %s3226 = scalar_select %p3225, %s18, 1
      %s3227 = smul.addr %s3226, 16
      %s3228 = scalar_lea.vmem %s3, %s3227
      // Predicated region
      $region41: #{encoder_cnn_forward.2} parent=31 // pred_check
        %p3229 = pneg %p114
      $region42: #{encoder_cnn_forward.2} parent=31 // pred_check_branch
        %3231 = sbr.rel (%p3229) target = $region44
      $region43: #{encoder_cnn_forward.2} parent=31 // pred_region
        _
      $region44: #{encoder_cnn_forward.2} parent=31 // pred_fallthru
        _
    $region32: #{encoder_cnn_forward.2} parent=5 // pred_fallthru
      _
    %p3232 = scmp.le.s32.totalorder 2, %s9
    // Predicated region
    $region45: #{encoder_cnn_forward.2} parent=5 // pred_check
      %p3233 = pneg %p3232
    $region46: #{encoder_cnn_forward.2} parent=5 // pred_check_branch
      %3235 = sbr.rel (%p3233) target = $region48
    $region47: #{encoder_cnn_forward.2} parent=5 // pred_region
      %s3236 = ssub.s32 %s9, 2
      // Predicated region
      $region49: #{encoder_cnn_forward.2} parent=47 // pred_check
        %p3237 = pneg %p120
      $region50: #{encoder_cnn_forward.2} parent=47 // pred_check_branch
        %3239 = sbr.rel (%p3237) target = $region52
      $region51: #{encoder_cnn_forward.2} parent=47 // pred_region
        %p3240 = scmp.lt.s32.totalorder %s20, 1
        %s3241 = scalar_select %p3240, %s20, 1
        %s3242 = smul.addr %s3241, 16
        %s3243 = scalar_lea.vmem %s3, %s3242
      $region52: #{encoder_cnn_forward.2} parent=47 // pred_fallthru
        _
    $region48: #{encoder_cnn_forward.2} parent=5 // pred_fallthru
      _
  $region6: #{encoder_cnn_forward.2} parent=0 // loop_footer
    %s13 = sadd.s32 1, %s9
  $region7: #{encoder_cnn_forward.2} parent=0 // loop_footer_branch
    %8 = sbr.rel target = $region3
  $region8: #{encoder_cnn_forward.2} parent=0 // loop_exit
    _

</llo_original>
